<compile_context>
chip_gen: v5e
topology: v5e:2x2
jax: 0.10.0
libtpu: 0.0.40
codegen_flags: <defaults>
</compile_context>

<pallas_src>
import functools

import jax
import jax.numpy as jnp
from jax.experimental import pallas as pl
from jax.experimental.pallas import tpu as pltpu


def _round_up(x, m):
    return (x + m - 1) // m * m


def _pick_tile(dim, pref, align):
    """Largest multiple of `align` that divides `dim` and is <= pref (0 if none)."""
    best = 0
    c = align
    while c <= min(pref, dim):
        if dim % c == 0:
            best = c
        c += align
    return best


# ----------------------------------------------------------------------------
# Generic tiled  X @ W + b  kernel (hoisted input projection and decoder).
# Grid is (M tiles, N tiles, K tiles); K is reduced into an f32 VMEM accumulator
# so the per-tile VMEM stays bounded even for large K (v5e concern).
# ----------------------------------------------------------------------------
def matmul_bias_kernel(x_ref, w_ref, b_ref, o_ref, acc_ref):
    @pl.when(pl.program_id(2) == 0)
    def _():
        acc_ref[...] = jnp.zeros_like(acc_ref)

    acc_ref[...] += jnp.dot(x_ref[...], w_ref[...],
                            preferred_element_type=jnp.float32)

    @pl.when(pl.program_id(2) == pl.num_programs(2) - 1)
    def _():
        o_ref[...] = (acc_ref[...] + b_ref[...]).astype(o_ref.dtype)


def matmul_bias(x, w, b, *, tm_pref=256, tn_pref=512, tk_pref=512):
    """x: (M, K) with M % 8 == 0; w: (K, Np) pre-padded so Np % 128 == 0;
    b: (1, Np).  Returns (M, Np) — caller slices the padded N only at the end."""
    M, K = x.shape
    Np = w.shape[1]

    tm = _pick_tile(M, tm_pref, 8)
    if tm == 0:                              # fallback: pad M (never hit when M%8==0)
        tm = min(tm_pref, _round_up(M, 8))
        Mp = _round_up(M, tm)
        x = jnp.pad(x, ((0, Mp - M), (0, 0)))
    else:
        Mp = M
    tn = _pick_tile(Np, tn_pref, 128) or Np
    tk = _pick_tile(K, tk_pref, 128) or K    # tk multiple of 128, else full K

    out = pl.pallas_call(
        matmul_bias_kernel,
        grid=(Mp // tm, Np // tn, K // tk),
        in_specs=[
            pl.BlockSpec((tm, tk), lambda i, j, k: (i, k)),
            pl.BlockSpec((tk, tn), lambda i, j, k: (k, j)),
            pl.BlockSpec((1, tn), lambda i, j, k: (0, j)),
        ],
        out_specs=pl.BlockSpec((tm, tn), lambda i, j, k: (i, j)),
        out_shape=jax.ShapeDtypeStruct((Mp, Np), jnp.float32),
        scratch_shapes=[pltpu.VMEM((tm, tn), jnp.float32)],
        compiler_params=pltpu.CompilerParams(
            dimension_semantics=("parallel", "parallel", "arbitrary"),
            vmem_limit_bytes=32 << 20),
    )(x, w, b)
    return out if Mp == M else out[:M]


# ----------------------------------------------------------------------------
# Chunked LSTM recurrence kernel.  Gate order is i|f|o|g (sigmoids contiguous).
# Only h @ W_hh + gate math is on the sequential path; W_hh is read from its
# VMEM-resident ref inside the step (two column-group slices), never hoisted.
# ----------------------------------------------------------------------------
def lstm_chunk_kernel(gates_ref, whh_ref, h0_ref, c0_ref,
                      y_ref, hT_ref, cT_ref,
                      h_sc, c_sc, *, Tc, Hp, T_total, padded):
    t_idx = pl.program_id(1)

    @pl.when(t_idx == 0)
    def _():
        h_sc[...] = h0_ref[...]
        c_sc[...] = c0_ref[...]

    base = t_idx * Tc
    H3 = 3 * Hp

    def step(t, carry):
        h, c = carry
        g_t = gates_ref[t]                                   # (Bb, 4Hp) precomputed
        # Sigmoid-group (i|f|o) and tanh-group (g) matmuls; whh read per-dot so it
        # is never a long-lived vreg value (no spills in the hot timestep loop).
        sig_pre = g_t[:, :H3] + jnp.dot(h, whh_ref[:, :H3],
                                        preferred_element_type=jnp.float32)
        g_pre = g_t[:, H3:] + jnp.dot(h, whh_ref[:, H3:],
                                      preferred_element_type=jnp.float32)
        sig = jax.nn.sigmoid(sig_pre)                        # one wide EUP issue
        g_g = jnp.tanh(g_pre)
        i_g = sig[:, :Hp]
        f_g = sig[:, Hp:2 * Hp]
        o_g = sig[:, 2 * Hp:H3]
        c_new = f_g * c + i_g * g_g
        h_new = o_g * jnp.tanh(c_new)
        if padded:                                           # only when T was padded up
            valid = (base + t) < T_total
            h_new = jnp.where(valid, h_new, h)
            c_new = jnp.where(valid, c_new, c)
        y_ref[t] = h_new.astype(y_ref.dtype)
        return h_new, c_new

    unroll = True if Tc <= 8 else 4
    h_fin, c_fin = jax.lax.fori_loop(0, Tc, step, (h_sc[...], c_sc[...]),
                                     unroll=unroll)
    h_sc[...] = h_fin
    c_sc[...] = c_fin
    # Defensive: write the running state every chunk (block stays VMEM-resident
    # across the time axis; HBM writeback happens when the batch block changes).
    hT_ref[...] = h_fin.astype(hT_ref.dtype)
    cT_ref[...] = c_fin.astype(cT_ref.dtype)


def _pick_chunk_and_vmem(T, Bb, Hp, *, budget=32 << 20, max_chunk=128):
    """Chunk length + VMEM limit derived from an explicit budget (v7x-safe)."""
    b4 = 4
    fixed = 2 * Hp * 4 * Hp * b4           # double-buffered w_hh block
    fixed += 10 * Bb * Hp * b4             # h0/c0/hT/cT blocks + h/c scratch
    per_t = (2 * 4 * Hp + 2 * Hp) * Bb * b4   # gates in (2 bufs) + y out (2 bufs)
    tc = (budget - fixed) // per_t
    tc = int(max(1, min(max_chunk, T, tc)))
    best = tc
    for c in range(tc, max(1, tc // 2) - 1, -1):   # prefer a divisor of T (no tail pad)
        if T % c == 0:
            best = c
            break
    est = fixed + per_t * best
    vmem_limit = int(min(48 << 20, max(32 << 20, est + (8 << 20))))
    return best, vmem_limit


def lstm_layer(gates_pre, w_hh, h0, c0):
    """gates_pre: (T, Bp, 4Hp) precomputed X@W_ih + bias (i|f|o|g layout);
    w_hh: (Hp, 4Hp); h0/c0: (Bp, Hp).  Returns y: (T, Bp, Hp), hT/cT: (Bp, Hp)."""
    T, Bp, G4 = gates_pre.shape
    Hp = h0.shape[-1]
    assert G4 == 4 * Hp

    # Batch tiling: with Bp >= 16 split batch in two "parallel" tiles so v7x's
    # second TensorCore takes half the recurrence.
    nb = 2 if (Bp >= 16 and Bp % 16 == 0) else 1
    Bb = Bp // nb

    Tc, vmem_limit = _pick_chunk_and_vmem(T, Bb, Hp)
    Tp = _round_up(T, Tc)
    padded = Tp != T
    if padded:
        gates_pre = jnp.pad(gates_pre, ((0, Tp - T), (0, 0), (0, 0)))

    kernel = functools.partial(lstm_chunk_kernel, Tc=Tc, Hp=Hp,
                               T_total=T, padded=padded)

    y, hT, cT = pl.pallas_call(
        kernel,
        grid=(nb, Tp // Tc),
        in_specs=[
            pl.BlockSpec((Tc, Bb, 4 * Hp), lambda b, c: (c, b, 0)),
            pl.BlockSpec((Hp, 4 * Hp), lambda b, c: (0, 0)),
            pl.BlockSpec((Bb, Hp), lambda b, c: (b, 0)),
            pl.BlockSpec((Bb, Hp), lambda b, c: (b, 0)),
        ],
        out_specs=[
            pl.BlockSpec((Tc, Bb, Hp), lambda b, c: (c, b, 0)),
            pl.BlockSpec((Bb, Hp), lambda b, c: (b, 0)),
            pl.BlockSpec((Bb, Hp), lambda b, c: (b, 0)),
        ],
        out_shape=(jax.ShapeDtypeStruct((Tp, Bp, Hp), jnp.float32),
                   jax.ShapeDtypeStruct((Bp, Hp), jnp.float32),
                   jax.ShapeDtypeStruct((Bp, Hp), jnp.float32)),
        scratch_shapes=[pltpu.VMEM((Bb, Hp), jnp.float32),
                        pltpu.VMEM((Bb, Hp), jnp.float32)],
        compiler_params=pltpu.CompilerParams(
            dimension_semantics=("parallel", "arbitrary"),
            vmem_limit_bytes=vmem_limit),
    )(gates_pre, w_hh, h0, c0)
    if padded:
        y = y[:T]
    return y, hT, cT


# ----------------------------------------------------------------------------
# Parameter packing: done ONCE.  Gate order i|f|g|o (PyTorch) -> i|f|o|g, each
# gate block zero-padded to Hp columns; W_ih rows padded to Ep/Hp; decoder
# padded to (Hp, Vp).  Zero-padded hidden columns are a fixed point of the
# LSTM recurrence, so numerics are unchanged.
# ----------------------------------------------------------------------------
def _pack_gate_cols(a, H, Hp):
    lead = a.shape[:-1]
    a4 = a.reshape(lead + (4, H))
    a4 = jnp.take(a4, jnp.array([0, 1, 3, 2]), axis=-2)     # i, f, o, g
    a4 = jnp.pad(a4, [(0, 0)] * len(lead) + [(0, 0), (0, Hp - H)])
    return a4.reshape(lead + (4 * Hp,))


def pack_params(params, vocab_size, embed_size, hidden_size):
    H = hidden_size
    Hp = _round_up(H, 128)
    Ep = _round_up(embed_size, 8)
    Vp = _round_up(vocab_size, 128)
    packed = {
        "H": H, "Hp": Hp, "E": embed_size, "Ep": Ep, "vocab": vocab_size,
        "encoder_w": params["encoder_w"],
        "decoder_w": jnp.pad(params["decoder_w"],
                             ((0, Hp - H), (0, Vp - vocab_size))),
        "decoder_b": jnp.pad(params["decoder_b"].reshape(1, -1),
                             ((0, 0), (0, Vp - vocab_size))),
        "lstm": [],
    }
    for layer, (w_ih, w_hh, bias) in enumerate(params["lstm"]):
        in_dim = w_ih.shape[0]
        in_pad = (Ep if layer == 0 else Hp) - in_dim
        w_ih_p = jnp.pad(_pack_gate_cols(w_ih, H, Hp), ((0, in_pad), (0, 0)))
        w_hh_p = jnp.pad(_pack_gate_cols(w_hh, H, Hp), ((0, Hp - H), (0, 0)))
        bias_p = _pack_gate_cols(bias, H, Hp)
        packed["lstm"].append((w_ih_p, w_hh_p, bias_p))
    return packed


# ----------------------------------------------------------------------------
# RNNModel forward (LSTM): embedding (glue) -> stacked LSTM (kernels) -> decoder.
# ----------------------------------------------------------------------------
def init_params(key, vocab_size, embed_size, hidden_size, nlayers):
    initrange = 0.1
    keys = jax.random.split(key, 2 + 4 * nlayers)
    params = {
        "encoder_w": jax.random.uniform(keys[0], (vocab_size, embed_size),
                                        jnp.float32, -initrange, initrange),
        "decoder_w": jax.random.uniform(keys[1], (hidden_size, vocab_size),
                                        jnp.float32, -initrange, initrange),
        "decoder_b": jnp.zeros((1, vocab_size), jnp.float32),
        "lstm": [],
    }
    stdv = 1.0 / (hidden_size ** 0.5)
    for layer in range(nlayers):
        in_size = embed_size if layer == 0 else hidden_size
        k0, k1, k2, k3 = keys[2 + 4 * layer:2 + 4 * (layer + 1)]
        w_ih = jax.random.uniform(k0, (in_size, 4 * hidden_size), jnp.float32, -stdv, stdv)
        w_hh = jax.random.uniform(k1, (hidden_size, 4 * hidden_size), jnp.float32, -stdv, stdv)
        b_ih = jax.random.uniform(k2, (4 * hidden_size,), jnp.float32, -stdv, stdv)
        b_hh = jax.random.uniform(k3, (4 * hidden_size,), jnp.float32, -stdv, stdv)
        params["lstm"].append((w_ih, w_hh, (b_ih + b_hh)[None, :]))
    return params


def rnn_model_forward(packed, tokens, hidden):
    """tokens: (T, B) int32; hidden = (h0, c0), each (nlayers, B, H)."""
    h0, c0 = hidden
    T, B = tokens.shape
    H, Hp, E, Ep = packed["H"], packed["Hp"], packed["E"], packed["Ep"]
    Bp = _round_up(B, 8)       # sublane-aligned batch

    # Embedding lookup (gather) + dropout(identity, eval) — glue in plain JAX.
    emb = jnp.take(packed["encoder_w"], tokens, axis=0)             # (T, B, E)
    x = jnp.pad(emb, ((0, 0), (0, Bp - B), (0, Ep - E)))            # (T, Bp, Ep)

    hT_list, cT_list = [], []
    for layer, (w_ih_p, w_hh_p, bias_p) in enumerate(packed["lstm"]):
        h0_p = jnp.pad(h0[layer], ((0, Bp - B), (0, Hp - H)))
        c0_p = jnp.pad(c0[layer], ((0, Bp - B), (0, Hp - H)))

        # Hoisted input projection: one big MXU matmul over all timesteps.
        x2d = x.reshape(T * Bp, x.shape[-1])
        gates_pre = matmul_bias(x2d, w_ih_p, bias_p).reshape(T, Bp, 4 * Hp)

        # Sequential recurrence: only h @ W_hh + gate math per timestep.
        y, hT, cT = lstm_layer(gates_pre, w_hh_p, h0_p, c0_p)
        hT_list.append(hT[:B, :H])
        cT_list.append(cT[:B, :H])
        x = y                                                       # inter-layer dropout = identity

    # Decoder on the padded slab; slice only the final user-facing logits.
    feat = x.reshape(T * Bp, Hp)
    logits_p = matmul_bias(feat, packed["decoder_w"], packed["decoder_b"])
    decoded = logits_p.reshape(T, Bp, -1)[:, :B, :packed["vocab"]]
    new_hidden = (jnp.stack(hT_list, axis=0), jnp.stack(cT_list, axis=0))
    return decoded, new_hidden


# ----------------------------------------------------------------------------
# Pure-JAX reference for verification (raw i|f|g|o PyTorch layout).
# ----------------------------------------------------------------------------
def reference_forward(params, tokens, hidden):
    h0, c0 = hidden
    emb = jnp.take(params["encoder_w"], tokens, axis=0)
    x = emb
    hT_list, cT_list = [], []
    for layer, (w_ih, w_hh, bias) in enumerate(params["lstm"]):
        H = w_hh.shape[0]
        h, c = h0[layer], c0[layer]
        ys = []
        for t in range(x.shape[0]):
            gates = x[t] @ w_ih + h @ w_hh + bias
            i = jax.nn.sigmoid(gates[:, 0 * H:1 * H])
            f = jax.nn.sigmoid(gates[:, 1 * H:2 * H])
            g = jnp.tanh(gates[:, 2 * H:3 * H])
            o = jax.nn.sigmoid(gates[:, 3 * H:4 * H])
            c = f * c + i * g
            h = o * jnp.tanh(c)
            ys.append(h)
        x = jnp.stack(ys, axis=0)
        hT_list.append(h)
        cT_list.append(c)
    T, B, H = x.shape
    decoded = (x.reshape(T * B, H) @ params["decoder_w"] + params["decoder_b"]).reshape(T, B, -1)
    return decoded, (jnp.stack(hT_list), jnp.stack(cT_list))


if __name__ == "__main__":
    # Small, deterministic configuration (LSTM variant).
    vocab_size, embed_size, hidden_size, nlayers = 50, 32, 32, 2
    seq_len, batch = 8, 2

    key = jax.random.PRNGKey(0)
    k_param, k_tok = jax.random.split(key)
    params = init_params(k_param, vocab_size, embed_size, hidden_size, nlayers)
    packed = pack_params(params, vocab_size, embed_size, hidden_size)

    tokens = jax.random.randint(k_tok, (seq_len, batch), 0, vocab_size, dtype=jnp.int32)
    hidden = (jnp.zeros((nlayers, batch, hidden_size), jnp.float32),
              jnp.zeros((nlayers, batch, hidden_size), jnp.float32))

    forward = jax.jit(functools.partial(rnn_model_forward, packed))
    decoded, (hT, cT) = forward(tokens, hidden)
    decoded = jax.block_until_ready(decoded)
    hT = jax.block_until_ready(hT)
    cT = jax.block_until_ready(cT)

    ref_decoded, (ref_hT, ref_cT) = reference_forward(params, tokens, hidden)
    assert decoded.shape == (seq_len, batch, vocab_size)
    assert hT.shape == (nlayers, batch, hidden_size)
    assert cT.shape == (nlayers, batch, hidden_size)
    assert jnp.allclose(decoded, ref_decoded, atol=1e-5, rtol=1e-5)
    assert jnp.allclose(hT, ref_hT, atol=1e-5, rtol=1e-5)
    assert jnp.allclose(cT, ref_cT, atol=1e-5, rtol=1e-5)

    print("KERNEL_OK")
</pallas_src>

<mosaic_0001>
module attributes {stable_mosaic.version = 11 : i64} {
  func.func @matmul_bias_kernel(%arg0: i32, %arg1: i32, %arg2: i32, %arg3: memref<64x32xf32, #tpu.memory_space<vmem>>, %arg4: memref<32x512xf32, #tpu.memory_space<vmem>>, %arg5: memref<1x512xf32, #tpu.memory_space<vmem>>, %arg6: memref<64x512xf32, #tpu.memory_space<vmem>>, %arg7: memref<64x512xf32, #tpu.memory_space<vmem>>) attributes {dimension_semantics = [#tpu.dimension_semantics<parallel>, #tpu.dimension_semantics<parallel>, #tpu.dimension_semantics<arbitrary>], iteration_bounds = array<i64: 1, 1, 1>, scalar_prefetch = 0 : i64, scratch_operands = 1 : i64, tpu.core_type = #tpu.core_type<tc>, window_params = [{transform_indices = @transform_0, window_bounds = array<i64: 64, 32>}, {transform_indices = @transform_1, window_bounds = array<i64: 32, 512>}, {transform_indices = @transform_2, window_bounds = array<i64: 1, 512>}, {transform_indices = @transform_3, window_bounds = array<i64: 64, 512>}]} {
    %c0_i32 = arith.constant 0 : i32
    %0 = arith.cmpi eq, %arg2, %c0_i32 : i32
    %1 = arith.extui %0 : i1 to i32
    %c0_i32_0 = arith.constant 0 : i32
    %2 = arith.cmpi ne, %1, %c0_i32_0 : i32
    scf.if %2 {
      %cst_10 = arith.constant 0.000000e+00 : f32
      %12 = vector.broadcast %cst_10 : f32 to vector<64x512xf32>
      %c0_11 = arith.constant 0 : index
      %c0_12 = arith.constant 0 : index
      %13 = vector.load %arg7[%c0_11, %c0_12] : memref<64x512xf32, #tpu.memory_space<vmem>>, vector<64x512xf32>
      tpu.vector_store %arg7[%c0_11, %c0_12], %12 {strides = array<i32>} : memref<64x512xf32, #tpu.memory_space<vmem>>, vector<64x512xf32>,
    } else {
    }
    %c0 = arith.constant 0 : index
    %c0_1 = arith.constant 0 : index
    %3 = vector.load %arg7[%c0, %c0_1] : memref<64x512xf32, #tpu.memory_space<vmem>>, vector<64x512xf32>
    %c0_2 = arith.constant 0 : index
    %c0_3 = arith.constant 0 : index
    %4 = vector.load %arg3[%c0_2, %c0_3] : memref<64x32xf32, #tpu.memory_space<vmem>>, vector<64x32xf32>
    %c0_4 = arith.constant 0 : index
    %c0_5 = arith.constant 0 : index
    %5 = vector.load %arg4[%c0_4, %c0_5] : memref<32x512xf32, #tpu.memory_space<vmem>>, vector<32x512xf32>
    %cst = arith.constant dense<0.000000e+00> : vector<64x512xf32>
    %6 = tpu.matmul %4, %5, %cst {dimension_numbers = #tpu.dot_dimension_numbers<[1], [0], [0], [1], [0, 0, 1, 1], [], []>} : vector<64x32xf32>, vector<32x512xf32>, vector<64x512xf32> -> vector<64x512xf32>
    %7 = arith.addf %3, %6 : vector<64x512xf32>
    %c0_6 = arith.constant 0 : index
    %c0_7 = arith.constant 0 : index
    %8 = vector.load %arg7[%c0_6, %c0_7] : memref<64x512xf32, #tpu.memory_space<vmem>>, vector<64x512xf32>
    tpu.vector_store %arg7[%c0_6, %c0_7], %7 {strides = array<i32>} : memref<64x512xf32, #tpu.memory_space<vmem>>, vector<64x512xf32>,
    %c0_i32_8 = arith.constant 0 : i32
    %9 = arith.cmpi eq, %arg2, %c0_i32_8 : i32
    %10 = arith.extui %9 : i1 to i32
    %c0_i32_9 = arith.constant 0 : i32
    %11 = arith.cmpi ne, %10, %c0_i32_9 : i32
    scf.if %11 {
      %c0_10 = arith.constant 0 : index
      %c0_11 = arith.constant 0 : index
      %12 = vector.load %arg7[%c0_10, %c0_11] : memref<64x512xf32, #tpu.memory_space<vmem>>, vector<64x512xf32>
      %c0_12 = arith.constant 0 : index
      %c0_13 = arith.constant 0 : index
      %13 = vector.load %arg5[%c0_12, %c0_13] : memref<1x512xf32, #tpu.memory_space<vmem>>, vector<1x512xf32>
      %14 = vector.broadcast %13 : vector<1x512xf32> to vector<64x512xf32>
      %15 = arith.addf %12, %14 : vector<64x512xf32>
      %c0_14 = arith.constant 0 : index
      %c0_15 = arith.constant 0 : index
      %16 = vector.load %arg6[%c0_14, %c0_15] : memref<64x512xf32, #tpu.memory_space<vmem>>, vector<64x512xf32>
      tpu.vector_store %arg6[%c0_14, %c0_15], %15 {strides = array<i32>} : memref<64x512xf32, #tpu.memory_space<vmem>>, vector<64x512xf32>,
    } else {
    }
    return
  }
  func.func @transform_0(%arg0: i32, %arg1: i32, %arg2: i32) -> (i32, i32) {
    %c0_i32 = arith.constant 0 : i32
    return %arg0, %arg2 : i32, i32
  }
  func.func @transform_1(%arg0: i32, %arg1: i32, %arg2: i32) -> (i32, i32) {
    %c0_i32 = arith.constant 0 : i32
    return %arg2, %arg1 : i32, i32
  }
  func.func @transform_2(%arg0: i32, %arg1: i32, %arg2: i32) -> (i32, i32) {
    %c0_i32 = arith.constant 0 : i32
    %c0_i32_0 = arith.constant 0 : i32
    return %c0_i32, %arg1 : i32, i32
  }
  func.func @transform_3(%arg0: i32, %arg1: i32, %arg2: i32) -> (i32, i32) {
    %c0_i32 = arith.constant 0 : i32
    return %arg0, %arg1 : i32, i32
  }
}

module attributes {stable_mosaic.version = 11 : i64} {
  func.func @matmul_bias_kernel(%arg0: i32, %arg1: i32, %arg2: i32, %arg3: memref<64x128xf32, #tpu.memory_space<vmem>>, %arg4: memref<128x512xf32, #tpu.memory_space<vmem>>, %arg5: memref<1x512xf32, #tpu.memory_space<vmem>>, %arg6: memref<64x512xf32, #tpu.memory_space<vmem>>, %arg7: memref<64x512xf32, #tpu.memory_space<vmem>>) attributes {dimension_semantics = [#tpu.dimension_semantics<parallel>, #tpu.dimension_semantics<parallel>, #tpu.dimension_semantics<arbitrary>], iteration_bounds = array<i64: 1, 1, 1>, scalar_prefetch = 0 : i64, scratch_operands = 1 : i64, tpu.core_type = #tpu.core_type<tc>, window_params = [{transform_indices = @transform_0, window_bounds = array<i64: 64, 128>}, {transform_indices = @transform_1, window_bounds = array<i64: 128, 512>}, {transform_indices = @transform_2, window_bounds = array<i64: 1, 512>}, {transform_indices = @transform_3, window_bounds = array<i64: 64, 512>}]} {
    %c0_i32 = arith.constant 0 : i32
    %0 = arith.cmpi eq, %arg2, %c0_i32 : i32
    %1 = arith.extui %0 : i1 to i32
    %c0_i32_0 = arith.constant 0 : i32
    %2 = arith.cmpi ne, %1, %c0_i32_0 : i32
    scf.if %2 {
      %cst_10 = arith.constant 0.000000e+00 : f32
      %12 = vector.broadcast %cst_10 : f32 to vector<64x512xf32>
      %c0_11 = arith.constant 0 : index
      %c0_12 = arith.constant 0 : index
      %13 = vector.load %arg7[%c0_11, %c0_12] : memref<64x512xf32, #tpu.memory_space<vmem>>, vector<64x512xf32>
      tpu.vector_store %arg7[%c0_11, %c0_12], %12 {strides = array<i32>} : memref<64x512xf32, #tpu.memory_space<vmem>>, vector<64x512xf32>,
    } else {
    }
    %c0 = arith.constant 0 : index
    %c0_1 = arith.constant 0 : index
    %3 = vector.load %arg7[%c0, %c0_1] : memref<64x512xf32, #tpu.memory_space<vmem>>, vector<64x512xf32>
    %c0_2 = arith.constant 0 : index
    %c0_3 = arith.constant 0 : index
    %4 = vector.load %arg3[%c0_2, %c0_3] : memref<64x128xf32, #tpu.memory_space<vmem>>, vector<64x128xf32>
    %c0_4 = arith.constant 0 : index
    %c0_5 = arith.constant 0 : index
    %5 = vector.load %arg4[%c0_4, %c0_5] : memref<128x512xf32, #tpu.memory_space<vmem>>, vector<128x512xf32>
    %cst = arith.constant dense<0.000000e+00> : vector<64x512xf32>
    %6 = tpu.matmul %4, %5, %cst {dimension_numbers = #tpu.dot_dimension_numbers<[1], [0], [0], [1], [0, 0, 1, 1], [], []>} : vector<64x128xf32>, vector<128x512xf32>, vector<64x512xf32> -> vector<64x512xf32>
    %7 = arith.addf %3, %6 : vector<64x512xf32>
    %c0_6 = arith.constant 0 : index
    %c0_7 = arith.constant 0 : index
    %8 = vector.load %arg7[%c0_6, %c0_7] : memref<64x512xf32, #tpu.memory_space<vmem>>, vector<64x512xf32>
    tpu.vector_store %arg7[%c0_6, %c0_7], %7 {strides = array<i32>} : memref<64x512xf32, #tpu.memory_space<vmem>>, vector<64x512xf32>,
    %c0_i32_8 = arith.constant 0 : i32
    %9 = arith.cmpi eq, %arg2, %c0_i32_8 : i32
    %10 = arith.extui %9 : i1 to i32
    %c0_i32_9 = arith.constant 0 : i32
    %11 = arith.cmpi ne, %10, %c0_i32_9 : i32
    scf.if %11 {
      %c0_10 = arith.constant 0 : index
      %c0_11 = arith.constant 0 : index
      %12 = vector.load %arg7[%c0_10, %c0_11] : memref<64x512xf32, #tpu.memory_space<vmem>>, vector<64x512xf32>
      %c0_12 = arith.constant 0 : index
      %c0_13 = arith.constant 0 : index
      %13 = vector.load %arg5[%c0_12, %c0_13] : memref<1x512xf32, #tpu.memory_space<vmem>>, vector<1x512xf32>
      %14 = vector.broadcast %13 : vector<1x512xf32> to vector<64x512xf32>
      %15 = arith.addf %12, %14 : vector<64x512xf32>
      %c0_14 = arith.constant 0 : index
      %c0_15 = arith.constant 0 : index
      %16 = vector.load %arg6[%c0_14, %c0_15] : memref<64x512xf32, #tpu.memory_space<vmem>>, vector<64x512xf32>
      tpu.vector_store %arg6[%c0_14, %c0_15], %15 {strides = array<i32>} : memref<64x512xf32, #tpu.memory_space<vmem>>, vector<64x512xf32>,
    } else {
    }
    return
  }
  func.func @transform_0(%arg0: i32, %arg1: i32, %arg2: i32) -> (i32, i32) {
    %c0_i32 = arith.constant 0 : i32
    return %arg0, %arg2 : i32, i32
  }
  func.func @transform_1(%arg0: i32, %arg1: i32, %arg2: i32) -> (i32, i32) {
    %c0_i32 = arith.constant 0 : i32
    return %arg2, %arg1 : i32, i32
  }
  func.func @transform_2(%arg0: i32, %arg1: i32, %arg2: i32) -> (i32, i32) {
    %c0_i32 = arith.constant 0 : i32
    %c0_i32_0 = arith.constant 0 : i32
    return %c0_i32, %arg1 : i32, i32
  }
  func.func @transform_3(%arg0: i32, %arg1: i32, %arg2: i32) -> (i32, i32) {
    %c0_i32 = arith.constant 0 : i32
    return %arg0, %arg1 : i32, i32
  }
}

module attributes {stable_mosaic.version = 11 : i64} {
  func.func @lstm_chunk_kernel(%arg0: i32, %arg1: i32, %arg2: memref<8x8x512xf32, #tpu.memory_space<vmem>>, %arg3: memref<128x512xf32, #tpu.memory_space<vmem>>, %arg4: memref<8x128xf32, #tpu.memory_space<vmem>>, %arg5: memref<8x128xf32, #tpu.memory_space<vmem>>, %arg6: memref<8x8x128xf32, #tpu.memory_space<vmem>>, %arg7: memref<8x128xf32, #tpu.memory_space<vmem>>, %arg8: memref<8x128xf32, #tpu.memory_space<vmem>>, %arg9: memref<8x128xf32, #tpu.memory_space<vmem>>, %arg10: memref<8x128xf32, #tpu.memory_space<vmem>>) attributes {dimension_semantics = [#tpu.dimension_semantics<parallel>, #tpu.dimension_semantics<arbitrary>], iteration_bounds = array<i64: 1, 1>, scalar_prefetch = 0 : i64, scratch_operands = 2 : i64, tpu.core_type = #tpu.core_type<tc>, window_params = [{transform_indices = @transform_0, window_bounds = array<i64: 8, 8, 512>}, {pipeline_mode = #tpu.pipeline_mode<synchronous>, transform_indices = @transform_1, window_bounds = array<i64: 128, 512>}, {transform_indices = @transform_2, window_bounds = array<i64: 8, 128>}, {transform_indices = @transform_3, window_bounds = array<i64: 8, 128>}, {transform_indices = @transform_4, window_bounds = array<i64: 8, 8, 128>}, {transform_indices = @transform_5, window_bounds = array<i64: 8, 128>}, {transform_indices = @transform_6, window_bounds = array<i64: 8, 128>}]} {
    %c0_i32 = arith.constant 0 : i32
    %0 = arith.cmpi eq, %arg1, %c0_i32 : i32
    %1 = arith.extui %0 : i1 to i32
    %c0_i32_0 = arith.constant 0 : i32
    %2 = arith.cmpi ne, %1, %c0_i32_0 : i32
    scf.if %2 {
      %c0_99 = arith.constant 0 : index
      %c0_100 = arith.constant 0 : index
      %241 = vector.load %arg4[%c0_99, %c0_100] : memref<8x128xf32, #tpu.memory_space<vmem>>, vector<8x128xf32>
      %c0_101 = arith.constant 0 : index
      %c0_102 = arith.constant 0 : index
      %242 = vector.load %arg9[%c0_101, %c0_102] : memref<8x128xf32, #tpu.memory_space<vmem>>, vector<8x128xf32>
      tpu.vector_store %arg9[%c0_101, %c0_102], %241 {strides = array<i32>} : memref<8x128xf32, #tpu.memory_space<vmem>>, vector<8x128xf32>,
      %c0_103 = arith.constant 0 : index
      %c0_104 = arith.constant 0 : index
      %243 = vector.load %arg5[%c0_103, %c0_104] : memref<8x128xf32, #tpu.memory_space<vmem>>, vector<8x128xf32>
      %c0_105 = arith.constant 0 : index
      %c0_106 = arith.constant 0 : index
      %244 = vector.load %arg10[%c0_105, %c0_106] : memref<8x128xf32, #tpu.memory_space<vmem>>, vector<8x128xf32>
      tpu.vector_store %arg10[%c0_105, %c0_106], %243 {strides = array<i32>} : memref<8x128xf32, #tpu.memory_space<vmem>>, vector<8x128xf32>,
    } else {
    }
    %c0 = arith.constant 0 : index
    %c0_1 = arith.constant 0 : index
    %3 = vector.load %arg9[%c0, %c0_1] : memref<8x128xf32, #tpu.memory_space<vmem>>, vector<8x128xf32>
    %c0_2 = arith.constant 0 : index
    %c0_3 = arith.constant 0 : index
    %4 = vector.load %arg10[%c0_2, %c0_3] : memref<8x128xf32, #tpu.memory_space<vmem>>, vector<8x128xf32>
    %c0_i32_4 = arith.constant 0 : i32
    %5 = arith.index_cast %c0_i32_4 : i32 to index
    %c0_5 = arith.constant 0 : index
    %c0_6 = arith.constant 0 : index
    %6 = vector.load %arg2[%5, %c0_5, %c0_6] : memref<8x8x512xf32, #tpu.memory_space<vmem>>, vector<1x8x512xf32>
    %7 = vector.shape_cast %6 : vector<1x8x512xf32> to vector<8x512xf32>
    %8 = vector.extract_strided_slice %7 {offsets = [0, 0], sizes = [8, 384], strides = [1, 1]} : vector<8x512xf32> to vector<8x384xf32>
    %c0_7 = arith.constant 0 : index
    %c0_8 = arith.constant 0 : index
    %9 = vector.load %arg3[%c0_7, %c0_8] : memref<128x512xf32, #tpu.memory_space<vmem>>, vector<128x384xf32>
    %cst = arith.constant dense<0.000000e+00> : vector<8x384xf32>
    %10 = tpu.matmul %3, %9, %cst {dimension_numbers = #tpu.dot_dimension_numbers<[1], [0], [0], [1], [0, 0, 1, 1], [], []>} : vector<8x128xf32>, vector<128x384xf32>, vector<8x384xf32> -> vector<8x384xf32>
    %11 = arith.addf %8, %10 : vector<8x384xf32>
    %12 = vector.extract_strided_slice %7 {offsets = [0, 384], sizes = [8, 128], strides = [1, 1]} : vector<8x512xf32> to vector<8x128xf32>
    %c0_9 = arith.constant 0 : index
    %c384 = arith.constant 384 : index
    %13 = vector.load %arg3[%c0_9, %c384] : memref<128x512xf32, #tpu.memory_space<vmem>>, vector<128x128xf32>
    %cst_10 = arith.constant dense<0.000000e+00> : vector<8x128xf32>
    %14 = tpu.matmul %3, %13, %cst_10 {dimension_numbers = #tpu.dot_dimension_numbers<[1], [0], [0], [1], [0, 0, 1, 1], [], []>} : vector<8x128xf32>, vector<128x128xf32>, vector<8x128xf32> -> vector<8x128xf32>
    %15 = arith.addf %12, %14 : vector<8x128xf32>
    %16 = arith.negf %11 : vector<8x384xf32>
    %17 = math.exp %16 : vector<8x384xf32>
    %cst_11 = arith.constant 1.000000e+00 : f32
    %18 = vector.broadcast %cst_11 : f32 to vector<8x384xf32>
    %19 = arith.addf %18, %17 : vector<8x384xf32>
    %20 = arith.divf %18, %19 : vector<8x384xf32>
    %21 = math.tanh %15 : vector<8x128xf32>
    %22 = vector.extract_strided_slice %20 {offsets = [0, 0], sizes = [8, 128], strides = [1, 1]} : vector<8x384xf32> to vector<8x128xf32>
    %23 = vector.extract_strided_slice %20 {offsets = [0, 128], sizes = [8, 128], strides = [1, 1]} : vector<8x384xf32> to vector<8x128xf32>
    %24 = vector.extract_strided_slice %20 {offsets = [0, 256], sizes = [8, 128], strides = [1, 1]} : vector<8x384xf32> to vector<8x128xf32>
    %25 = arith.mulf %23, %4 : vector<8x128xf32>
    %26 = arith.mulf %22, %21 : vector<8x128xf32>
    %27 = arith.addf %25, %26 : vector<8x128xf32>
    %28 = math.tanh %27 : vector<8x128xf32>
    %29 = arith.mulf %24, %28 : vector<8x128xf32>
    %30 = arith.index_cast %c0_i32_4 : i32 to index
    %c0_12 = arith.constant 0 : index
    %c0_13 = arith.constant 0 : index
    %31 = vector.load %arg6[%30, %c0_12, %c0_13] : memref<8x8x128xf32, #tpu.memory_space<vmem>>, vector<1x8x128xf32>
    %32 = vector.shape_cast %31 : vector<1x8x128xf32> to vector<8x128xf32>
    %33 = vector.shape_cast %29 : vector<8x128xf32> to vector<1x8x128xf32>
    tpu.vector_store %arg6[%30, %c0_12, %c0_13], %33 {strides = array<i32>} : memref<8x8x128xf32, #tpu.memory_space<vmem>>, vector<1x8x128xf32>,
    %c1_i32 = arith.constant 1 : i32
    %34 = arith.index_cast %c1_i32 : i32 to index
    %c0_14 = arith.constant 0 : index
    %c0_15 = arith.constant 0 : index
    %35 = vector.load %arg2[%34, %c0_14, %c0_15] : memref<8x8x512xf32, #tpu.memory_space<vmem>>, vector<1x8x512xf32>
    %36 = vector.shape_cast %35 : vector<1x8x512xf32> to vector<8x512xf32>
    %37 = vector.extract_strided_slice %36 {offsets = [0, 0], sizes = [8, 384], strides = [1, 1]} : vector<8x512xf32> to vector<8x384xf32>
    %c0_16 = arith.constant 0 : index
    %c0_17 = arith.constant 0 : index
    %38 = vector.load %arg3[%c0_16, %c0_17] : memref<128x512xf32, #tpu.memory_space<vmem>>, vector<128x384xf32>
    %cst_18 = arith.constant dense<0.000000e+00> : vector<8x384xf32>
    %39 = tpu.matmul %29, %38, %cst_18 {dimension_numbers = #tpu.dot_dimension_numbers<[1], [0], [0], [1], [0, 0, 1, 1], [], []>} : vector<8x128xf32>, vector<128x384xf32>, vector<8x384xf32> -> vector<8x384xf32>
    %40 = arith.addf %37, %39 : vector<8x384xf32>
    %41 = vector.extract_strided_slice %36 {offsets = [0, 384], sizes = [8, 128], strides = [1, 1]} : vector<8x512xf32> to vector<8x128xf32>
    %c0_19 = arith.constant 0 : index
    %c384_20 = arith.constant 384 : index
    %42 = vector.load %arg3[%c0_19, %c384_20] : memref<128x512xf32, #tpu.memory_space<vmem>>, vector<128x128xf32>
    %cst_21 = arith.constant dense<0.000000e+00> : vector<8x128xf32>
    %43 = tpu.matmul %29, %42, %cst_21 {dimension_numbers = #tpu.dot_dimension_numbers<[1], [0], [0], [1], [0, 0, 1, 1], [], []>} : vector<8x128xf32>, vector<128x128xf32>, vector<8x128xf32> -> vector<8x128xf32>
    %44 = arith.addf %41, %43 : vector<8x128xf32>
    %45 = arith.negf %40 : vector<8x384xf32>
    %46 = math.exp %45 : vector<8x384xf32>
    %cst_22 = arith.constant 1.000000e+00 : f32
    %47 = vector.broadcast %cst_22 : f32 to vector<8x384xf32>
    %48 = arith.addf %47, %46 : vector<8x384xf32>
    %49 = arith.divf %47, %48 : vector<8x384xf32>
    %50 = math.tanh %44 : vector<8x128xf32>
    %51 = vector.extract_strided_slice %49 {offsets = [0, 0], sizes = [8, 128], strides = [1, 1]} : vector<8x384xf32> to vector<8x128xf32>
    %52 = vector.extract_strided_slice %49 {offsets = [0, 128], sizes = [8, 128], strides = [1, 1]} : vector<8x384xf32> to vector<8x128xf32>
    %53 = vector.extract_strided_slice %49 {offsets = [0, 256], sizes = [8, 128], strides = [1, 1]} : vector<8x384xf32> to vector<8x128xf32>
    %54 = arith.mulf %52, %27 : vector<8x128xf32>
    %55 = arith.mulf %51, %50 : vector<8x128xf32>
    %56 = arith.addf %54, %55 : vector<8x128xf32>
    %57 = math.tanh %56 : vector<8x128xf32>
    %58 = arith.mulf %53, %57 : vector<8x128xf32>
    %59 = arith.index_cast %c1_i32 : i32 to index
    %c0_23 = arith.constant 0 : index
    %c0_24 = arith.constant 0 : index
    %60 = vector.load %arg6[%59, %c0_23, %c0_24] : memref<8x8x128xf32, #tpu.memory_space<vmem>>, vector<1x8x128xf32>
    %61 = vector.shape_cast %60 : vector<1x8x128xf32> to vector<8x128xf32>
    %62 = vector.shape_cast %58 : vector<8x128xf32> to vector<1x8x128xf32>
    tpu.vector_store %arg6[%59, %c0_23, %c0_24], %62 {strides = array<i32>} : memref<8x8x128xf32, #tpu.memory_space<vmem>>, vector<1x8x128xf32>,
    %c2_i32 = arith.constant 2 : i32
    %63 = arith.index_cast %c2_i32 : i32 to index
    %c0_25 = arith.constant 0 : index
    %c0_26 = arith.constant 0 : index
    %64 = vector.load %arg2[%63, %c0_25, %c0_26] : memref<8x8x512xf32, #tpu.memory_space<vmem>>, vector<1x8x512xf32>
    %65 = vector.shape_cast %64 : vector<1x8x512xf32> to vector<8x512xf32>
    %66 = vector.extract_strided_slice %65 {offsets = [0, 0], sizes = [8, 384], strides = [1, 1]} : vector<8x512xf32> to vector<8x384xf32>
    %c0_27 = arith.constant 0 : index
    %c0_28 = arith.constant 0 : index
    %67 = vector.load %arg3[%c0_27, %c0_28] : memref<128x512xf32, #tpu.memory_space<vmem>>, vector<128x384xf32>
    %cst_29 = arith.constant dense<0.000000e+00> : vector<8x384xf32>
    %68 = tpu.matmul %58, %67, %cst_29 {dimension_numbers = #tpu.dot_dimension_numbers<[1], [0], [0], [1], [0, 0, 1, 1], [], []>} : vector<8x128xf32>, vector<128x384xf32>, vector<8x384xf32> -> vector<8x384xf32>
    %69 = arith.addf %66, %68 : vector<8x384xf32>
    %70 = vector.extract_strided_slice %65 {offsets = [0, 384], sizes = [8, 128], strides = [1, 1]} : vector<8x512xf32> to vector<8x128xf32>
    %c0_30 = arith.constant 0 : index
    %c384_31 = arith.constant 384 : index
    %71 = vector.load %arg3[%c0_30, %c384_31] : memref<128x512xf32, #tpu.memory_space<vmem>>, vector<128x128xf32>
    %cst_32 = arith.constant dense<0.000000e+00> : vector<8x128xf32>
    %72 = tpu.matmul %58, %71, %cst_32 {dimension_numbers = #tpu.dot_dimension_numbers<[1], [0], [0], [1], [0, 0, 1, 1], [], []>} : vector<8x128xf32>, vector<128x128xf32>, vector<8x128xf32> -> vector<8x128xf32>
    %73 = arith.addf %70, %72 : vector<8x128xf32>
    %74 = arith.negf %69 : vector<8x384xf32>
    %75 = math.exp %74 : vector<8x384xf32>
    %cst_33 = arith.constant 1.000000e+00 : f32
    %76 = vector.broadcast %cst_33 : f32 to vector<8x384xf32>
    %77 = arith.addf %76, %75 : vector<8x384xf32>
    %78 = arith.divf %76, %77 : vector<8x384xf32>
    %79 = math.tanh %73 : vector<8x128xf32>
    %80 = vector.extract_strided_slice %78 {offsets = [0, 0], sizes = [8, 128], strides = [1, 1]} : vector<8x384xf32> to vector<8x128xf32>
    %81 = vector.extract_strided_slice %78 {offsets = [0, 128], sizes = [8, 128], strides = [1, 1]} : vector<8x384xf32> to vector<8x128xf32>
    %82 = vector.extract_strided_slice %78 {offsets = [0, 256], sizes = [8, 128], strides = [1, 1]} : vector<8x384xf32> to vector<8x128xf32>
    %83 = arith.mulf %81, %56 : vector<8x128xf32>
    %84 = arith.mulf %80, %79 : vector<8x128xf32>
    %85 = arith.addf %83, %84 : vector<8x128xf32>
    %86 = math.tanh %85 : vector<8x128xf32>
    %87 = arith.mulf %82, %86 : vector<8x128xf32>
    %88 = arith.index_cast %c2_i32 : i32 to index
    %c0_34 = arith.constant 0 : index
    %c0_35 = arith.constant 0 : index
    %89 = vector.load %arg6[%88, %c0_34, %c0_35] : memref<8x8x128xf32, #tpu.memory_space<vmem>>, vector<1x8x128xf32>
    %90 = vector.shape_cast %89 : vector<1x8x128xf32> to vector<8x128xf32>
    %91 = vector.shape_cast %87 : vector<8x128xf32> to vector<1x8x128xf32>
    tpu.vector_store %arg6[%88, %c0_34, %c0_35], %91 {strides = array<i32>} : memref<8x8x128xf32, #tpu.memory_space<vmem>>, vector<1x8x128xf32>,
    %c3_i32 = arith.constant 3 : i32
    %92 = arith.index_cast %c3_i32 : i32 to index
    %c0_36 = arith.constant 0 : index
    %c0_37 = arith.constant 0 : index
    %93 = vector.load %arg2[%92, %c0_36, %c0_37] : memref<8x8x512xf32, #tpu.memory_space<vmem>>, vector<1x8x512xf32>
    %94 = vector.shape_cast %93 : vector<1x8x512xf32> to vector<8x512xf32>
    %95 = vector.extract_strided_slice %94 {offsets = [0, 0], sizes = [8, 384], strides = [1, 1]} : vector<8x512xf32> to vector<8x384xf32>
    %c0_38 = arith.constant 0 : index
    %c0_39 = arith.constant 0 : index
    %96 = vector.load %arg3[%c0_38, %c0_39] : memref<128x512xf32, #tpu.memory_space<vmem>>, vector<128x384xf32>
    %cst_40 = arith.constant dense<0.000000e+00> : vector<8x384xf32>
    %97 = tpu.matmul %87, %96, %cst_40 {dimension_numbers = #tpu.dot_dimension_numbers<[1], [0], [0], [1], [0, 0, 1, 1], [], []>} : vector<8x128xf32>, vector<128x384xf32>, vector<8x384xf32> -> vector<8x384xf32>
    %98 = arith.addf %95, %97 : vector<8x384xf32>
    %99 = vector.extract_strided_slice %94 {offsets = [0, 384], sizes = [8, 128], strides = [1, 1]} : vector<8x512xf32> to vector<8x128xf32>
    %c0_41 = arith.constant 0 : index
    %c384_42 = arith.constant 384 : index
    %100 = vector.load %arg3[%c0_41, %c384_42] : memref<128x512xf32, #tpu.memory_space<vmem>>, vector<128x128xf32>
    %cst_43 = arith.constant dense<0.000000e+00> : vector<8x128xf32>
    %101 = tpu.matmul %87, %100, %cst_43 {dimension_numbers = #tpu.dot_dimension_numbers<[1], [0], [0], [1], [0, 0, 1, 1], [], []>} : vector<8x128xf32>, vector<128x128xf32>, vector<8x128xf32> -> vector<8x128xf32>
    %102 = arith.addf %99, %101 : vector<8x128xf32>
    %103 = arith.negf %98 : vector<8x384xf32>
    %104 = math.exp %103 : vector<8x384xf32>
    %cst_44 = arith.constant 1.000000e+00 : f32
    %105 = vector.broadcast %cst_44 : f32 to vector<8x384xf32>
    %106 = arith.addf %105, %104 : vector<8x384xf32>
    %107 = arith.divf %105, %106 : vector<8x384xf32>
    %108 = math.tanh %102 : vector<8x128xf32>
    %109 = vector.extract_strided_slice %107 {offsets = [0, 0], sizes = [8, 128], strides = [1, 1]} : vector<8x384xf32> to vector<8x128xf32>
    %110 = vector.extract_strided_slice %107 {offsets = [0, 128], sizes = [8, 128], strides = [1, 1]} : vector<8x384xf32> to vector<8x128xf32>
    %111 = vector.extract_strided_slice %107 {offsets = [0, 256], sizes = [8, 128], strides = [1, 1]} : vector<8x384xf32> to vector<8x128xf32>
    %112 = arith.mulf %110, %85 : vector<8x128xf32>
    %113 = arith.mulf %109, %108 : vector<8x128xf32>
    %114 = arith.addf %112, %113 : vector<8x128xf32>
    %115 = math.tanh %114 : vector<8x128xf32>
    %116 = arith.mulf %111, %115 : vector<8x128xf32>
    %117 = arith.index_cast %c3_i32 : i32 to index
    %c0_45 = arith.constant 0 : index
    %c0_46 = arith.constant 0 : index
    %118 = vector.load %arg6[%117, %c0_45, %c0_46] : memref<8x8x128xf32, #tpu.memory_space<vmem>>, vector<1x8x128xf32>
    %119 = vector.shape_cast %118 : vector<1x8x128xf32> to vector<8x128xf32>
    %120 = vector.shape_cast %116 : vector<8x128xf32> to vector<1x8x128xf32>
    tpu.vector_store %arg6[%117, %c0_45, %c0_46], %120 {strides = array<i32>} : memref<8x8x128xf32, #tpu.memory_space<vmem>>, vector<1x8x128xf32>,
    %c4_i32 = arith.constant 4 : i32
    %121 = arith.index_cast %c4_i32 : i32 to index
    %c0_47 = arith.constant 0 : index
    %c0_48 = arith.constant 0 : index
    %122 = vector.load %arg2[%121, %c0_47, %c0_48] : memref<8x8x512xf32, #tpu.memory_space<vmem>>, vector<1x8x512xf32>
    %123 = vector.shape_cast %122 : vector<1x8x512xf32> to vector<8x512xf32>
    %124 = vector.extract_strided_slice %123 {offsets = [0, 0], sizes = [8, 384], strides = [1, 1]} : vector<8x512xf32> to vector<8x384xf32>
    %c0_49 = arith.constant 0 : index
    %c0_50 = arith.constant 0 : index
    %125 = vector.load %arg3[%c0_49, %c0_50] : memref<128x512xf32, #tpu.memory_space<vmem>>, vector<128x384xf32>
    %cst_51 = arith.constant dense<0.000000e+00> : vector<8x384xf32>
    %126 = tpu.matmul %116, %125, %cst_51 {dimension_numbers = #tpu.dot_dimension_numbers<[1], [0], [0], [1], [0, 0, 1, 1], [], []>} : vector<8x128xf32>, vector<128x384xf32>, vector<8x384xf32> -> vector<8x384xf32>
    %127 = arith.addf %124, %126 : vector<8x384xf32>
    %128 = vector.extract_strided_slice %123 {offsets = [0, 384], sizes = [8, 128], strides = [1, 1]} : vector<8x512xf32> to vector<8x128xf32>
    %c0_52 = arith.constant 0 : index
    %c384_53 = arith.constant 384 : index
    %129 = vector.load %arg3[%c0_52, %c384_53] : memref<128x512xf32, #tpu.memory_space<vmem>>, vector<128x128xf32>
    %cst_54 = arith.constant dense<0.000000e+00> : vector<8x128xf32>
    %130 = tpu.matmul %116, %129, %cst_54 {dimension_numbers = #tpu.dot_dimension_numbers<[1], [0], [0], [1], [0, 0, 1, 1], [], []>} : vector<8x128xf32>, vector<128x128xf32>, vector<8x128xf32> -> vector<8x128xf32>
    %131 = arith.addf %128, %130 : vector<8x128xf32>
    %132 = arith.negf %127 : vector<8x384xf32>
    %133 = math.exp %132 : vector<8x384xf32>
    %cst_55 = arith.constant 1.000000e+00 : f32
    %134 = vector.broadcast %cst_55 : f32 to vector<8x384xf32>
    %135 = arith.addf %134, %133 : vector<8x384xf32>
    %136 = arith.divf %134, %135 : vector<8x384xf32>
    %137 = math.tanh %131 : vector<8x128xf32>
    %138 = vector.extract_strided_slice %136 {offsets = [0, 0], sizes = [8, 128], strides = [1, 1]} : vector<8x384xf32> to vector<8x128xf32>
    %139 = vector.extract_strided_slice %136 {offsets = [0, 128], sizes = [8, 128], strides = [1, 1]} : vector<8x384xf32> to vector<8x128xf32>
    %140 = vector.extract_strided_slice %136 {offsets = [0, 256], sizes = [8, 128], strides = [1, 1]} : vector<8x384xf32> to vector<8x128xf32>
    %141 = arith.mulf %139, %114 : vector<8x128xf32>
    %142 = arith.mulf %138, %137 : vector<8x128xf32>
    %143 = arith.addf %141, %142 : vector<8x128xf32>
    %144 = math.tanh %143 : vector<8x128xf32>
    %145 = arith.mulf %140, %144 : vector<8x128xf32>
    %146 = arith.index_cast %c4_i32 : i32 to index
    %c0_56 = arith.constant 0 : index
    %c0_57 = arith.constant 0 : index
    %147 = vector.load %arg6[%146, %c0_56, %c0_57] : memref<8x8x128xf32, #tpu.memory_space<vmem>>, vector<1x8x128xf32>
    %148 = vector.shape_cast %147 : vector<1x8x128xf32> to vector<8x128xf32>
    %149 = vector.shape_cast %145 : vector<8x128xf32> to vector<1x8x128xf32>
    tpu.vector_store %arg6[%146, %c0_56, %c0_57], %149 {strides = array<i32>} : memref<8x8x128xf32, #tpu.memory_space<vmem>>, vector<1x8x128xf32>,
    %c5_i32 = arith.constant 5 : i32
    %150 = arith.index_cast %c5_i32 : i32 to index
    %c0_58 = arith.constant 0 : index
    %c0_59 = arith.constant 0 : index
    %151 = vector.load %arg2[%150, %c0_58, %c0_59] : memref<8x8x512xf32, #tpu.memory_space<vmem>>, vector<1x8x512xf32>
    %152 = vector.shape_cast %151 : vector<1x8x512xf32> to vector<8x512xf32>
    %153 = vector.extract_strided_slice %152 {offsets = [0, 0], sizes = [8, 384], strides = [1, 1]} : vector<8x512xf32> to vector<8x384xf32>
    %c0_60 = arith.constant 0 : index
    %c0_61 = arith.constant 0 : index
    %154 = vector.load %arg3[%c0_60, %c0_61] : memref<128x512xf32, #tpu.memory_space<vmem>>, vector<128x384xf32>
    %cst_62 = arith.constant dense<0.000000e+00> : vector<8x384xf32>
    %155 = tpu.matmul %145, %154, %cst_62 {dimension_numbers = #tpu.dot_dimension_numbers<[1], [0], [0], [1], [0, 0, 1, 1], [], []>} : vector<8x128xf32>, vector<128x384xf32>, vector<8x384xf32> -> vector<8x384xf32>
    %156 = arith.addf %153, %155 : vector<8x384xf32>
    %157 = vector.extract_strided_slice %152 {offsets = [0, 384], sizes = [8, 128], strides = [1, 1]} : vector<8x512xf32> to vector<8x128xf32>
    %c0_63 = arith.constant 0 : index
    %c384_64 = arith.constant 384 : index
    %158 = vector.load %arg3[%c0_63, %c384_64] : memref<128x512xf32, #tpu.memory_space<vmem>>, vector<128x128xf32>
    %cst_65 = arith.constant dense<0.000000e+00> : vector<8x128xf32>
    %159 = tpu.matmul %145, %158, %cst_65 {dimension_numbers = #tpu.dot_dimension_numbers<[1], [0], [0], [1], [0, 0, 1, 1], [], []>} : vector<8x128xf32>, vector<128x128xf32>, vector<8x128xf32> -> vector<8x128xf32>
    %160 = arith.addf %157, %159 : vector<8x128xf32>
    %161 = arith.negf %156 : vector<8x384xf32>
    %162 = math.exp %161 : vector<8x384xf32>
    %cst_66 = arith.constant 1.000000e+00 : f32
    %163 = vector.broadcast %cst_66 : f32 to vector<8x384xf32>
    %164 = arith.addf %163, %162 : vector<8x384xf32>
    %165 = arith.divf %163, %164 : vector<8x384xf32>
    %166 = math.tanh %160 : vector<8x128xf32>
    %167 = vector.extract_strided_slice %165 {offsets = [0, 0], sizes = [8, 128], strides = [1, 1]} : vector<8x384xf32> to vector<8x128xf32>
    %168 = vector.extract_strided_slice %165 {offsets = [0, 128], sizes = [8, 128], strides = [1, 1]} : vector<8x384xf32> to vector<8x128xf32>
    %169 = vector.extract_strided_slice %165 {offsets = [0, 256], sizes = [8, 128], strides = [1, 1]} : vector<8x384xf32> to vector<8x128xf32>
    %170 = arith.mulf %168, %143 : vector<8x128xf32>
    %171 = arith.mulf %167, %166 : vector<8x128xf32>
    %172 = arith.addf %170, %171 : vector<8x128xf32>
    %173 = math.tanh %172 : vector<8x128xf32>
    %174 = arith.mulf %169, %173 : vector<8x128xf32>
    %175 = arith.index_cast %c5_i32 : i32 to index
    %c0_67 = arith.constant 0 : index
    %c0_68 = arith.constant 0 : index
    %176 = vector.load %arg6[%175, %c0_67, %c0_68] : memref<8x8x128xf32, #tpu.memory_space<vmem>>, vector<1x8x128xf32>
    %177 = vector.shape_cast %176 : vector<1x8x128xf32> to vector<8x128xf32>
    %178 = vector.shape_cast %174 : vector<8x128xf32> to vector<1x8x128xf32>
    tpu.vector_store %arg6[%175, %c0_67, %c0_68], %178 {strides = array<i32>} : memref<8x8x128xf32, #tpu.memory_space<vmem>>, vector<1x8x128xf32>,
    %c6_i32 = arith.constant 6 : i32
    %179 = arith.index_cast %c6_i32 : i32 to index
    %c0_69 = arith.constant 0 : index
    %c0_70 = arith.constant 0 : index
    %180 = vector.load %arg2[%179, %c0_69, %c0_70] : memref<8x8x512xf32, #tpu.memory_space<vmem>>, vector<1x8x512xf32>
    %181 = vector.shape_cast %180 : vector<1x8x512xf32> to vector<8x512xf32>
    %182 = vector.extract_strided_slice %181 {offsets = [0, 0], sizes = [8, 384], strides = [1, 1]} : vector<8x512xf32> to vector<8x384xf32>
    %c0_71 = arith.constant 0 : index
    %c0_72 = arith.constant 0 : index
    %183 = vector.load %arg3[%c0_71, %c0_72] : memref<128x512xf32, #tpu.memory_space<vmem>>, vector<128x384xf32>
    %cst_73 = arith.constant dense<0.000000e+00> : vector<8x384xf32>
    %184 = tpu.matmul %174, %183, %cst_73 {dimension_numbers = #tpu.dot_dimension_numbers<[1], [0], [0], [1], [0, 0, 1, 1], [], []>} : vector<8x128xf32>, vector<128x384xf32>, vector<8x384xf32> -> vector<8x384xf32>
    %185 = arith.addf %182, %184 : vector<8x384xf32>
    %186 = vector.extract_strided_slice %181 {offsets = [0, 384], sizes = [8, 128], strides = [1, 1]} : vector<8x512xf32> to vector<8x128xf32>
    %c0_74 = arith.constant 0 : index
    %c384_75 = arith.constant 384 : index
    %187 = vector.load %arg3[%c0_74, %c384_75] : memref<128x512xf32, #tpu.memory_space<vmem>>, vector<128x128xf32>
    %cst_76 = arith.constant dense<0.000000e+00> : vector<8x128xf32>
    %188 = tpu.matmul %174, %187, %cst_76 {dimension_numbers = #tpu.dot_dimension_numbers<[1], [0], [0], [1], [0, 0, 1, 1], [], []>} : vector<8x128xf32>, vector<128x128xf32>, vector<8x128xf32> -> vector<8x128xf32>
    %189 = arith.addf %186, %188 : vector<8x128xf32>
    %190 = arith.negf %185 : vector<8x384xf32>
    %191 = math.exp %190 : vector<8x384xf32>
    %cst_77 = arith.constant 1.000000e+00 : f32
    %192 = vector.broadcast %cst_77 : f32 to vector<8x384xf32>
    %193 = arith.addf %192, %191 : vector<8x384xf32>
    %194 = arith.divf %192, %193 : vector<8x384xf32>
    %195 = math.tanh %189 : vector<8x128xf32>
    %196 = vector.extract_strided_slice %194 {offsets = [0, 0], sizes = [8, 128], strides = [1, 1]} : vector<8x384xf32> to vector<8x128xf32>
    %197 = vector.extract_strided_slice %194 {offsets = [0, 128], sizes = [8, 128], strides = [1, 1]} : vector<8x384xf32> to vector<8x128xf32>
    %198 = vector.extract_strided_slice %194 {offsets = [0, 256], sizes = [8, 128], strides = [1, 1]} : vector<8x384xf32> to vector<8x128xf32>
    %199 = arith.mulf %197, %172 : vector<8x128xf32>
    %200 = arith.mulf %196, %195 : vector<8x128xf32>
    %201 = arith.addf %199, %200 : vector<8x128xf32>
    %202 = math.tanh %201 : vector<8x128xf32>
    %203 = arith.mulf %198, %202 : vector<8x128xf32>
    %204 = arith.index_cast %c6_i32 : i32 to index
    %c0_78 = arith.constant 0 : index
    %c0_79 = arith.constant 0 : index
    %205 = vector.load %arg6[%204, %c0_78, %c0_79] : memref<8x8x128xf32, #tpu.memory_space<vmem>>, vector<1x8x128xf32>
    %206 = vector.shape_cast %205 : vector<1x8x128xf32> to vector<8x128xf32>
    %207 = vector.shape_cast %203 : vector<8x128xf32> to vector<1x8x128xf32>
    tpu.vector_store %arg6[%204, %c0_78, %c0_79], %207 {strides = array<i32>} : memref<8x8x128xf32, #tpu.memory_space<vmem>>, vector<1x8x128xf32>,
    %c7_i32 = arith.constant 7 : i32
    %208 = arith.index_cast %c7_i32 : i32 to index
    %c0_80 = arith.constant 0 : index
    %c0_81 = arith.constant 0 : index
    %209 = vector.load %arg2[%208, %c0_80, %c0_81] : memref<8x8x512xf32, #tpu.memory_space<vmem>>, vector<1x8x512xf32>
    %210 = vector.shape_cast %209 : vector<1x8x512xf32> to vector<8x512xf32>
    %211 = vector.extract_strided_slice %210 {offsets = [0, 0], sizes = [8, 384], strides = [1, 1]} : vector<8x512xf32> to vector<8x384xf32>
    %c0_82 = arith.constant 0 : index
    %c0_83 = arith.constant 0 : index
    %212 = vector.load %arg3[%c0_82, %c0_83] : memref<128x512xf32, #tpu.memory_space<vmem>>, vector<128x384xf32>
    %cst_84 = arith.constant dense<0.000000e+00> : vector<8x384xf32>
    %213 = tpu.matmul %203, %212, %cst_84 {dimension_numbers = #tpu.dot_dimension_numbers<[1], [0], [0], [1], [0, 0, 1, 1], [], []>} : vector<8x128xf32>, vector<128x384xf32>, vector<8x384xf32> -> vector<8x384xf32>
    %214 = arith.addf %211, %213 : vector<8x384xf32>
    %215 = vector.extract_strided_slice %210 {offsets = [0, 384], sizes = [8, 128], strides = [1, 1]} : vector<8x512xf32> to vector<8x128xf32>
    %c0_85 = arith.constant 0 : index
    %c384_86 = arith.constant 384 : index
    %216 = vector.load %arg3[%c0_85, %c384_86] : memref<128x512xf32, #tpu.memory_space<vmem>>, vector<128x128xf32>
    %cst_87 = arith.constant dense<0.000000e+00> : vector<8x128xf32>
    %217 = tpu.matmul %203, %216, %cst_87 {dimension_numbers = #tpu.dot_dimension_numbers<[1], [0], [0], [1], [0, 0, 1, 1], [], []>} : vector<8x128xf32>, vector<128x128xf32>, vector<8x128xf32> -> vector<8x128xf32>
    %218 = arith.addf %215, %217 : vector<8x128xf32>
    %219 = arith.negf %214 : vector<8x384xf32>
    %220 = math.exp %219 : vector<8x384xf32>
    %cst_88 = arith.constant 1.000000e+00 : f32
    %221 = vector.broadcast %cst_88 : f32 to vector<8x384xf32>
    %222 = arith.addf %221, %220 : vector<8x384xf32>
    %223 = arith.divf %221, %222 : vector<8x384xf32>
    %224 = math.tanh %218 : vector<8x128xf32>
    %225 = vector.extract_strided_slice %223 {offsets = [0, 0], sizes = [8, 128], strides = [1, 1]} : vector<8x384xf32> to vector<8x128xf32>
    %226 = vector.extract_strided_slice %223 {offsets = [0, 128], sizes = [8, 128], strides = [1, 1]} : vector<8x384xf32> to vector<8x128xf32>
    %227 = vector.extract_strided_slice %223 {offsets = [0, 256], sizes = [8, 128], strides = [1, 1]} : vector<8x384xf32> to vector<8x128xf32>
    %228 = arith.mulf %226, %201 : vector<8x128xf32>
    %229 = arith.mulf %225, %224 : vector<8x128xf32>
    %230 = arith.addf %228, %229 : vector<8x128xf32>
    %231 = math.tanh %230 : vector<8x128xf32>
    %232 = arith.mulf %227, %231 : vector<8x128xf32>
    %233 = arith.index_cast %c7_i32 : i32 to index
    %c0_89 = arith.constant 0 : index
    %c0_90 = arith.constant 0 : index
    %234 = vector.load %arg6[%233, %c0_89, %c0_90] : memref<8x8x128xf32, #tpu.memory_space<vmem>>, vector<1x8x128xf32>
    %235 = vector.shape_cast %234 : vector<1x8x128xf32> to vector<8x128xf32>
    %236 = vector.shape_cast %232 : vector<8x128xf32> to vector<1x8x128xf32>
    tpu.vector_store %arg6[%233, %c0_89, %c0_90], %236 {strides = array<i32>} : memref<8x8x128xf32, #tpu.memory_space<vmem>>, vector<1x8x128xf32>,
    %c8_i32 = arith.constant 8 : i32
    %c0_91 = arith.constant 0 : index
    %c0_92 = arith.constant 0 : index
    %237 = vector.load %arg9[%c0_91, %c0_92] : memref<8x128xf32, #tpu.memory_space<vmem>>, vector<8x128xf32>
    tpu.vector_store %arg9[%c0_91, %c0_92], %232 {strides = array<i32>} : memref<8x128xf32, #tpu.memory_space<vmem>>, vector<8x128xf32>,
    %c0_93 = arith.constant 0 : index
    %c0_94 = arith.constant 0 : index
    %238 = vector.load %arg10[%c0_93, %c0_94] : memref<8x128xf32, #tpu.memory_space<vmem>>, vector<8x128xf32>
    tpu.vector_store %arg10[%c0_93, %c0_94], %230 {strides = array<i32>} : memref<8x128xf32, #tpu.memory_space<vmem>>, vector<8x128xf32>,
    %c0_95 = arith.constant 0 : index
    %c0_96 = arith.constant 0 : index
    %239 = vector.load %arg7[%c0_95, %c0_96] : memref<8x128xf32, #tpu.memory_space<vmem>>, vector<8x128xf32>
    tpu.vector_store %arg7[%c0_95, %c0_96], %232 {strides = array<i32>} : memref<8x128xf32, #tpu.memory_space<vmem>>, vector<8x128xf32>,
    %c0_97 = arith.constant 0 : index
    %c0_98 = arith.constant 0 : index
    %240 = vector.load %arg8[%c0_97, %c0_98] : memref<8x128xf32, #tpu.memory_space<vmem>>, vector<8x128xf32>
    tpu.vector_store %arg8[%c0_97, %c0_98], %230 {strides = array<i32>} : memref<8x128xf32, #tpu.memory_space<vmem>>, vector<8x128xf32>,
    return
  }
  func.func @transform_0(%arg0: i32, %arg1: i32) -> (i32, i32, i32) {
    %c0_i32 = arith.constant 0 : i32
    %c0_i32_0 = arith.constant 0 : i32
    return %arg1, %arg0, %c0_i32 : i32, i32, i32
  }
  func.func @transform_1(%arg0: i32, %arg1: i32) -> (i32, i32) {
    %c0_i32 = arith.constant 0 : i32
    %c0_i32_0 = arith.constant 0 : i32
    %c0_i32_1 = arith.constant 0 : i32
    return %c0_i32, %c0_i32_0 : i32, i32
  }
  func.func @transform_2(%arg0: i32, %arg1: i32) -> (i32, i32) {
    %c0_i32 = arith.constant 0 : i32
    %c0_i32_0 = arith.constant 0 : i32
    return %arg0, %c0_i32 : i32, i32
  }
  func.func @transform_3(%arg0: i32, %arg1: i32) -> (i32, i32) {
    %c0_i32 = arith.constant 0 : i32
    %c0_i32_0 = arith.constant 0 : i32
    return %arg0, %c0_i32 : i32, i32
  }
  func.func @transform_4(%arg0: i32, %arg1: i32) -> (i32, i32, i32) {
    %c0_i32 = arith.constant 0 : i32
    %c0_i32_0 = arith.constant 0 : i32
    return %arg1, %arg0, %c0_i32 : i32, i32, i32
  }
  func.func @transform_5(%arg0: i32, %arg1: i32) -> (i32, i32) {
    %c0_i32 = arith.constant 0 : i32
    %c0_i32_0 = arith.constant 0 : i32
    return %arg0, %c0_i32 : i32, i32
  }
  func.func @transform_6(%arg0: i32, %arg1: i32) -> (i32, i32) {
    %c0_i32 = arith.constant 0 : i32
    %c0_i32_0 = arith.constant 0 : i32
    return %arg0, %c0_i32 : i32, i32
  }
}

module attributes {stable_mosaic.version = 11 : i64} {
  func.func @matmul_bias_kernel(%arg0: i32, %arg1: i32, %arg2: i32, %arg3: memref<64x128xf32, #tpu.memory_space<vmem>>, %arg4: memref<128x128xf32, #tpu.memory_space<vmem>>, %arg5: memref<1x128xf32, #tpu.memory_space<vmem>>, %arg6: memref<64x128xf32, #tpu.memory_space<vmem>>, %arg7: memref<64x128xf32, #tpu.memory_space<vmem>>) attributes {dimension_semantics = [#tpu.dimension_semantics<parallel>, #tpu.dimension_semantics<parallel>, #tpu.dimension_semantics<arbitrary>], iteration_bounds = array<i64: 1, 1, 1>, scalar_prefetch = 0 : i64, scratch_operands = 1 : i64, tpu.core_type = #tpu.core_type<tc>, window_params = [{transform_indices = @transform_0, window_bounds = array<i64: 64, 128>}, {transform_indices = @transform_1, window_bounds = array<i64: 128, 128>}, {transform_indices = @transform_2, window_bounds = array<i64: 1, 128>}, {transform_indices = @transform_3, window_bounds = array<i64: 64, 128>}]} {
    %c0_i32 = arith.constant 0 : i32
    %0 = arith.cmpi eq, %arg2, %c0_i32 : i32
    %1 = arith.extui %0 : i1 to i32
    %c0_i32_0 = arith.constant 0 : i32
    %2 = arith.cmpi ne, %1, %c0_i32_0 : i32
    scf.if %2 {
      %cst_10 = arith.constant 0.000000e+00 : f32
      %12 = vector.broadcast %cst_10 : f32 to vector<64x128xf32>
      %c0_11 = arith.constant 0 : index
      %c0_12 = arith.constant 0 : index
      %13 = vector.load %arg7[%c0_11, %c0_12] : memref<64x128xf32, #tpu.memory_space<vmem>>, vector<64x128xf32>
      tpu.vector_store %arg7[%c0_11, %c0_12], %12 {strides = array<i32>} : memref<64x128xf32, #tpu.memory_space<vmem>>, vector<64x128xf32>,
    } else {
    }
    %c0 = arith.constant 0 : index
    %c0_1 = arith.constant 0 : index
    %3 = vector.load %arg7[%c0, %c0_1] : memref<64x128xf32, #tpu.memory_space<vmem>>, vector<64x128xf32>
    %c0_2 = arith.constant 0 : index
    %c0_3 = arith.constant 0 : index
    %4 = vector.load %arg3[%c0_2, %c0_3] : memref<64x128xf32, #tpu.memory_space<vmem>>, vector<64x128xf32>
    %c0_4 = arith.constant 0 : index
    %c0_5 = arith.constant 0 : index
    %5 = vector.load %arg4[%c0_4, %c0_5] : memref<128x128xf32, #tpu.memory_space<vmem>>, vector<128x128xf32>
    %cst = arith.constant dense<0.000000e+00> : vector<64x128xf32>
    %6 = tpu.matmul %4, %5, %cst {dimension_numbers = #tpu.dot_dimension_numbers<[1], [0], [0], [1], [0, 0, 1, 1], [], []>} : vector<64x128xf32>, vector<128x128xf32>, vector<64x128xf32> -> vector<64x128xf32>
    %7 = arith.addf %3, %6 : vector<64x128xf32>
    %c0_6 = arith.constant 0 : index
    %c0_7 = arith.constant 0 : index
    %8 = vector.load %arg7[%c0_6, %c0_7] : memref<64x128xf32, #tpu.memory_space<vmem>>, vector<64x128xf32>
    tpu.vector_store %arg7[%c0_6, %c0_7], %7 {strides = array<i32>} : memref<64x128xf32, #tpu.memory_space<vmem>>, vector<64x128xf32>,
    %c0_i32_8 = arith.constant 0 : i32
    %9 = arith.cmpi eq, %arg2, %c0_i32_8 : i32
    %10 = arith.extui %9 : i1 to i32
    %c0_i32_9 = arith.constant 0 : i32
    %11 = arith.cmpi ne, %10, %c0_i32_9 : i32
    scf.if %11 {
      %c0_10 = arith.constant 0 : index
      %c0_11 = arith.constant 0 : index
      %12 = vector.load %arg7[%c0_10, %c0_11] : memref<64x128xf32, #tpu.memory_space<vmem>>, vector<64x128xf32>
      %c0_12 = arith.constant 0 : index
      %c0_13 = arith.constant 0 : index
      %13 = vector.load %arg5[%c0_12, %c0_13] : memref<1x128xf32, #tpu.memory_space<vmem>>, vector<1x128xf32>
      %14 = vector.broadcast %13 : vector<1x128xf32> to vector<64x128xf32>
      %15 = arith.addf %12, %14 : vector<64x128xf32>
      %c0_14 = arith.constant 0 : index
      %c0_15 = arith.constant 0 : index
      %16 = vector.load %arg6[%c0_14, %c0_15] : memref<64x128xf32, #tpu.memory_space<vmem>>, vector<64x128xf32>
      tpu.vector_store %arg6[%c0_14, %c0_15], %15 {strides = array<i32>} : memref<64x128xf32, #tpu.memory_space<vmem>>, vector<64x128xf32>,
    } else {
    }
    return
  }
  func.func @transform_0(%arg0: i32, %arg1: i32, %arg2: i32) -> (i32, i32) {
    %c0_i32 = arith.constant 0 : i32
    return %arg0, %arg2 : i32, i32
  }
  func.func @transform_1(%arg0: i32, %arg1: i32, %arg2: i32) -> (i32, i32) {
    %c0_i32 = arith.constant 0 : i32
    return %arg2, %arg1 : i32, i32
  }
  func.func @transform_2(%arg0: i32, %arg1: i32, %arg2: i32) -> (i32, i32) {
    %c0_i32 = arith.constant 0 : i32
    %c0_i32_0 = arith.constant 0 : i32
    return %c0_i32, %arg1 : i32, i32
  }
  func.func @transform_3(%arg0: i32, %arg1: i32, %arg2: i32) -> (i32, i32) {
    %c0_i32 = arith.constant 0 : i32
    return %arg0, %arg1 : i32, i32
  }
}

</mosaic_0001>

<llo_original>
// kernel: rnn_model_forward.9
$region0: #{rnn_model_forward.9}
  #allocation0 [shape = 'u32[]', space=smem, size = 0x4, offset = 0x4, fixed_abs, tag = 'smem constant byte address 0x4 - core index']
  #allocation1 [shape = 'u32[72,128]{1,0:T(1,128)}', space=vmem, size = 0x9000, scoped, tag = 'internal scratch']
  #allocation2 [shape = 'f32[64,128]{1,0:T(8,128)}', space=vmem, size = 0x8000, scoped, tag = 'scratch operand']
  %s0 = inlined_call_operand.vmem [shape: f32[64,128], index: 0, kind: input, shape index: {}]
  %s1 = inlined_call_operand.vmem [shape: f32[128,128], index: 1, kind: input, shape index: {}]
  %s2 = inlined_call_operand.vmem [shape: f32[1,128], index: 2, kind: input, shape index: {}]
  %s3 = inlined_call_operand.vmem [shape: f32[64,128], index: 3, kind: output, shape index: {}]
  %s4 = sld [smem:[#allocation0]]
  $region30: #{rnn_model_forward.9} parent=0
    _
  %s6 = ssub.s32 1, %s4
  %s7 = scalar_select 0, %s6, %s4
  // Predicated region
  $region2: #{rnn_model_forward.9} parent=0 // pred_check
    _
  $region3: #{rnn_model_forward.9} parent=0 // pred_check_branch
    %9 = sbr.rel (0) target = $region5
  $region4: #{rnn_model_forward.9} parent=0 // pred_region
    _
  $region5: #{rnn_model_forward.9} parent=0 // pred_fallthru
    _
  // Predicated region
  $region6: #{rnn_model_forward.9} parent=0 // pred_check
    _
  $region7: #{rnn_model_forward.9} parent=0 // pred_check_branch
    %11 = sbr.rel (0) target = $region9
  $region8: #{rnn_model_forward.9} parent=0 // pred_region
    _
  $region9: #{rnn_model_forward.9} parent=0 // pred_fallthru
    _
  // Predicated region
  $region10: #{rnn_model_forward.9} parent=0 // pred_check
    _
  $region11: #{rnn_model_forward.9} parent=0 // pred_check_branch
    %13 = sbr.rel (0) target = $region13
  $region12: #{rnn_model_forward.9} parent=0 // pred_region
    _
  $region13: #{rnn_model_forward.9} parent=0 // pred_fallthru
    _
  %p14 = scmp.eq.s32.totalorder 0, 0
  // Predicated region
  $region14: #{rnn_model_forward.9} parent=0 // pred_check
    %p15 = pneg %p14
  $region15: #{rnn_model_forward.9} parent=0 // pred_check_branch
    %17 = sbr.rel (%p15) target = $region17
  $region16: #{rnn_model_forward.9} parent=0 // pred_region
    %18 = vst [vmem:[#allocation2] sm:$0xff] 0.0
    %19 = vst [vmem:[#allocation2 + $0x8] sm:$0xff] 0.0
    %20 = vst [vmem:[#allocation2 + $0x10] sm:$0xff] 0.0
    %21 = vst [vmem:[#allocation2 + $0x18] sm:$0xff] 0.0
    %22 = vst [vmem:[#allocation2 + $0x20] sm:$0xff] 0.0
    %23 = vst [vmem:[#allocation2 + $0x28] sm:$0xff] 0.0
    %24 = vst [vmem:[#allocation2 + $0x30] sm:$0xff] 0.0
    %25 = vst [vmem:[#allocation2 + $0x38] sm:$0xff] 0.0
  $region17: #{rnn_model_forward.9} parent=0 // pred_fallthru
    _
  %v26 = vld [vmem:[#allocation2] sm:$0xff]
  %v27 = vld [vmem:[#allocation2 + $0x8] sm:$0xff]
  %v28 = vld [vmem:[#allocation2 + $0x10] sm:$0xff]
  %v29 = vld [vmem:[#allocation2 + $0x18] sm:$0xff]
  %v30 = vld [vmem:[#allocation2 + $0x20] sm:$0xff]
  %v31 = vld [vmem:[#allocation2 + $0x28] sm:$0xff]
  %v32 = vld [vmem:[#allocation2 + $0x30] sm:$0xff]
  %v33 = vld [vmem:[#allocation2 + $0x38] sm:$0xff]
  %v34 = vld [vmem:[%s0] sm:$0xff]
  %v35 = vld [vmem:[%s0 + $0x8] sm:$0xff]
  %v36 = vld [vmem:[%s0 + $0x10] sm:$0xff]
  %v37 = vld [vmem:[%s0 + $0x18] sm:$0xff]
  %v38 = vld [vmem:[%s0 + $0x20] sm:$0xff]
  %v39 = vld [vmem:[%s0 + $0x28] sm:$0xff]
  %v40 = vld [vmem:[%s0 + $0x30] sm:$0xff]
  %v41 = vld [vmem:[%s0 + $0x38] sm:$0xff]
  %v42 = vld [vmem:[%s1] sm:$0xff]
  %v43 = vld [vmem:[%s1 + $0x8] sm:$0xff]
  %v44 = vld [vmem:[%s1 + $0x10] sm:$0xff]
  %v45 = vld [vmem:[%s1 + $0x18] sm:$0xff]
  %v46 = vld [vmem:[%s1 + $0x20] sm:$0xff]
  %v47 = vld [vmem:[%s1 + $0x28] sm:$0xff]
  %v48 = vld [vmem:[%s1 + $0x30] sm:$0xff]
  %v49 = vld [vmem:[%s1 + $0x38] sm:$0xff]
  %v50 = vld [vmem:[%s1 + $0x40] sm:$0xff]
  %v51 = vld [vmem:[%s1 + $0x48] sm:$0xff]
  %v52 = vld [vmem:[%s1 + $0x50] sm:$0xff]
  %v53 = vld [vmem:[%s1 + $0x58] sm:$0xff]
  %v54 = vld [vmem:[%s1 + $0x60] sm:$0xff]
  %v55 = vld [vmem:[%s1 + $0x68] sm:$0xff]
  %v56 = vld [vmem:[%s1 + $0x70] sm:$0xff]
  %v57 = vld [vmem:[%s1 + $0x78] sm:$0xff]
  %58 = vmatpush.msra.mxu0 %v57
  %59 = vmatpush.msra.mxu0 %v56
  %60 = vmatpush.msra.mxu0 %v55
  %61 = vmatpush.msra.mxu0 %v54
  %62 = vmatpush.msra.mxu0 %v53
  %63 = vmatpush.msra.mxu0 %v52
  %64 = vmatpush.msra.mxu0 %v51
  %65 = vmatpush.msra.mxu0 %v50
  %66 = vmatpush.msra.mxu0 %v49
  %67 = vmatpush.msra.mxu0 %v48
  %68 = vmatpush.msra.mxu0 %v47
  %69 = vmatpush.msra.mxu0 %v46
  %70 = vmatpush.msra.mxu0 %v45
  %71 = vmatpush.msra.mxu0 %v44
  %72 = vmatpush.msra.mxu0 %v43
  %73 = vmatpush.msra.mxu0 %v42
  %74 = vmatmul.f32.gmra.mxu0 %v34
  %v75 = vpop.f32.mrf.mxu0
  %v76 = vadd.f32 0.0, %v75
  %77 = vmatmul.f32.gmra.mxu0 %v35
  %v78 = vpop.f32.mrf.mxu0
  %v79 = vadd.f32 0.0, %v78
  %80 = vmatmul.f32.gmra.mxu0 %v36
  %v81 = vpop.f32.mrf.mxu0
  %v82 = vadd.f32 0.0, %v81
  %83 = vmatmul.f32.gmra.mxu0 %v37
  %v84 = vpop.f32.mrf.mxu0
  %v85 = vadd.f32 0.0, %v84
  %86 = vmatmul.f32.gmra.mxu0 %v38
  %v87 = vpop.f32.mrf.mxu0
  %v88 = vadd.f32 0.0, %v87
  %89 = vmatmul.f32.gmra.mxu0 %v39
  %v90 = vpop.f32.mrf.mxu0
  %v91 = vadd.f32 0.0, %v90
  %92 = vmatmul.f32.gmra.mxu0 %v40
  %v93 = vpop.f32.mrf.mxu0
  %v94 = vadd.f32 0.0, %v93
  %95 = vmatmul.f32.gmra.mxu0 %v41
  %v96 = vpop.f32.mrf.mxu0
  %v97 = vadd.f32 0.0, %v96
  %98 = vdwg.mxu0
  %v99 = vadd.f32 %v26, %v76
  %v100 = vadd.f32 %v27, %v79
  %v101 = vadd.f32 %v28, %v82
  %v102 = vadd.f32 %v29, %v85
  %v103 = vadd.f32 %v30, %v88
  %v104 = vadd.f32 %v31, %v91
  %v105 = vadd.f32 %v32, %v94
  %v106 = vadd.f32 %v33, %v97
  %107 = vst [vmem:[#allocation2] sm:$0xff] %v99
  %108 = vst [vmem:[#allocation2 + $0x8] sm:$0xff] %v100
  %109 = vst [vmem:[#allocation2 + $0x10] sm:$0xff] %v101
  %110 = vst [vmem:[#allocation2 + $0x18] sm:$0xff] %v102
  %111 = vst [vmem:[#allocation2 + $0x20] sm:$0xff] %v103
  %112 = vst [vmem:[#allocation2 + $0x28] sm:$0xff] %v104
  %113 = vst [vmem:[#allocation2 + $0x30] sm:$0xff] %v105
  %114 = vst [vmem:[#allocation2 + $0x38] sm:$0xff] %v106
  // Predicated region
  $region18: #{rnn_model_forward.9} parent=0 // pred_check
    %p115 = pneg %p14
  $region19: #{rnn_model_forward.9} parent=0 // pred_check_branch
    %117 = sbr.rel (%p115) target = $region21
  $region20: #{rnn_model_forward.9} parent=0 // pred_region
    %v118 = vld [vmem:[#allocation2] sm:$0xff]
    %v119 = vld [vmem:[#allocation2 + $0x8] sm:$0xff]
    %v120 = vld [vmem:[#allocation2 + $0x10] sm:$0xff]
    %v121 = vld [vmem:[#allocation2 + $0x18] sm:$0xff]
    %v122 = vld [vmem:[#allocation2 + $0x20] sm:$0xff]
    %v123 = vld [vmem:[#allocation2 + $0x28] sm:$0xff]
    %v124 = vld [vmem:[#allocation2 + $0x30] sm:$0xff]
    %v125 = vld [vmem:[#allocation2 + $0x38] sm:$0xff]
    %v126 = vld [vmem:[%s2] sm:$0x1]
    %v128 = vperm.slane %v126, 0
    %v130 = vadd.f32 %v118, %v128
    %v131 = vadd.f32 %v119, %v128
    %v132 = vadd.f32 %v120, %v128
    %v133 = vadd.f32 %v121, %v128
    %v134 = vadd.f32 %v122, %v128
    %v135 = vadd.f32 %v123, %v128
    %v136 = vadd.f32 %v124, %v128
    %v137 = vadd.f32 %v125, %v128
    %138 = vst [vmem:[%s3] sm:$0xff] %v130
    %139 = vst [vmem:[%s3 + $0x8] sm:$0xff] %v131
    %140 = vst [vmem:[%s3 + $0x10] sm:$0xff] %v132
    %141 = vst [vmem:[%s3 + $0x18] sm:$0xff] %v133
    %142 = vst [vmem:[%s3 + $0x20] sm:$0xff] %v134
    %143 = vst [vmem:[%s3 + $0x28] sm:$0xff] %v135
    %144 = vst [vmem:[%s3 + $0x30] sm:$0xff] %v136
    %145 = vst [vmem:[%s3 + $0x38] sm:$0xff] %v137
  $region21: #{rnn_model_forward.9} parent=0 // pred_fallthru
    _
  // Predicated region
  $region22: #{rnn_model_forward.9} parent=0 // pred_check
    _
  $region23: #{rnn_model_forward.9} parent=0 // pred_check_branch
    %147 = sbr.rel (0) target = $region25
  $region24: #{rnn_model_forward.9} parent=0 // pred_region
    _
  $region25: #{rnn_model_forward.9} parent=0 // pred_fallthru
    _
  // Predicated region
  $region26: #{rnn_model_forward.9} parent=0 // pred_check
    _
  $region27: #{rnn_model_forward.9} parent=0 // pred_check_branch
    %149 = sbr.rel (0) target = $region29
  $region28: #{rnn_model_forward.9} parent=0 // pred_region
    _
  $region29: #{rnn_model_forward.9} parent=0 // pred_fallthru
    _

// kernel: rnn_model_forward.5
$region0: #{rnn_model_forward.5}
  #allocation0 [shape = 'u32[]', space=smem, size = 0x4, offset = 0x4, fixed_abs, tag = 'smem constant byte address 0x4 - core index']
  #allocation1 [shape = 'u32[72,128]{1,0:T(1,128)}', space=vmem, size = 0x9000, scoped, tag = 'internal scratch']
  #allocation2 [shape = 'f32[64,512]{1,0:T(8,128)}', space=vmem, size = 0x20000, scoped, tag = 'scratch operand']
  %s0 = inlined_call_operand.vmem [shape: f32[64,32], index: 0, kind: input, shape index: {}]
  %s1 = inlined_call_operand.vmem [shape: f32[32,512], index: 1, kind: input, shape index: {}]
  %s2 = inlined_call_operand.vmem [shape: f32[1,512], index: 2, kind: input, shape index: {}]
  %s3 = inlined_call_operand.vmem [shape: f32[64,512], index: 3, kind: output, shape index: {}]
  %s4 = sld [smem:[#allocation0]]
  $region30: #{rnn_model_forward.5} parent=0
    _
  %s6 = ssub.s32 1, %s4
  %s7 = scalar_select 0, %s6, %s4
  // Predicated region
  $region2: #{rnn_model_forward.5} parent=0 // pred_check
    _
  $region3: #{rnn_model_forward.5} parent=0 // pred_check_branch
    %9 = sbr.rel (0) target = $region5
  $region4: #{rnn_model_forward.5} parent=0 // pred_region
    _
  $region5: #{rnn_model_forward.5} parent=0 // pred_fallthru
    _
  // Predicated region
  $region6: #{rnn_model_forward.5} parent=0 // pred_check
    _
  $region7: #{rnn_model_forward.5} parent=0 // pred_check_branch
    %11 = sbr.rel (0) target = $region9
  $region8: #{rnn_model_forward.5} parent=0 // pred_region
    _
  $region9: #{rnn_model_forward.5} parent=0 // pred_fallthru
    _
  // Predicated region
  $region10: #{rnn_model_forward.5} parent=0 // pred_check
    _
  $region11: #{rnn_model_forward.5} parent=0 // pred_check_branch
    %13 = sbr.rel (0) target = $region13
  $region12: #{rnn_model_forward.5} parent=0 // pred_region
    _
  $region13: #{rnn_model_forward.5} parent=0 // pred_fallthru
    _
  %p14 = scmp.eq.s32.totalorder 0, 0
  // Predicated region
  $region14: #{rnn_model_forward.5} parent=0 // pred_check
    %p15 = pneg %p14
  $region15: #{rnn_model_forward.5} parent=0 // pred_check_branch
    %17 = sbr.rel (%p15) target = $region17
  $region16: #{rnn_model_forward.5} parent=0 // pred_region
    %18 = vst [vmem:[#allocation2] sm:$0xff] 0.0
    %19 = vst [vmem:[#allocation2 + $0x8] sm:$0xff] 0.0
    %20 = vst [vmem:[#allocation2 + $0x10] sm:$0xff] 0.0
    %21 = vst [vmem:[#allocation2 + $0x18] sm:$0xff] 0.0
    %22 = vst [vmem:[#allocation2 + $0x20] sm:$0xff] 0.0
    %23 = vst [vmem:[#allocation2 + $0x28] sm:$0xff] 0.0
    %24 = vst [vmem:[#allocation2 + $0x30] sm:$0xff] 0.0
    %25 = vst [vmem:[#allocation2 + $0x38] sm:$0xff] 0.0
    %26 = vst [vmem:[#allocation2 + $0x40] sm:$0xff] 0.0
    %27 = vst [vmem:[#allocation2 + $0x48] sm:$0xff] 0.0
    %28 = vst [vmem:[#allocation2 + $0x50] sm:$0xff] 0.0
    %29 = vst [vmem:[#allocation2 + $0x58] sm:$0xff] 0.0
    %30 = vst [vmem:[#allocation2 + $0x60] sm:$0xff] 0.0
    %31 = vst [vmem:[#allocation2 + $0x68] sm:$0xff] 0.0
    %32 = vst [vmem:[#allocation2 + $0x70] sm:$0xff] 0.0
    %33 = vst [vmem:[#allocation2 + $0x78] sm:$0xff] 0.0
    %34 = vst [vmem:[#allocation2 + $0x80] sm:$0xff] 0.0
    %35 = vst [vmem:[#allocation2 + $0x88] sm:$0xff] 0.0
    %36 = vst [vmem:[#allocation2 + $0x90] sm:$0xff] 0.0
    %37 = vst [vmem:[#allocation2 + $0x98] sm:$0xff] 0.0
    %38 = vst [vmem:[#allocation2 + $0xa0] sm:$0xff] 0.0
    %39 = vst [vmem:[#allocation2 + $0xa8] sm:$0xff] 0.0
    %40 = vst [vmem:[#allocation2 + $0xb0] sm:$0xff] 0.0
    %41 = vst [vmem:[#allocation2 + $0xb8] sm:$0xff] 0.0
    %42 = vst [vmem:[#allocation2 + $0xc0] sm:$0xff] 0.0
    %43 = vst [vmem:[#allocation2 + $0xc8] sm:$0xff] 0.0
    %44 = vst [vmem:[#allocation2 + $0xd0] sm:$0xff] 0.0
    %45 = vst [vmem:[#allocation2 + $0xd8] sm:$0xff] 0.0
    %46 = vst [vmem:[#allocation2 + $0xe0] sm:$0xff] 0.0
    %47 = vst [vmem:[#allocation2 + $0xe8] sm:$0xff] 0.0
    %48 = vst [vmem:[#allocation2 + $0xf0] sm:$0xff] 0.0
    %49 = vst [vmem:[#allocation2 + $0xf8] sm:$0xff] 0.0
  $region17: #{rnn_model_forward.5} parent=0 // pred_fallthru
    _
  %v50 = vld [vmem:[#allocation2] sm:$0xff]
  %v51 = vld [vmem:[#allocation2 + $0x8] sm:$0xff]
  %v52 = vld [vmem:[#allocation2 + $0x10] sm:$0xff]
  %v53 = vld [vmem:[#allocation2 + $0x18] sm:$0xff]
  %v54 = vld [vmem:[#allocation2 + $0x20] sm:$0xff]
  %v55 = vld [vmem:[#allocation2 + $0x28] sm:$0xff]
  %v56 = vld [vmem:[#allocation2 + $0x30] sm:$0xff]
  %v57 = vld [vmem:[#allocation2 + $0x38] sm:$0xff]
  %v58 = vld [vmem:[#allocation2 + $0x40] sm:$0xff]
  %v59 = vld [vmem:[#allocation2 + $0x48] sm:$0xff]
  %v60 = vld [vmem:[#allocation2 + $0x50] sm:$0xff]
  %v61 = vld [vmem:[#allocation2 + $0x58] sm:$0xff]
  %v62 = vld [vmem:[#allocation2 + $0x60] sm:$0xff]
  %v63 = vld [vmem:[#allocation2 + $0x68] sm:$0xff]
  %v64 = vld [vmem:[#allocation2 + $0x70] sm:$0xff]
  %v65 = vld [vmem:[#allocation2 + $0x78] sm:$0xff]
  %v66 = vld [vmem:[#allocation2 + $0x80] sm:$0xff]
  %v67 = vld [vmem:[#allocation2 + $0x88] sm:$0xff]
  %v68 = vld [vmem:[#allocation2 + $0x90] sm:$0xff]
  %v69 = vld [vmem:[#allocation2 + $0x98] sm:$0xff]
  %v70 = vld [vmem:[#allocation2 + $0xa0] sm:$0xff]
  %v71 = vld [vmem:[#allocation2 + $0xa8] sm:$0xff]
  %v72 = vld [vmem:[#allocation2 + $0xb0] sm:$0xff]
  %v73 = vld [vmem:[#allocation2 + $0xb8] sm:$0xff]
  %v74 = vld [vmem:[#allocation2 + $0xc0] sm:$0xff]
  %v75 = vld [vmem:[#allocation2 + $0xc8] sm:$0xff]
  %v76 = vld [vmem:[#allocation2 + $0xd0] sm:$0xff]
  %v77 = vld [vmem:[#allocation2 + $0xd8] sm:$0xff]
  %v78 = vld [vmem:[#allocation2 + $0xe0] sm:$0xff]
  %v79 = vld [vmem:[#allocation2 + $0xe8] sm:$0xff]
  %v80 = vld [vmem:[#allocation2 + $0xf0] sm:$0xff]
  %v81 = vld [vmem:[#allocation2 + $0xf8] sm:$0xff]
  %v82 = vld [vmem:[%s0] sm:$0xff]
  %v83 = vld [vmem:[%s0 + $0x8] sm:$0xff]
  %v84 = vld [vmem:[%s0 + $0x10] sm:$0xff]
  %v85 = vld [vmem:[%s0 + $0x18] sm:$0xff]
  %v86 = vld [vmem:[%s0 + $0x20] sm:$0xff]
  %v87 = vld [vmem:[%s0 + $0x28] sm:$0xff]
  %v88 = vld [vmem:[%s0 + $0x30] sm:$0xff]
  %v89 = vld [vmem:[%s0 + $0x38] sm:$0xff]
  %v90 = vld [vmem:[%s1] sm:$0xff]
  %v91 = vld [vmem:[%s1 + $0x8] sm:$0xff]
  %v92 = vld [vmem:[%s1 + $0x10] sm:$0xff]
  %v93 = vld [vmem:[%s1 + $0x18] sm:$0xff]
  %v94 = vld [vmem:[%s1 + $0x20] sm:$0xff]
  %v95 = vld [vmem:[%s1 + $0x28] sm:$0xff]
  %v96 = vld [vmem:[%s1 + $0x30] sm:$0xff]
  %v97 = vld [vmem:[%s1 + $0x38] sm:$0xff]
  %v98 = vld [vmem:[%s1 + $0x40] sm:$0xff]
  %v99 = vld [vmem:[%s1 + $0x48] sm:$0xff]
  %v100 = vld [vmem:[%s1 + $0x50] sm:$0xff]
  %v101 = vld [vmem:[%s1 + $0x58] sm:$0xff]
  %v102 = vld [vmem:[%s1 + $0x60] sm:$0xff]
  %v103 = vld [vmem:[%s1 + $0x68] sm:$0xff]
  %v104 = vld [vmem:[%s1 + $0x70] sm:$0xff]
  %v105 = vld [vmem:[%s1 + $0x78] sm:$0xff]
  %vm106 = vcmask 261120
  %v108 = vsel %vm106, %v82, 0
  %v111 = vsel %vm106, %v83, 0
  %v114 = vsel %vm106, %v84, 0
  %v117 = vsel %vm106, %v85, 0
  %v120 = vsel %vm106, %v86, 0
  %v123 = vsel %vm106, %v87, 0
  %v126 = vsel %vm106, %v88, 0
  %v129 = vsel %vm106, %v89, 0
  %131 = vmatpush.msra.mxu0 0.0
  %132 = vmatpush.msra.mxu0 0.0
  %133 = vmatpush.msra.mxu0 0.0
  %134 = vmatpush.msra.mxu0 0.0
  %135 = vmatpush.msra.mxu0 0.0
  %136 = vmatpush.msra.mxu0 0.0
  %137 = vmatpush.msra.mxu0 0.0
  %138 = vmatpush.msra.mxu0 0.0
  %139 = vmatpush.msra.mxu0 0.0
  %140 = vmatpush.msra.mxu0 0.0
  %141 = vmatpush.msra.mxu0 0.0
  %142 = vmatpush.msra.mxu0 0.0
  %143 = vmatpush.msra.mxu0 %v102
  %144 = vmatpush.msra.mxu0 %v98
  %145 = vmatpush.msra.mxu0 %v94
  %146 = vmatpush.msra.mxu0 %v90
  %147 = vmatmul.f32.gmra.mxu0 %v108
  %v148 = vpop.f32.mrf.mxu0
  %v149 = vadd.f32 0.0, %v148
  %150 = vmatmul.f32.gmra.mxu0 %v111
  %v151 = vpop.f32.mrf.mxu0
  %v152 = vadd.f32 0.0, %v151
  %153 = vmatmul.f32.gmra.mxu0 %v114
  %v154 = vpop.f32.mrf.mxu0
  %v155 = vadd.f32 0.0, %v154
  %156 = vmatmul.f32.gmra.mxu0 %v117
  %v157 = vpop.f32.mrf.mxu0
  %v158 = vadd.f32 0.0, %v157
  %159 = vmatmul.f32.gmra.mxu0 %v120
  %v160 = vpop.f32.mrf.mxu0
  %v161 = vadd.f32 0.0, %v160
  %162 = vmatmul.f32.gmra.mxu0 %v123
  %v163 = vpop.f32.mrf.mxu0
  %v164 = vadd.f32 0.0, %v163
  %165 = vmatmul.f32.gmra.mxu0 %v126
  %v166 = vpop.f32.mrf.mxu0
  %v167 = vadd.f32 0.0, %v166
  %168 = vmatmul.f32.gmra.mxu0 %v129
  %v169 = vpop.f32.mrf.mxu0
  %v170 = vadd.f32 0.0, %v169
  %171 = vdwg.mxu0
  %172 = vmatpush.msra.mxu0 0.0
  %173 = vmatpush.msra.mxu0 0.0
  %174 = vmatpush.msra.mxu0 0.0
  %175 = vmatpush.msra.mxu0 0.0
  %176 = vmatpush.msra.mxu0 0.0
  %177 = vmatpush.msra.mxu0 0.0
  %178 = vmatpush.msra.mxu0 0.0
  %179 = vmatpush.msra.mxu0 0.0
  %180 = vmatpush.msra.mxu0 0.0
  %181 = vmatpush.msra.mxu0 0.0
  %182 = vmatpush.msra.mxu0 0.0
  %183 = vmatpush.msra.mxu0 0.0
  %184 = vmatpush.msra.mxu0 %v103
  %185 = vmatpush.msra.mxu0 %v99
  %186 = vmatpush.msra.mxu0 %v95
  %187 = vmatpush.msra.mxu0 %v91
  %188 = vmatmul.f32.gmra.mxu0 %v108
  %v189 = vpop.f32.mrf.mxu0
  %v190 = vadd.f32 0.0, %v189
  %191 = vmatmul.f32.gmra.mxu0 %v111
  %v192 = vpop.f32.mrf.mxu0
  %v193 = vadd.f32 0.0, %v192
  %194 = vmatmul.f32.gmra.mxu0 %v114
  %v195 = vpop.f32.mrf.mxu0
  %v196 = vadd.f32 0.0, %v195
  %197 = vmatmul.f32.gmra.mxu0 %v117
  %v198 = vpop.f32.mrf.mxu0
  %v199 = vadd.f32 0.0, %v198
  %200 = vmatmul.f32.gmra.mxu0 %v120
  %v201 = vpop.f32.mrf.mxu0
  %v202 = vadd.f32 0.0, %v201
  %203 = vmatmul.f32.gmra.mxu0 %v123
  %v204 = vpop.f32.mrf.mxu0
  %v205 = vadd.f32 0.0, %v204
  %206 = vmatmul.f32.gmra.mxu0 %v126
  %v207 = vpop.f32.mrf.mxu0
  %v208 = vadd.f32 0.0, %v207
  %209 = vmatmul.f32.gmra.mxu0 %v129
  %v210 = vpop.f32.mrf.mxu0
  %v211 = vadd.f32 0.0, %v210
  %212 = vdwg.mxu0
  %213 = vmatpush.msra.mxu0 0.0
  %214 = vmatpush.msra.mxu0 0.0
  %215 = vmatpush.msra.mxu0 0.0
  %216 = vmatpush.msra.mxu0 0.0
  %217 = vmatpush.msra.mxu0 0.0
  %218 = vmatpush.msra.mxu0 0.0
  %219 = vmatpush.msra.mxu0 0.0
  %220 = vmatpush.msra.mxu0 0.0
  %221 = vmatpush.msra.mxu0 0.0
  %222 = vmatpush.msra.mxu0 0.0
  %223 = vmatpush.msra.mxu0 0.0
  %224 = vmatpush.msra.mxu0 0.0
  %225 = vmatpush.msra.mxu0 %v104
  %226 = vmatpush.msra.mxu0 %v100
  %227 = vmatpush.msra.mxu0 %v96
  %228 = vmatpush.msra.mxu0 %v92
  %229 = vmatmul.f32.gmra.mxu0 %v108
  %v230 = vpop.f32.mrf.mxu0
  %v231 = vadd.f32 0.0, %v230
  %232 = vmatmul.f32.gmra.mxu0 %v111
  %v233 = vpop.f32.mrf.mxu0
  %v234 = vadd.f32 0.0, %v233
  %235 = vmatmul.f32.gmra.mxu0 %v114
  %v236 = vpop.f32.mrf.mxu0
  %v237 = vadd.f32 0.0, %v236
  %238 = vmatmul.f32.gmra.mxu0 %v117
  %v239 = vpop.f32.mrf.mxu0
  %v240 = vadd.f32 0.0, %v239
  %241 = vmatmul.f32.gmra.mxu0 %v120
  %v242 = vpop.f32.mrf.mxu0
  %v243 = vadd.f32 0.0, %v242
  %244 = vmatmul.f32.gmra.mxu0 %v123
  %v245 = vpop.f32.mrf.mxu0
  %v246 = vadd.f32 0.0, %v245
  %247 = vmatmul.f32.gmra.mxu0 %v126
  %v248 = vpop.f32.mrf.mxu0
  %v249 = vadd.f32 0.0, %v248
  %250 = vmatmul.f32.gmra.mxu0 %v129
  %v251 = vpop.f32.mrf.mxu0
  %v252 = vadd.f32 0.0, %v251
  %253 = vdwg.mxu0
  %254 = vmatpush.msra.mxu0 0.0
  %255 = vmatpush.msra.mxu0 0.0
  %256 = vmatpush.msra.mxu0 0.0
  %257 = vmatpush.msra.mxu0 0.0
  %258 = vmatpush.msra.mxu0 0.0
  %259 = vmatpush.msra.mxu0 0.0
  %260 = vmatpush.msra.mxu0 0.0
  %261 = vmatpush.msra.mxu0 0.0
  %262 = vmatpush.msra.mxu0 0.0
  %263 = vmatpush.msra.mxu0 0.0
  %264 = vmatpush.msra.mxu0 0.0
  %265 = vmatpush.msra.mxu0 0.0
  %266 = vmatpush.msra.mxu0 %v105
  %267 = vmatpush.msra.mxu0 %v101
  %268 = vmatpush.msra.mxu0 %v97
  %269 = vmatpush.msra.mxu0 %v93
  %270 = vmatmul.f32.gmra.mxu0 %v108
  %v271 = vpop.f32.mrf.mxu0
  %v272 = vadd.f32 0.0, %v271
  %273 = vmatmul.f32.gmra.mxu0 %v111
  %v274 = vpop.f32.mrf.mxu0
  %v275 = vadd.f32 0.0, %v274
  %276 = vmatmul.f32.gmra.mxu0 %v114
  %v277 = vpop.f32.mrf.mxu0
  %v278 = vadd.f32 0.0, %v277
  %279 = vmatmul.f32.gmra.mxu0 %v117
  %v280 = vpop.f32.mrf.mxu0
  %v281 = vadd.f32 0.0, %v280
  %282 = vmatmul.f32.gmra.mxu0 %v120
  %v283 = vpop.f32.mrf.mxu0
  %v284 = vadd.f32 0.0, %v283
  %285 = vmatmul.f32.gmra.mxu0 %v123
  %v286 = vpop.f32.mrf.mxu0
  %v287 = vadd.f32 0.0, %v286
  %288 = vmatmul.f32.gmra.mxu0 %v126
  %v289 = vpop.f32.mrf.mxu0
  %v290 = vadd.f32 0.0, %v289
  %291 = vmatmul.f32.gmra.mxu0 %v129
  %v292 = vpop.f32.mrf.mxu0
  %v293 = vadd.f32 0.0, %v292
  %294 = vdwg.mxu0
  %v295 = vadd.f32 %v50, %v149
  %v296 = vadd.f32 %v51, %v190
  %v297 = vadd.f32 %v52, %v231
  %v298 = vadd.f32 %v53, %v272
  %v299 = vadd.f32 %v54, %v152
  %v300 = vadd.f32 %v55, %v193
  %v301 = vadd.f32 %v56, %v234
  %v302 = vadd.f32 %v57, %v275
  %v303 = vadd.f32 %v58, %v155
  %v304 = vadd.f32 %v59, %v196
  %v305 = vadd.f32 %v60, %v237
  %v306 = vadd.f32 %v61, %v278
  %v307 = vadd.f32 %v62, %v158
  %v308 = vadd.f32 %v63, %v199
  %v309 = vadd.f32 %v64, %v240
  %v310 = vadd.f32 %v65, %v281
  %v311 = vadd.f32 %v66, %v161
  %v312 = vadd.f32 %v67, %v202
  %v313 = vadd.f32 %v68, %v243
  %v314 = vadd.f32 %v69, %v284
  %v315 = vadd.f32 %v70, %v164
  %v316 = vadd.f32 %v71, %v205
  %v317 = vadd.f32 %v72, %v246
  %v318 = vadd.f32 %v73, %v287
  %v319 = vadd.f32 %v74, %v167
  %v320 = vadd.f32 %v75, %v208
  %v321 = vadd.f32 %v76, %v249
  %v322 = vadd.f32 %v77, %v290
  %v323 = vadd.f32 %v78, %v170
  %v324 = vadd.f32 %v79, %v211
  %v325 = vadd.f32 %v80, %v252
  %v326 = vadd.f32 %v81, %v293
  %327 = vst [vmem:[#allocation2] sm:$0xff] %v295
  %328 = vst [vmem:[#allocation2 + $0x8] sm:$0xff] %v296
  %329 = vst [vmem:[#allocation2 + $0x10] sm:$0xff] %v297
  %330 = vst [vmem:[#allocation2 + $0x18] sm:$0xff] %v298
  %331 = vst [vmem:[#allocation2 + $0x20] sm:$0xff] %v299
  %332 = vst [vmem:[#allocation2 + $0x28] sm:$0xff] %v300
  %333 = vst [vmem:[#allocation2 + $0x30] sm:$0xff] %v301
  %334 = vst [vmem:[#allocation2 + $0x38] sm:$0xff] %v302
  %335 = vst [vmem:[#allocation2 + $0x40] sm:$0xff] %v303
  %336 = vst [vmem:[#allocation2 + $0x48] sm:$0xff] %v304
  %337 = vst [vmem:[#allocation2 + $0x50] sm:$0xff] %v305
  %338 = vst [vmem:[#allocation2 + $0x58] sm:$0xff] %v306
  %339 = vst [vmem:[#allocation2 + $0x60] sm:$0xff] %v307
  %340 = vst [vmem:[#allocation2 + $0x68] sm:$0xff] %v308
  %341 = vst [vmem:[#allocation2 + $0x70] sm:$0xff] %v309
  %342 = vst [vmem:[#allocation2 + $0x78] sm:$0xff] %v310
  %343 = vst [vmem:[#allocation2 + $0x80] sm:$0xff] %v311
  %344 = vst [vmem:[#allocation2 + $0x88] sm:$0xff] %v312
  %345 = vst [vmem:[#allocation2 + $0x90] sm:$0xff] %v313
  %346 = vst [vmem:[#allocation2 + $0x98] sm:$0xff] %v314
  %347 = vst [vmem:[#allocation2 + $0xa0] sm:$0xff] %v315
  %348 = vst [vmem:[#allocation2 + $0xa8] sm:$0xff] %v316
  %349 = vst [vmem:[#allocation2 + $0xb0] sm:$0xff] %v317
  %350 = vst [vmem:[#allocation2 + $0xb8] sm:$0xff] %v318
  %351 = vst [vmem:[#allocation2 + $0xc0] sm:$0xff] %v319
  %352 = vst [vmem:[#allocation2 + $0xc8] sm:$0xff] %v320
  %353 = vst [vmem:[#allocation2 + $0xd0] sm:$0xff] %v321
  %354 = vst [vmem:[#allocation2 + $0xd8] sm:$0xff] %v322
  %355 = vst [vmem:[#allocation2 + $0xe0] sm:$0xff] %v323
  %356 = vst [vmem:[#allocation2 + $0xe8] sm:$0xff] %v324
  %357 = vst [vmem:[#allocation2 + $0xf0] sm:$0xff] %v325
  %358 = vst [vmem:[#allocation2 + $0xf8] sm:$0xff] %v326
  // Predicated region
  $region18: #{rnn_model_forward.5} parent=0 // pred_check
    %p359 = pneg %p14
  $region19: #{rnn_model_forward.5} parent=0 // pred_check_branch
    %361 = sbr.rel (%p359) target = $region21
  $region20: #{rnn_model_forward.5} parent=0 // pred_region
    %v362 = vld [vmem:[#allocation2] sm:$0xff]
    %v363 = vld [vmem:[#allocation2 + $0x8] sm:$0xff]
    %v364 = vld [vmem:[#allocation2 + $0x10] sm:$0xff]
    %v365 = vld [vmem:[#allocation2 + $0x18] sm:$0xff]
    %v366 = vld [vmem:[#allocation2 + $0x20] sm:$0xff]
    %v367 = vld [vmem:[#allocation2 + $0x28] sm:$0xff]
    %v368 = vld [vmem:[#allocation2 + $0x30] sm:$0xff]
    %v369 = vld [vmem:[#allocation2 + $0x38] sm:$0xff]
    %v370 = vld [vmem:[#allocation2 + $0x40] sm:$0xff]
    %v371 = vld [vmem:[#allocation2 + $0x48] sm:$0xff]
    %v372 = vld [vmem:[#allocation2 + $0x50] sm:$0xff]
    %v373 = vld [vmem:[#allocation2 + $0x58] sm:$0xff]
    %v374 = vld [vmem:[#allocation2 + $0x60] sm:$0xff]
    %v375 = vld [vmem:[#allocation2 + $0x68] sm:$0xff]
    %v376 = vld [vmem:[#allocation2 + $0x70] sm:$0xff]
    %v377 = vld [vmem:[#allocation2 + $0x78] sm:$0xff]
    %v378 = vld [vmem:[#allocation2 + $0x80] sm:$0xff]
    %v379 = vld [vmem:[#allocation2 + $0x88] sm:$0xff]
    %v380 = vld [vmem:[#allocation2 + $0x90] sm:$0xff]
    %v381 = vld [vmem:[#allocation2 + $0x98] sm:$0xff]
    %v382 = vld [vmem:[#allocation2 + $0xa0] sm:$0xff]
    %v383 = vld [vmem:[#allocation2 + $0xa8] sm:$0xff]
    %v384 = vld [vmem:[#allocation2 + $0xb0] sm:$0xff]
    %v385 = vld [vmem:[#allocation2 + $0xb8] sm:$0xff]
    %v386 = vld [vmem:[#allocation2 + $0xc0] sm:$0xff]
    %v387 = vld [vmem:[#allocation2 + $0xc8] sm:$0xff]
    %v388 = vld [vmem:[#allocation2 + $0xd0] sm:$0xff]
    %v389 = vld [vmem:[#allocation2 + $0xd8] sm:$0xff]
    %v390 = vld [vmem:[#allocation2 + $0xe0] sm:$0xff]
    %v391 = vld [vmem:[#allocation2 + $0xe8] sm:$0xff]
    %v392 = vld [vmem:[#allocation2 + $0xf0] sm:$0xff]
    %v393 = vld [vmem:[#allocation2 + $0xf8] sm:$0xff]
    %v394 = vld [vmem:[%s2] sm:$0xf]
    %v396 = vperm.slane %v394, 0
    %v397 = vperm.slane %v394, 1
    %v398 = vperm.slane %v394, 2
    %v399 = vperm.slane %v394, 3
    %v404 = vadd.f32 %v362, %v396
    %v405 = vadd.f32 %v363, %v397
    %v406 = vadd.f32 %v364, %v398
    %v407 = vadd.f32 %v365, %v399
    %v408 = vadd.f32 %v366, %v396
    %v409 = vadd.f32 %v367, %v397
    %v410 = vadd.f32 %v368, %v398
    %v411 = vadd.f32 %v369, %v399
    %v412 = vadd.f32 %v370, %v396
    %v413 = vadd.f32 %v371, %v397
    %v414 = vadd.f32 %v372, %v398
    %v415 = vadd.f32 %v373, %v399
    %v416 = vadd.f32 %v374, %v396
    %v417 = vadd.f32 %v375, %v397
    %v418 = vadd.f32 %v376, %v398
    %v419 = vadd.f32 %v377, %v399
    %v420 = vadd.f32 %v378, %v396
    %v421 = vadd.f32 %v379, %v397
    %v422 = vadd.f32 %v380, %v398
    %v423 = vadd.f32 %v381, %v399
    %v424 = vadd.f32 %v382, %v396
    %v425 = vadd.f32 %v383, %v397
    %v426 = vadd.f32 %v384, %v398
    %v427 = vadd.f32 %v385, %v399
    %v428 = vadd.f32 %v386, %v396
    %v429 = vadd.f32 %v387, %v397
    %v430 = vadd.f32 %v388, %v398
    %v431 = vadd.f32 %v389, %v399
    %v432 = vadd.f32 %v390, %v396
    %v433 = vadd.f32 %v391, %v397
    %v434 = vadd.f32 %v392, %v398
    %v435 = vadd.f32 %v393, %v399
    %436 = vst [vmem:[%s3] sm:$0xff] %v404
    %437 = vst [vmem:[%s3 + $0x8] sm:$0xff] %v405
    %438 = vst [vmem:[%s3 + $0x10] sm:$0xff] %v406
    %439 = vst [vmem:[%s3 + $0x18] sm:$0xff] %v407
    %440 = vst [vmem:[%s3 + $0x20] sm:$0xff] %v408
    %441 = vst [vmem:[%s3 + $0x28] sm:$0xff] %v409
    %442 = vst [vmem:[%s3 + $0x30] sm:$0xff] %v410
    %443 = vst [vmem:[%s3 + $0x38] sm:$0xff] %v411
    %444 = vst [vmem:[%s3 + $0x40] sm:$0xff] %v412
    %445 = vst [vmem:[%s3 + $0x48] sm:$0xff] %v413
    %446 = vst [vmem:[%s3 + $0x50] sm:$0xff] %v414
    %447 = vst [vmem:[%s3 + $0x58] sm:$0xff] %v415
    %448 = vst [vmem:[%s3 + $0x60] sm:$0xff] %v416
    %449 = vst [vmem:[%s3 + $0x68] sm:$0xff] %v417
    %450 = vst [vmem:[%s3 + $0x70] sm:$0xff] %v418
    %451 = vst [vmem:[%s3 + $0x78] sm:$0xff] %v419
    %452 = vst [vmem:[%s3 + $0x80] sm:$0xff] %v420
    %453 = vst [vmem:[%s3 + $0x88] sm:$0xff] %v421
    %454 = vst [vmem:[%s3 + $0x90] sm:$0xff] %v422
    %455 = vst [vmem:[%s3 + $0x98] sm:$0xff] %v423
    %456 = vst [vmem:[%s3 + $0xa0] sm:$0xff] %v424
    %457 = vst [vmem:[%s3 + $0xa8] sm:$0xff] %v425
    %458 = vst [vmem:[%s3 + $0xb0] sm:$0xff] %v426
    %459 = vst [vmem:[%s3 + $0xb8] sm:$0xff] %v427
    %460 = vst [vmem:[%s3 + $0xc0] sm:$0xff] %v428
    %461 = vst [vmem:[%s3 + $0xc8] sm:$0xff] %v429
    %462 = vst [vmem:[%s3 + $0xd0] sm:$0xff] %v430
    %463 = vst [vmem:[%s3 + $0xd8] sm:$0xff] %v431
    %464 = vst [vmem:[%s3 + $0xe0] sm:$0xff] %v432
    %465 = vst [vmem:[%s3 + $0xe8] sm:$0xff] %v433
    %466 = vst [vmem:[%s3 + $0xf0] sm:$0xff] %v434
    %467 = vst [vmem:[%s3 + $0xf8] sm:$0xff] %v435
  $region21: #{rnn_model_forward.5} parent=0 // pred_fallthru
    _
  // Predicated region
  $region22: #{rnn_model_forward.5} parent=0 // pred_check
    _
  $region23: #{rnn_model_forward.5} parent=0 // pred_check_branch
    %469 = sbr.rel (0) target = $region25
  $region24: #{rnn_model_forward.5} parent=0 // pred_region
    _
  $region25: #{rnn_model_forward.5} parent=0 // pred_fallthru
    _
  // Predicated region
  $region26: #{rnn_model_forward.5} parent=0 // pred_check
    _
  $region27: #{rnn_model_forward.5} parent=0 // pred_check_branch
    %471 = sbr.rel (0) target = $region29
  $region28: #{rnn_model_forward.5} parent=0 // pred_region
    _
  $region29: #{rnn_model_forward.5} parent=0 // pred_fallthru
    _

// kernel: rnn_model_forward.7
$region0: #{rnn_model_forward.7}
  #allocation0 [shape = 'u32[]', space=smem, size = 0x4, offset = 0x4, fixed_abs, tag = 'smem constant byte address 0x4 - core index']
  #allocation1 [shape = 'u32[72,128]{1,0:T(1,128)}', space=vmem, size = 0x9000, scoped, tag = 'internal scratch']
  #allocation2 [shape = 'f32[64,512]{1,0:T(8,128)}', space=vmem, size = 0x20000, scoped, tag = 'scratch operand']
  %s0 = inlined_call_operand.vmem [shape: f32[64,128], index: 0, kind: input, shape index: {}]
  %s1 = inlined_call_operand.hbm [shape: f32[128,512], index: 1, kind: input, shape index: {}]
  %s2 = inlined_call_operand.vmem [shape: f32[1,512], index: 2, kind: input, shape index: {}]
  %s3 = inlined_call_operand.vmem [shape: f32[64,512], index: 3, kind: output, shape index: {}]
  %s4 = sld [smem:[#allocation0]]
  $region34: #{rnn_model_forward.7} parent=0
    _
  %s6 = ssub.s32 1, %s4
  %s7 = scalar_select 0, %s6, %s4
  $region1: #{rnn_model_forward.7} parent=0
    #allocation3 [shape = 'u8[262144]{0}', space=vmem, size = 0x40000, scoped, tag = 'input window, operand 1, single buffered']
    #allocation4 [shape = 's32[1]{0}', space=sflag, size = 0x4, scoped, tag = 'scoped memory for rnn_model_forward.7']
    %8 = vsyncpa [#allocation4], 0
    // Predicated region
    $region2: #{rnn_model_forward.7} parent=1 // pred_check
      _
    $region3: #{rnn_model_forward.7} parent=1 // pred_check_branch
      %10 = sbr.rel (0) target = $region5
    $region4: #{rnn_model_forward.7} parent=1 // pred_region
      _
    $region5: #{rnn_model_forward.7} parent=1 // pred_fallthru
      _
    // Predicated region
    $region6: #{rnn_model_forward.7} parent=1 // pred_check
      _
    $region7: #{rnn_model_forward.7} parent=1 // pred_check_branch
      %12 = sbr.rel (0) target = $region9
    $region8: #{rnn_model_forward.7} parent=1 // pred_region
      %14 = vsyncadd [#allocation4], 0
      %s15 = sshll.u32 %s1, 4
      %s16 = int_to_ptr.hbm [resolvable:$true] %s15
      %s17 = sshll.u32 [#allocation3], 4
      %s18 = int_to_ptr.vmem [resolvable:$true] %s17
      %23 = dma.hbm_to_vmem [thread:$0]  %s16, 8192, %s18, [#allocation4], 512, 512, 32
    $region9: #{rnn_model_forward.7} parent=1 // pred_fallthru
      _
    // Predicated region
    $region10: #{rnn_model_forward.7} parent=1 // pred_check
      _
    $region11: #{rnn_model_forward.7} parent=1 // pred_check_branch
      %25 = sbr.rel (0) target = $region13
    $region12: #{rnn_model_forward.7} parent=1 // pred_region
      _
    $region13: #{rnn_model_forward.7} parent=1 // pred_fallthru
      _
    // Predicated region
    $region14: #{rnn_model_forward.7} parent=1 // pred_check
      _
    $region15: #{rnn_model_forward.7} parent=1 // pred_check_branch
      %27 = sbr.rel (0) target = $region17
    $region16: #{rnn_model_forward.7} parent=1 // pred_region
      %29 = dma.done [#allocation4], 8192
    $region17: #{rnn_model_forward.7} parent=1 // pred_fallthru
      _
    %p30 = scmp.eq.s32.totalorder 0, 0
    // Predicated region
    $region18: #{rnn_model_forward.7} parent=1 // pred_check
      %p31 = pneg %p30
    $region19: #{rnn_model_forward.7} parent=1 // pred_check_branch
      %33 = sbr.rel (%p31) target = $region21
    $region20: #{rnn_model_forward.7} parent=1 // pred_region
      %34 = vst [vmem:[#allocation2] sm:$0xff] 0.0
      %35 = vst [vmem:[#allocation2 + $0x8] sm:$0xff] 0.0
      %36 = vst [vmem:[#allocation2 + $0x10] sm:$0xff] 0.0
      %37 = vst [vmem:[#allocation2 + $0x18] sm:$0xff] 0.0
      %38 = vst [vmem:[#allocation2 + $0x20] sm:$0xff] 0.0
      %39 = vst [vmem:[#allocation2 + $0x28] sm:$0xff] 0.0
      %40 = vst [vmem:[#allocation2 + $0x30] sm:$0xff] 0.0
      %41 = vst [vmem:[#allocation2 + $0x38] sm:$0xff] 0.0
      %42 = vst [vmem:[#allocation2 + $0x40] sm:$0xff] 0.0
      %43 = vst [vmem:[#allocation2 + $0x48] sm:$0xff] 0.0
      %44 = vst [vmem:[#allocation2 + $0x50] sm:$0xff] 0.0
      %45 = vst [vmem:[#allocation2 + $0x58] sm:$0xff] 0.0
      %46 = vst [vmem:[#allocation2 + $0x60] sm:$0xff] 0.0
      %47 = vst [vmem:[#allocation2 + $0x68] sm:$0xff] 0.0
      %48 = vst [vmem:[#allocation2 + $0x70] sm:$0xff] 0.0
      %49 = vst [vmem:[#allocation2 + $0x78] sm:$0xff] 0.0
      %50 = vst [vmem:[#allocation2 + $0x80] sm:$0xff] 0.0
      %51 = vst [vmem:[#allocation2 + $0x88] sm:$0xff] 0.0
      %52 = vst [vmem:[#allocation2 + $0x90] sm:$0xff] 0.0
      %53 = vst [vmem:[#allocation2 + $0x98] sm:$0xff] 0.0
      %54 = vst [vmem:[#allocation2 + $0xa0] sm:$0xff] 0.0
      %55 = vst [vmem:[#allocation2 + $0xa8] sm:$0xff] 0.0
      %56 = vst [vmem:[#allocation2 + $0xb0] sm:$0xff] 0.0
      %57 = vst [vmem:[#allocation2 + $0xb8] sm:$0xff] 0.0
      %58 = vst [vmem:[#allocation2 + $0xc0] sm:$0xff] 0.0
      %59 = vst [vmem:[#allocation2 + $0xc8] sm:$0xff] 0.0
      %60 = vst [vmem:[#allocation2 + $0xd0] sm:$0xff] 0.0
      %61 = vst [vmem:[#allocation2 + $0xd8] sm:$0xff] 0.0
      %62 = vst [vmem:[#allocation2 + $0xe0] sm:$0xff] 0.0
      %63 = vst [vmem:[#allocation2 + $0xe8] sm:$0xff] 0.0
      %64 = vst [vmem:[#allocation2 + $0xf0] sm:$0xff] 0.0
      %65 = vst [vmem:[#allocation2 + $0xf8] sm:$0xff] 0.0
    $region21: #{rnn_model_forward.7} parent=1 // pred_fallthru
      _
    %v66 = vld [vmem:[#allocation2] sm:$0xff]
    %v67 = vld [vmem:[#allocation2 + $0x8] sm:$0xff]
    %v68 = vld [vmem:[#allocation2 + $0x10] sm:$0xff]
    %v69 = vld [vmem:[#allocation2 + $0x18] sm:$0xff]
    %v70 = vld [vmem:[#allocation2 + $0x20] sm:$0xff]
    %v71 = vld [vmem:[#allocation2 + $0x28] sm:$0xff]
    %v72 = vld [vmem:[#allocation2 + $0x30] sm:$0xff]
    %v73 = vld [vmem:[#allocation2 + $0x38] sm:$0xff]
    %v74 = vld [vmem:[#allocation2 + $0x40] sm:$0xff]
    %v75 = vld [vmem:[#allocation2 + $0x48] sm:$0xff]
    %v76 = vld [vmem:[#allocation2 + $0x50] sm:$0xff]
    %v77 = vld [vmem:[#allocation2 + $0x58] sm:$0xff]
    %v78 = vld [vmem:[#allocation2 + $0x60] sm:$0xff]
    %v79 = vld [vmem:[#allocation2 + $0x68] sm:$0xff]
    %v80 = vld [vmem:[#allocation2 + $0x70] sm:$0xff]
    %v81 = vld [vmem:[#allocation2 + $0x78] sm:$0xff]
    %v82 = vld [vmem:[#allocation2 + $0x80] sm:$0xff]
    %v83 = vld [vmem:[#allocation2 + $0x88] sm:$0xff]
    %v84 = vld [vmem:[#allocation2 + $0x90] sm:$0xff]
    %v85 = vld [vmem:[#allocation2 + $0x98] sm:$0xff]
    %v86 = vld [vmem:[#allocation2 + $0xa0] sm:$0xff]
    %v87 = vld [vmem:[#allocation2 + $0xa8] sm:$0xff]
    %v88 = vld [vmem:[#allocation2 + $0xb0] sm:$0xff]
    %v89 = vld [vmem:[#allocation2 + $0xb8] sm:$0xff]
    %v90 = vld [vmem:[#allocation2 + $0xc0] sm:$0xff]
    %v91 = vld [vmem:[#allocation2 + $0xc8] sm:$0xff]
    %v92 = vld [vmem:[#allocation2 + $0xd0] sm:$0xff]
    %v93 = vld [vmem:[#allocation2 + $0xd8] sm:$0xff]
    %v94 = vld [vmem:[#allocation2 + $0xe0] sm:$0xff]
    %v95 = vld [vmem:[#allocation2 + $0xe8] sm:$0xff]
    %v96 = vld [vmem:[#allocation2 + $0xf0] sm:$0xff]
    %v97 = vld [vmem:[#allocation2 + $0xf8] sm:$0xff]
    %v98 = vld [vmem:[%s0] sm:$0xff]
    %v99 = vld [vmem:[%s0 + $0x8] sm:$0xff]
    %v100 = vld [vmem:[%s0 + $0x10] sm:$0xff]
    %v101 = vld [vmem:[%s0 + $0x18] sm:$0xff]
    %v102 = vld [vmem:[%s0 + $0x20] sm:$0xff]
    %v103 = vld [vmem:[%s0 + $0x28] sm:$0xff]
    %v104 = vld [vmem:[%s0 + $0x30] sm:$0xff]
    %v105 = vld [vmem:[%s0 + $0x38] sm:$0xff]
    %v106 = vld [vmem:[#allocation3] sm:$0xff]
    %v107 = vld [vmem:[#allocation3 + $0x8] sm:$0xff]
    %v108 = vld [vmem:[#allocation3 + $0x10] sm:$0xff]
    %v109 = vld [vmem:[#allocation3 + $0x18] sm:$0xff]
    %v110 = vld [vmem:[#allocation3 + $0x20] sm:$0xff]
    %v111 = vld [vmem:[#allocation3 + $0x28] sm:$0xff]
    %v112 = vld [vmem:[#allocation3 + $0x30] sm:$0xff]
    %v113 = vld [vmem:[#allocation3 + $0x38] sm:$0xff]
    %v114 = vld [vmem:[#allocation3 + $0x40] sm:$0xff]
    %v115 = vld [vmem:[#allocation3 + $0x48] sm:$0xff]
    %v116 = vld [vmem:[#allocation3 + $0x50] sm:$0xff]
    %v117 = vld [vmem:[#allocation3 + $0x58] sm:$0xff]
    %v118 = vld [vmem:[#allocation3 + $0x60] sm:$0xff]
    %v119 = vld [vmem:[#allocation3 + $0x68] sm:$0xff]
    %v120 = vld [vmem:[#allocation3 + $0x70] sm:$0xff]
    %v121 = vld [vmem:[#allocation3 + $0x78] sm:$0xff]
    %v122 = vld [vmem:[#allocation3 + $0x80] sm:$0xff]
    %v123 = vld [vmem:[#allocation3 + $0x88] sm:$0xff]
    %v124 = vld [vmem:[#allocation3 + $0x90] sm:$0xff]
    %v125 = vld [vmem:[#allocation3 + $0x98] sm:$0xff]
    %v126 = vld [vmem:[#allocation3 + $0xa0] sm:$0xff]
    %v127 = vld [vmem:[#allocation3 + $0xa8] sm:$0xff]
    %v128 = vld [vmem:[#allocation3 + $0xb0] sm:$0xff]
    %v129 = vld [vmem:[#allocation3 + $0xb8] sm:$0xff]
    %v130 = vld [vmem:[#allocation3 + $0xc0] sm:$0xff]
    %v131 = vld [vmem:[#allocation3 + $0xc8] sm:$0xff]
    %v132 = vld [vmem:[#allocation3 + $0xd0] sm:$0xff]
    %v133 = vld [vmem:[#allocation3 + $0xd8] sm:$0xff]
    %v134 = vld [vmem:[#allocation3 + $0xe0] sm:$0xff]
    %v135 = vld [vmem:[#allocation3 + $0xe8] sm:$0xff]
    %v136 = vld [vmem:[#allocation3 + $0xf0] sm:$0xff]
    %v137 = vld [vmem:[#allocation3 + $0xf8] sm:$0xff]
    %v138 = vld [vmem:[#allocation3 + $0x100] sm:$0xff]
    %v139 = vld [vmem:[#allocation3 + $0x108] sm:$0xff]
    %v140 = vld [vmem:[#allocation3 + $0x110] sm:$0xff]
    %v141 = vld [vmem:[#allocation3 + $0x118] sm:$0xff]
    %v142 = vld [vmem:[#allocation3 + $0x120] sm:$0xff]
    %v143 = vld [vmem:[#allocation3 + $0x128] sm:$0xff]
    %v144 = vld [vmem:[#allocation3 + $0x130] sm:$0xff]
    %v145 = vld [vmem:[#allocation3 + $0x138] sm:$0xff]
    %v146 = vld [vmem:[#allocation3 + $0x140] sm:$0xff]
    %v147 = vld [vmem:[#allocation3 + $0x148] sm:$0xff]
    %v148 = vld [vmem:[#allocation3 + $0x150] sm:$0xff]
    %v149 = vld [vmem:[#allocation3 + $0x158] sm:$0xff]
    %v150 = vld [vmem:[#allocation3 + $0x160] sm:$0xff]
    %v151 = vld [vmem:[#allocation3 + $0x168] sm:$0xff]
    %v152 = vld [vmem:[#allocation3 + $0x170] sm:$0xff]
    %v153 = vld [vmem:[#allocation3 + $0x178] sm:$0xff]
    %v154 = vld [vmem:[#allocation3 + $0x180] sm:$0xff]
    %v155 = vld [vmem:[#allocation3 + $0x188] sm:$0xff]
    %v156 = vld [vmem:[#allocation3 + $0x190] sm:$0xff]
    %v157 = vld [vmem:[#allocation3 + $0x198] sm:$0xff]
    %v158 = vld [vmem:[#allocation3 + $0x1a0] sm:$0xff]
    %v159 = vld [vmem:[#allocation3 + $0x1a8] sm:$0xff]
    %v160 = vld [vmem:[#allocation3 + $0x1b0] sm:$0xff]
    %v161 = vld [vmem:[#allocation3 + $0x1b8] sm:$0xff]
    %v162 = vld [vmem:[#allocation3 + $0x1c0] sm:$0xff]
    %v163 = vld [vmem:[#allocation3 + $0x1c8] sm:$0xff]
    %v164 = vld [vmem:[#allocation3 + $0x1d0] sm:$0xff]
    %v165 = vld [vmem:[#allocation3 + $0x1d8] sm:$0xff]
    %v166 = vld [vmem:[#allocation3 + $0x1e0] sm:$0xff]
    %v167 = vld [vmem:[#allocation3 + $0x1e8] sm:$0xff]
    %v168 = vld [vmem:[#allocation3 + $0x1f0] sm:$0xff]
    %v169 = vld [vmem:[#allocation3 + $0x1f8] sm:$0xff]
    %170 = vmatpush.msra.mxu0 %v166
    %171 = vmatpush.msra.mxu0 %v162
    %172 = vmatpush.msra.mxu0 %v158
    %173 = vmatpush.msra.mxu0 %v154
    %174 = vmatpush.msra.mxu0 %v150
    %175 = vmatpush.msra.mxu0 %v146
    %176 = vmatpush.msra.mxu0 %v142
    %177 = vmatpush.msra.mxu0 %v138
    %178 = vmatpush.msra.mxu0 %v134
    %179 = vmatpush.msra.mxu0 %v130
    %180 = vmatpush.msra.mxu0 %v126
    %181 = vmatpush.msra.mxu0 %v122
    %182 = vmatpush.msra.mxu0 %v118
    %183 = vmatpush.msra.mxu0 %v114
    %184 = vmatpush.msra.mxu0 %v110
    %185 = vmatpush.msra.mxu0 %v106
    %186 = vmatmul.f32.gmra.mxu0 %v98
    %v187 = vpop.f32.mrf.mxu0
    %v188 = vadd.f32 0.0, %v187
    %189 = vmatmul.f32.gmra.mxu0 %v99
    %v190 = vpop.f32.mrf.mxu0
    %v191 = vadd.f32 0.0, %v190
    %192 = vmatmul.f32.gmra.mxu0 %v100
    %v193 = vpop.f32.mrf.mxu0
    %v194 = vadd.f32 0.0, %v193
    %195 = vmatmul.f32.gmra.mxu0 %v101
    %v196 = vpop.f32.mrf.mxu0
    %v197 = vadd.f32 0.0, %v196
    %198 = vmatmul.f32.gmra.mxu0 %v102
    %v199 = vpop.f32.mrf.mxu0
    %v200 = vadd.f32 0.0, %v199
    %201 = vmatmul.f32.gmra.mxu0 %v103
    %v202 = vpop.f32.mrf.mxu0
    %v203 = vadd.f32 0.0, %v202
    %204 = vmatmul.f32.gmra.mxu0 %v104
    %v205 = vpop.f32.mrf.mxu0
    %v206 = vadd.f32 0.0, %v205
    %207 = vmatmul.f32.gmra.mxu0 %v105
    %v208 = vpop.f32.mrf.mxu0
    %v209 = vadd.f32 0.0, %v208
    %210 = vdwg.mxu0
    %211 = vmatpush.msra.mxu0 %v167
    %212 = vmatpush.msra.mxu0 %v163
    %213 = vmatpush.msra.mxu0 %v159
    %214 = vmatpush.msra.mxu0 %v155
    %215 = vmatpush.msra.mxu0 %v151
    %216 = vmatpush.msra.mxu0 %v147
    %217 = vmatpush.msra.mxu0 %v143
    %218 = vmatpush.msra.mxu0 %v139
    %219 = vmatpush.msra.mxu0 %v135
    %220 = vmatpush.msra.mxu0 %v131
    %221 = vmatpush.msra.mxu0 %v127
    %222 = vmatpush.msra.mxu0 %v123
    %223 = vmatpush.msra.mxu0 %v119
    %224 = vmatpush.msra.mxu0 %v115
    %225 = vmatpush.msra.mxu0 %v111
    %226 = vmatpush.msra.mxu0 %v107
    %227 = vmatmul.f32.gmra.mxu0 %v98
    %v228 = vpop.f32.mrf.mxu0
    %v229 = vadd.f32 0.0, %v228
    %230 = vmatmul.f32.gmra.mxu0 %v99
    %v231 = vpop.f32.mrf.mxu0
    %v232 = vadd.f32 0.0, %v231
    %233 = vmatmul.f32.gmra.mxu0 %v100
    %v234 = vpop.f32.mrf.mxu0
    %v235 = vadd.f32 0.0, %v234
    %236 = vmatmul.f32.gmra.mxu0 %v101
    %v237 = vpop.f32.mrf.mxu0
    %v238 = vadd.f32 0.0, %v237
    %239 = vmatmul.f32.gmra.mxu0 %v102
    %v240 = vpop.f32.mrf.mxu0
    %v241 = vadd.f32 0.0, %v240
    %242 = vmatmul.f32.gmra.mxu0 %v103
    %v243 = vpop.f32.mrf.mxu0
    %v244 = vadd.f32 0.0, %v243
    %245 = vmatmul.f32.gmra.mxu0 %v104
    %v246 = vpop.f32.mrf.mxu0
    %v247 = vadd.f32 0.0, %v246
    %248 = vmatmul.f32.gmra.mxu0 %v105
    %v249 = vpop.f32.mrf.mxu0
    %v250 = vadd.f32 0.0, %v249
    %251 = vdwg.mxu0
    %252 = vmatpush.msra.mxu0 %v168
    %253 = vmatpush.msra.mxu0 %v164
    %254 = vmatpush.msra.mxu0 %v160
    %255 = vmatpush.msra.mxu0 %v156
    %256 = vmatpush.msra.mxu0 %v152
    %257 = vmatpush.msra.mxu0 %v148
    %258 = vmatpush.msra.mxu0 %v144
    %259 = vmatpush.msra.mxu0 %v140
    %260 = vmatpush.msra.mxu0 %v136
    %261 = vmatpush.msra.mxu0 %v132
    %262 = vmatpush.msra.mxu0 %v128
    %263 = vmatpush.msra.mxu0 %v124
    %264 = vmatpush.msra.mxu0 %v120
    %265 = vmatpush.msra.mxu0 %v116
    %266 = vmatpush.msra.mxu0 %v112
    %267 = vmatpush.msra.mxu0 %v108
    %268 = vmatmul.f32.gmra.mxu0 %v98
    %v269 = vpop.f32.mrf.mxu0
    %v270 = vadd.f32 0.0, %v269
    %271 = vmatmul.f32.gmra.mxu0 %v99
    %v272 = vpop.f32.mrf.mxu0
    %v273 = vadd.f32 0.0, %v272
    %274 = vmatmul.f32.gmra.mxu0 %v100
    %v275 = vpop.f32.mrf.mxu0
    %v276 = vadd.f32 0.0, %v275
    %277 = vmatmul.f32.gmra.mxu0 %v101
    %v278 = vpop.f32.mrf.mxu0
    %v279 = vadd.f32 0.0, %v278
    %280 = vmatmul.f32.gmra.mxu0 %v102
    %v281 = vpop.f32.mrf.mxu0
    %v282 = vadd.f32 0.0, %v281
    %283 = vmatmul.f32.gmra.mxu0 %v103
    %v284 = vpop.f32.mrf.mxu0
    %v285 = vadd.f32 0.0, %v284
    %286 = vmatmul.f32.gmra.mxu0 %v104
    %v287 = vpop.f32.mrf.mxu0
    %v288 = vadd.f32 0.0, %v287
    %289 = vmatmul.f32.gmra.mxu0 %v105
    %v290 = vpop.f32.mrf.mxu0
    %v291 = vadd.f32 0.0, %v290
    %292 = vdwg.mxu0
    %293 = vmatpush.msra.mxu0 %v169
    %294 = vmatpush.msra.mxu0 %v165
    %295 = vmatpush.msra.mxu0 %v161
    %296 = vmatpush.msra.mxu0 %v157
    %297 = vmatpush.msra.mxu0 %v153
    %298 = vmatpush.msra.mxu0 %v149
    %299 = vmatpush.msra.mxu0 %v145
    %300 = vmatpush.msra.mxu0 %v141
    %301 = vmatpush.msra.mxu0 %v137
    %302 = vmatpush.msra.mxu0 %v133
    %303 = vmatpush.msra.mxu0 %v129
    %304 = vmatpush.msra.mxu0 %v125
    %305 = vmatpush.msra.mxu0 %v121
    %306 = vmatpush.msra.mxu0 %v117
    %307 = vmatpush.msra.mxu0 %v113
    %308 = vmatpush.msra.mxu0 %v109
    %309 = vmatmul.f32.gmra.mxu0 %v98
    %v310 = vpop.f32.mrf.mxu0
    %v311 = vadd.f32 0.0, %v310
    %312 = vmatmul.f32.gmra.mxu0 %v99
    %v313 = vpop.f32.mrf.mxu0
    %v314 = vadd.f32 0.0, %v313
    %315 = vmatmul.f32.gmra.mxu0 %v100
    %v316 = vpop.f32.mrf.mxu0
    %v317 = vadd.f32 0.0, %v316
    %318 = vmatmul.f32.gmra.mxu0 %v101
    %v319 = vpop.f32.mrf.mxu0
    %v320 = vadd.f32 0.0, %v319
    %321 = vmatmul.f32.gmra.mxu0 %v102
    %v322 = vpop.f32.mrf.mxu0
    %v323 = vadd.f32 0.0, %v322
    %324 = vmatmul.f32.gmra.mxu0 %v103
    %v325 = vpop.f32.mrf.mxu0
    %v326 = vadd.f32 0.0, %v325
    %327 = vmatmul.f32.gmra.mxu0 %v104
    %v328 = vpop.f32.mrf.mxu0
    %v329 = vadd.f32 0.0, %v328
    %330 = vmatmul.f32.gmra.mxu0 %v105
    %v331 = vpop.f32.mrf.mxu0
    %v332 = vadd.f32 0.0, %v331
    %333 = vdwg.mxu0
    %v334 = vadd.f32 %v66, %v188
    %v335 = vadd.f32 %v67, %v229
    %v336 = vadd.f32 %v68, %v270
    %v337 = vadd.f32 %v69, %v311
    %v338 = vadd.f32 %v70, %v191
    %v339 = vadd.f32 %v71, %v232
    %v340 = vadd.f32 %v72, %v273
    %v341 = vadd.f32 %v73, %v314
    %v342 = vadd.f32 %v74, %v194
    %v343 = vadd.f32 %v75, %v235
    %v344 = vadd.f32 %v76, %v276
    %v345 = vadd.f32 %v77, %v317
    %v346 = vadd.f32 %v78, %v197
    %v347 = vadd.f32 %v79, %v238
    %v348 = vadd.f32 %v80, %v279
    %v349 = vadd.f32 %v81, %v320
    %v350 = vadd.f32 %v82, %v200
    %v351 = vadd.f32 %v83, %v241
    %v352 = vadd.f32 %v84, %v282
    %v353 = vadd.f32 %v85, %v323
    %v354 = vadd.f32 %v86, %v203
    %v355 = vadd.f32 %v87, %v244
    %v356 = vadd.f32 %v88, %v285
    %v357 = vadd.f32 %v89, %v326
    %v358 = vadd.f32 %v90, %v206
    %v359 = vadd.f32 %v91, %v247
    %v360 = vadd.f32 %v92, %v288
    %v361 = vadd.f32 %v93, %v329
    %v362 = vadd.f32 %v94, %v209
    %v363 = vadd.f32 %v95, %v250
    %v364 = vadd.f32 %v96, %v291
    %v365 = vadd.f32 %v97, %v332
    %366 = vst [vmem:[#allocation2] sm:$0xff] %v334
    %367 = vst [vmem:[#allocation2 + $0x8] sm:$0xff] %v335
    %368 = vst [vmem:[#allocation2 + $0x10] sm:$0xff] %v336
    %369 = vst [vmem:[#allocation2 + $0x18] sm:$0xff] %v337
    %370 = vst [vmem:[#allocation2 + $0x20] sm:$0xff] %v338
    %371 = vst [vmem:[#allocation2 + $0x28] sm:$0xff] %v339
    %372 = vst [vmem:[#allocation2 + $0x30] sm:$0xff] %v340
    %373 = vst [vmem:[#allocation2 + $0x38] sm:$0xff] %v341
    %374 = vst [vmem:[#allocation2 + $0x40] sm:$0xff] %v342
    %375 = vst [vmem:[#allocation2 + $0x48] sm:$0xff] %v343
    %376 = vst [vmem:[#allocation2 + $0x50] sm:$0xff] %v344
    %377 = vst [vmem:[#allocation2 + $0x58] sm:$0xff] %v345
    %378 = vst [vmem:[#allocation2 + $0x60] sm:$0xff] %v346
    %379 = vst [vmem:[#allocation2 + $0x68] sm:$0xff] %v347
    %380 = vst [vmem:[#allocation2 + $0x70] sm:$0xff] %v348
    %381 = vst [vmem:[#allocation2 + $0x78] sm:$0xff] %v349
    %382 = vst [vmem:[#allocation2 + $0x80] sm:$0xff] %v350
    %383 = vst [vmem:[#allocation2 + $0x88] sm:$0xff] %v351
    %384 = vst [vmem:[#allocation2 + $0x90] sm:$0xff] %v352
    %385 = vst [vmem:[#allocation2 + $0x98] sm:$0xff] %v353
    %386 = vst [vmem:[#allocation2 + $0xa0] sm:$0xff] %v354
    %387 = vst [vmem:[#allocation2 + $0xa8] sm:$0xff] %v355
    %388 = vst [vmem:[#allocation2 + $0xb0] sm:$0xff] %v356
    %389 = vst [vmem:[#allocation2 + $0xb8] sm:$0xff] %v357
    %390 = vst [vmem:[#allocation2 + $0xc0] sm:$0xff] %v358
    %391 = vst [vmem:[#allocation2 + $0xc8] sm:$0xff] %v359
    %392 = vst [vmem:[#allocation2 + $0xd0] sm:$0xff] %v360
    %393 = vst [vmem:[#allocation2 + $0xd8] sm:$0xff] %v361
    %394 = vst [vmem:[#allocation2 + $0xe0] sm:$0xff] %v362
    %395 = vst [vmem:[#allocation2 + $0xe8] sm:$0xff] %v363
    %396 = vst [vmem:[#allocation2 + $0xf0] sm:$0xff] %v364
    %397 = vst [vmem:[#allocation2 + $0xf8] sm:$0xff] %v365
    // Predicated region
    $region22: #{rnn_model_forward.7} parent=1 // pred_check
      %p398 = pneg %p30
    $region23: #{rnn_model_forward.7} parent=1 // pred_check_branch
      %400 = sbr.rel (%p398) target = $region25
    $region24: #{rnn_model_forward.7} parent=1 // pred_region
      %v401 = vld [vmem:[#allocation2] sm:$0xff]
      %v402 = vld [vmem:[#allocation2 + $0x8] sm:$0xff]
      %v403 = vld [vmem:[#allocation2 + $0x10] sm:$0xff]
      %v404 = vld [vmem:[#allocation2 + $0x18] sm:$0xff]
      %v405 = vld [vmem:[#allocation2 + $0x20] sm:$0xff]
      %v406 = vld [vmem:[#allocation2 + $0x28] sm:$0xff]
      %v407 = vld [vmem:[#allocation2 + $0x30] sm:$0xff]
      %v408 = vld [vmem:[#allocation2 + $0x38] sm:$0xff]
      %v409 = vld [vmem:[#allocation2 + $0x40] sm:$0xff]
      %v410 = vld [vmem:[#allocation2 + $0x48] sm:$0xff]
      %v411 = vld [vmem:[#allocation2 + $0x50] sm:$0xff]
      %v412 = vld [vmem:[#allocation2 + $0x58] sm:$0xff]
      %v413 = vld [vmem:[#allocation2 + $0x60] sm:$0xff]
      %v414 = vld [vmem:[#allocation2 + $0x68] sm:$0xff]
      %v415 = vld [vmem:[#allocation2 + $0x70] sm:$0xff]
      %v416 = vld [vmem:[#allocation2 + $0x78] sm:$0xff]
      %v417 = vld [vmem:[#allocation2 + $0x80] sm:$0xff]
      %v418 = vld [vmem:[#allocation2 + $0x88] sm:$0xff]
      %v419 = vld [vmem:[#allocation2 + $0x90] sm:$0xff]
      %v420 = vld [vmem:[#allocation2 + $0x98] sm:$0xff]
      %v421 = vld [vmem:[#allocation2 + $0xa0] sm:$0xff]
      %v422 = vld [vmem:[#allocation2 + $0xa8] sm:$0xff]
      %v423 = vld [vmem:[#allocation2 + $0xb0] sm:$0xff]
      %v424 = vld [vmem:[#allocation2 + $0xb8] sm:$0xff]
      %v425 = vld [vmem:[#allocation2 + $0xc0] sm:$0xff]
      %v426 = vld [vmem:[#allocation2 + $0xc8] sm:$0xff]
      %v427 = vld [vmem:[#allocation2 + $0xd0] sm:$0xff]
      %v428 = vld [vmem:[#allocation2 + $0xd8] sm:$0xff]
      %v429 = vld [vmem:[#allocation2 + $0xe0] sm:$0xff]
      %v430 = vld [vmem:[#allocation2 + $0xe8] sm:$0xff]
      %v431 = vld [vmem:[#allocation2 + $0xf0] sm:$0xff]
      %v432 = vld [vmem:[#allocation2 + $0xf8] sm:$0xff]
      %v433 = vld [vmem:[%s2] sm:$0xf]
      %v435 = vperm.slane %v433, 0
      %v436 = vperm.slane %v433, 1
      %v437 = vperm.slane %v433, 2
      %v438 = vperm.slane %v433, 3
      %v443 = vadd.f32 %v401, %v435
      %v444 = vadd.f32 %v402, %v436
      %v445 = vadd.f32 %v403, %v437
      %v446 = vadd.f32 %v404, %v438
      %v447 = vadd.f32 %v405, %v435
      %v448 = vadd.f32 %v406, %v436
      %v449 = vadd.f32 %v407, %v437
      %v450 = vadd.f32 %v408, %v438
      %v451 = vadd.f32 %v409, %v435
      %v452 = vadd.f32 %v410, %v436
      %v453 = vadd.f32 %v411, %v437
      %v454 = vadd.f32 %v412, %v438
      %v455 = vadd.f32 %v413, %v435
      %v456 = vadd.f32 %v414, %v436
      %v457 = vadd.f32 %v415, %v437
      %v458 = vadd.f32 %v416, %v438
      %v459 = vadd.f32 %v417, %v435
      %v460 = vadd.f32 %v418, %v436
      %v461 = vadd.f32 %v419, %v437
      %v462 = vadd.f32 %v420, %v438
      %v463 = vadd.f32 %v421, %v435
      %v464 = vadd.f32 %v422, %v436
      %v465 = vadd.f32 %v423, %v437
      %v466 = vadd.f32 %v424, %v438
      %v467 = vadd.f32 %v425, %v435
      %v468 = vadd.f32 %v426, %v436
      %v469 = vadd.f32 %v427, %v437
      %v470 = vadd.f32 %v428, %v438
      %v471 = vadd.f32 %v429, %v435
      %v472 = vadd.f32 %v430, %v436
      %v473 = vadd.f32 %v431, %v437
      %v474 = vadd.f32 %v432, %v438
      %475 = vst [vmem:[%s3] sm:$0xff] %v443
      %476 = vst [vmem:[%s3 + $0x8] sm:$0xff] %v444
      %477 = vst [vmem:[%s3 + $0x10] sm:$0xff] %v445
      %478 = vst [vmem:[%s3 + $0x18] sm:$0xff] %v446
      %479 = vst [vmem:[%s3 + $0x20] sm:$0xff] %v447
      %480 = vst [vmem:[%s3 + $0x28] sm:$0xff] %v448
      %481 = vst [vmem:[%s3 + $0x30] sm:$0xff] %v449
      %482 = vst [vmem:[%s3 + $0x38] sm:$0xff] %v450
      %483 = vst [vmem:[%s3 + $0x40] sm:$0xff] %v451
      %484 = vst [vmem:[%s3 + $0x48] sm:$0xff] %v452
      %485 = vst [vmem:[%s3 + $0x50] sm:$0xff] %v453
      %486 = vst [vmem:[%s3 + $0x58] sm:$0xff] %v454
      %487 = vst [vmem:[%s3 + $0x60] sm:$0xff] %v455
      %488 = vst [vmem:[%s3 + $0x68] sm:$0xff] %v456
      %489 = vst [vmem:[%s3 + $0x70] sm:$0xff] %v457
      %490 = vst [vmem:[%s3 + $0x78] sm:$0xff] %v458
      %491 = vst [vmem:[%s3 + $0x80] sm:$0xff] %v459
      %492 = vst [vmem:[%s3 + $0x88] sm:$0xff] %v460
      %493 = vst [vmem:[%s3 + $0x90] sm:$0xff] %v461
      %494 = vst [vmem:[%s3 + $0x98] sm:$0xff] %v462
      %495 = vst [vmem:[%s3 + $0xa0] sm:$0xff] %v463
      %496 = vst [vmem:[%s3 + $0xa8] sm:$0xff] %v464
      %497 = vst [vmem:[%s3 + $0xb0] sm:$0xff] %v465
      %498 = vst [vmem:[%s3 + $0xb8] sm:$0xff] %v466
      %499 = vst [vmem:[%s3 + $0xc0] sm:$0xff] %v467
      %500 = vst [vmem:[%s3 + $0xc8] sm:$0xff] %v468
      %501 = vst [vmem:[%s3 + $0xd0] sm:$0xff] %v469
      %502 = vst [vmem:[%s3 + $0xd8] sm:$0xff] %v470
      %503 = vst [vmem:[%s3 + $0xe0] sm:$0xff] %v471
      %504 = vst [vmem:[%s3 + $0xe8] sm:$0xff] %v472
      %505 = vst [vmem:[%s3 + $0xf0] sm:$0xff] %v473
      %506 = vst [vmem:[%s3 + $0xf8] sm:$0xff] %v474
    $region25: #{rnn_model_forward.7} parent=1 // pred_fallthru
      _
    // Predicated region
    $region26: #{rnn_model_forward.7} parent=1 // pred_check
      _
    $region27: #{rnn_model_forward.7} parent=1 // pred_check_branch
      %508 = sbr.rel (0) target = $region29
    $region28: #{rnn_model_forward.7} parent=1 // pred_region
      _
    $region29: #{rnn_model_forward.7} parent=1 // pred_fallthru
      _
    // Predicated region
    $region30: #{rnn_model_forward.7} parent=1 // pred_check
      _
    $region31: #{rnn_model_forward.7} parent=1 // pred_check_branch
      %510 = sbr.rel (0) target = $region33
    $region32: #{rnn_model_forward.7} parent=1 // pred_region
      _
    $region33: #{rnn_model_forward.7} parent=1 // pred_fallthru
      _
    %511 = vsyncpa [#allocation4], 1

// kernel: rnn_model_forward.6
$region0: #{rnn_model_forward.6}
  #allocation0 [shape = 'u32[]', space=smem, size = 0x4, offset = 0x4, fixed_abs, tag = 'smem constant byte address 0x4 - core index']
  #allocation1 [shape = 'u32[72,128]{1,0:T(1,128)}', space=vmem, size = 0x9000, scoped, tag = 'internal scratch']
  #allocation2 [shape = 'f32[8,128]{1,0:T(8,128)}', space=vmem, size = 0x1000, scoped, tag = 'scratch operand']
  #allocation3 [shape = 'f32[8,128]{1,0:T(8,128)}', space=vmem, size = 0x1000, scoped, tag = 'scratch operand']
  %s0 = inlined_call_operand.vmem [shape: f32[8,8,512], index: 0, kind: input, shape index: {}]
  %s1 = inlined_call_operand.hbm [shape: f32[128,512], index: 1, kind: input, shape index: {}]
  %s2 = inlined_call_operand.vmem [shape: f32[8,128], index: 2, kind: input, shape index: {}]
  %s3 = inlined_call_operand.vmem [shape: f32[8,128], index: 3, kind: input, shape index: {}]
  %s4 = inlined_call_operand.vmem [shape: f32[8,8,128], index: 4, kind: output, shape index: {0}]
  %s5 = inlined_call_operand.vmem [shape: f32[8,128], index: 5, kind: output, shape index: {1}]
  %s6 = inlined_call_operand.vmem [shape: f32[8,128], index: 6, kind: output, shape index: {2}]
  %7 = xla_tuple %s4, %s5, %s6
  %s8 = sld [smem:[#allocation0]]
  $region50: #{rnn_model_forward.6} parent=0
    _
  %s10 = ssub.s32 1, %s8
  %s11 = scalar_select 0, %s10, %s8
  $region1: #{rnn_model_forward.6} parent=0
    #allocation4 [shape = 'u8[262144]{0}', space=vmem, size = 0x40000, scoped, tag = 'input window, operand 1, single buffered']
    #allocation5 [shape = 's32[1]{0}', space=sflag, size = 0x4, scoped, tag = 'scoped memory for rnn_model_forward.6']
    %12 = vsyncpa [#allocation5], 0
    // Predicated region
    $region2: #{rnn_model_forward.6} parent=1 // pred_check
      _
    $region3: #{rnn_model_forward.6} parent=1 // pred_check_branch
      %14 = sbr.rel (0) target = $region5
    $region4: #{rnn_model_forward.6} parent=1 // pred_region
      _
    $region5: #{rnn_model_forward.6} parent=1 // pred_fallthru
      _
    // Predicated region
    $region6: #{rnn_model_forward.6} parent=1 // pred_check
      _
    $region7: #{rnn_model_forward.6} parent=1 // pred_check_branch
      %16 = sbr.rel (0) target = $region9
    $region8: #{rnn_model_forward.6} parent=1 // pred_region
      %18 = vsyncadd [#allocation5], 0
      %s19 = sshll.u32 %s1, 4
      %s20 = int_to_ptr.hbm [resolvable:$true] %s19
      %s21 = sshll.u32 [#allocation4], 4
      %s22 = int_to_ptr.vmem [resolvable:$true] %s21
      %27 = dma.hbm_to_vmem [thread:$0]  %s20, 8192, %s22, [#allocation5], 512, 512, 32
    $region9: #{rnn_model_forward.6} parent=1 // pred_fallthru
      _
    // Predicated region
    $region10: #{rnn_model_forward.6} parent=1 // pred_check
      _
    $region11: #{rnn_model_forward.6} parent=1 // pred_check_branch
      %29 = sbr.rel (0) target = $region13
    $region12: #{rnn_model_forward.6} parent=1 // pred_region
      _
    $region13: #{rnn_model_forward.6} parent=1 // pred_fallthru
      _
    // Predicated region
    $region14: #{rnn_model_forward.6} parent=1 // pred_check
      _
    $region15: #{rnn_model_forward.6} parent=1 // pred_check_branch
      %31 = sbr.rel (0) target = $region17
    $region16: #{rnn_model_forward.6} parent=1 // pred_region
      _
    $region17: #{rnn_model_forward.6} parent=1 // pred_fallthru
      _
    // Predicated region
    $region18: #{rnn_model_forward.6} parent=1 // pred_check
      _
    $region19: #{rnn_model_forward.6} parent=1 // pred_check_branch
      %33 = sbr.rel (0) target = $region21
    $region20: #{rnn_model_forward.6} parent=1 // pred_region
      %35 = dma.done [#allocation5], 8192
    $region21: #{rnn_model_forward.6} parent=1 // pred_fallthru
      _
    %p36 = scmp.eq.s32.totalorder 0, 0
    // Predicated region
    $region22: #{rnn_model_forward.6} parent=1 // pred_check
      %p37 = pneg %p36
    $region23: #{rnn_model_forward.6} parent=1 // pred_check_branch
      %39 = sbr.rel (%p37) target = $region25
    $region24: #{rnn_model_forward.6} parent=1 // pred_region
      %v40 = vld [vmem:[%s2] sm:$0xff]
      %41 = vst [vmem:[#allocation2] sm:$0xff] %v40
      %v42 = vld [vmem:[%s3] sm:$0xff]
      %43 = vst [vmem:[#allocation3] sm:$0xff] %v42
    $region25: #{rnn_model_forward.6} parent=1 // pred_fallthru
      _
    %v44 = vld [vmem:[#allocation2] sm:$0xff]
    %v45 = vld [vmem:[#allocation3] sm:$0xff]
    %v46 = vld [vmem:[%s0] sm:$0xff]
    %v47 = vld [vmem:[%s0 + $0x8] sm:$0xff]
    %v48 = vld [vmem:[%s0 + $0x10] sm:$0xff]
    %v49 = vld [vmem:[%s0 + $0x18] sm:$0xff]
    %v50 = vld [vmem:[#allocation4] sm:$0xff]
    %v51 = vld [vmem:[#allocation4 + $0x8] sm:$0xff]
    %v52 = vld [vmem:[#allocation4 + $0x10] sm:$0xff]
    %v53 = vld [vmem:[#allocation4 + $0x20] sm:$0xff]
    %v54 = vld [vmem:[#allocation4 + $0x28] sm:$0xff]
    %v55 = vld [vmem:[#allocation4 + $0x30] sm:$0xff]
    %v56 = vld [vmem:[#allocation4 + $0x40] sm:$0xff]
    %v57 = vld [vmem:[#allocation4 + $0x48] sm:$0xff]
    %v58 = vld [vmem:[#allocation4 + $0x50] sm:$0xff]
    %v59 = vld [vmem:[#allocation4 + $0x60] sm:$0xff]
    %v60 = vld [vmem:[#allocation4 + $0x68] sm:$0xff]
    %v61 = vld [vmem:[#allocation4 + $0x70] sm:$0xff]
    %v62 = vld [vmem:[#allocation4 + $0x80] sm:$0xff]
    %v63 = vld [vmem:[#allocation4 + $0x88] sm:$0xff]
    %v64 = vld [vmem:[#allocation4 + $0x90] sm:$0xff]
    %v65 = vld [vmem:[#allocation4 + $0xa0] sm:$0xff]
    %v66 = vld [vmem:[#allocation4 + $0xa8] sm:$0xff]
    %v67 = vld [vmem:[#allocation4 + $0xb0] sm:$0xff]
    %v68 = vld [vmem:[#allocation4 + $0xc0] sm:$0xff]
    %v69 = vld [vmem:[#allocation4 + $0xc8] sm:$0xff]
    %v70 = vld [vmem:[#allocation4 + $0xd0] sm:$0xff]
    %v71 = vld [vmem:[#allocation4 + $0xe0] sm:$0xff]
    %v72 = vld [vmem:[#allocation4 + $0xe8] sm:$0xff]
    %v73 = vld [vmem:[#allocation4 + $0xf0] sm:$0xff]
    %v74 = vld [vmem:[#allocation4 + $0x100] sm:$0xff]
    %v75 = vld [vmem:[#allocation4 + $0x108] sm:$0xff]
    %v76 = vld [vmem:[#allocation4 + $0x110] sm:$0xff]
    %v77 = vld [vmem:[#allocation4 + $0x120] sm:$0xff]
    %v78 = vld [vmem:[#allocation4 + $0x128] sm:$0xff]
    %v79 = vld [vmem:[#allocation4 + $0x130] sm:$0xff]
    %v80 = vld [vmem:[#allocation4 + $0x140] sm:$0xff]
    %v81 = vld [vmem:[#allocation4 + $0x148] sm:$0xff]
    %v82 = vld [vmem:[#allocation4 + $0x150] sm:$0xff]
    %v83 = vld [vmem:[#allocation4 + $0x160] sm:$0xff]
    %v84 = vld [vmem:[#allocation4 + $0x168] sm:$0xff]
    %v85 = vld [vmem:[#allocation4 + $0x170] sm:$0xff]
    %v86 = vld [vmem:[#allocation4 + $0x180] sm:$0xff]
    %v87 = vld [vmem:[#allocation4 + $0x188] sm:$0xff]
    %v88 = vld [vmem:[#allocation4 + $0x190] sm:$0xff]
    %v89 = vld [vmem:[#allocation4 + $0x1a0] sm:$0xff]
    %v90 = vld [vmem:[#allocation4 + $0x1a8] sm:$0xff]
    %v91 = vld [vmem:[#allocation4 + $0x1b0] sm:$0xff]
    %v92 = vld [vmem:[#allocation4 + $0x1c0] sm:$0xff]
    %v93 = vld [vmem:[#allocation4 + $0x1c8] sm:$0xff]
    %v94 = vld [vmem:[#allocation4 + $0x1d0] sm:$0xff]
    %v95 = vld [vmem:[#allocation4 + $0x1e0] sm:$0xff]
    %v96 = vld [vmem:[#allocation4 + $0x1e8] sm:$0xff]
    %v97 = vld [vmem:[#allocation4 + $0x1f0] sm:$0xff]
    %98 = vmatpush.msra.mxu0 %v95
    %99 = vmatpush.msra.mxu0 %v92
    %100 = vmatpush.msra.mxu0 %v89
    %101 = vmatpush.msra.mxu0 %v86
    %102 = vmatpush.msra.mxu0 %v83
    %103 = vmatpush.msra.mxu0 %v80
    %104 = vmatpush.msra.mxu0 %v77
    %105 = vmatpush.msra.mxu0 %v74
    %106 = vmatpush.msra.mxu0 %v71
    %107 = vmatpush.msra.mxu0 %v68
    %108 = vmatpush.msra.mxu0 %v65
    %109 = vmatpush.msra.mxu0 %v62
    %110 = vmatpush.msra.mxu0 %v59
    %111 = vmatpush.msra.mxu0 %v56
    %112 = vmatpush.msra.mxu0 %v53
    %113 = vmatpush.msra.mxu0 %v50
    %114 = vmatmul.f32.gmra.mxu0 %v44
    %v115 = vpop.f32.mrf.mxu0
    %v116 = vadd.f32 0.0, %v115
    %117 = vdwg.mxu0
    %118 = vmatpush.msra.mxu0 %v96
    %119 = vmatpush.msra.mxu0 %v93
    %120 = vmatpush.msra.mxu0 %v90
    %121 = vmatpush.msra.mxu0 %v87
    %122 = vmatpush.msra.mxu0 %v84
    %123 = vmatpush.msra.mxu0 %v81
    %124 = vmatpush.msra.mxu0 %v78
    %125 = vmatpush.msra.mxu0 %v75
    %126 = vmatpush.msra.mxu0 %v72
    %127 = vmatpush.msra.mxu0 %v69
    %128 = vmatpush.msra.mxu0 %v66
    %129 = vmatpush.msra.mxu0 %v63
    %130 = vmatpush.msra.mxu0 %v60
    %131 = vmatpush.msra.mxu0 %v57
    %132 = vmatpush.msra.mxu0 %v54
    %133 = vmatpush.msra.mxu0 %v51
    %134 = vmatmul.f32.gmra.mxu0 %v44
    %v135 = vpop.f32.mrf.mxu0
    %v136 = vadd.f32 0.0, %v135
    %137 = vdwg.mxu0
    %138 = vmatpush.msra.mxu0 %v97
    %139 = vmatpush.msra.mxu0 %v94
    %140 = vmatpush.msra.mxu0 %v91
    %141 = vmatpush.msra.mxu0 %v88
    %142 = vmatpush.msra.mxu0 %v85
    %143 = vmatpush.msra.mxu0 %v82
    %144 = vmatpush.msra.mxu0 %v79
    %145 = vmatpush.msra.mxu0 %v76
    %146 = vmatpush.msra.mxu0 %v73
    %147 = vmatpush.msra.mxu0 %v70
    %148 = vmatpush.msra.mxu0 %v67
    %149 = vmatpush.msra.mxu0 %v64
    %150 = vmatpush.msra.mxu0 %v61
    %151 = vmatpush.msra.mxu0 %v58
    %152 = vmatpush.msra.mxu0 %v55
    %153 = vmatpush.msra.mxu0 %v52
    %154 = vmatmul.f32.gmra.mxu0 %v44
    %v155 = vpop.f32.mrf.mxu0
    %v156 = vadd.f32 0.0, %v155
    %157 = vdwg.mxu0
    %v158 = vadd.f32 %v46, %v116
    %v159 = vadd.f32 %v47, %v136
    %v160 = vadd.f32 %v48, %v156
    %v161 = vld [vmem:[#allocation4 + $0x18] sm:$0xff]
    %v162 = vld [vmem:[#allocation4 + $0x38] sm:$0xff]
    %v163 = vld [vmem:[#allocation4 + $0x58] sm:$0xff]
    %v164 = vld [vmem:[#allocation4 + $0x78] sm:$0xff]
    %v165 = vld [vmem:[#allocation4 + $0x98] sm:$0xff]
    %v166 = vld [vmem:[#allocation4 + $0xb8] sm:$0xff]
    %v167 = vld [vmem:[#allocation4 + $0xd8] sm:$0xff]
    %v168 = vld [vmem:[#allocation4 + $0xf8] sm:$0xff]
    %v169 = vld [vmem:[#allocation4 + $0x118] sm:$0xff]
    %v170 = vld [vmem:[#allocation4 + $0x138] sm:$0xff]
    %v171 = vld [vmem:[#allocation4 + $0x158] sm:$0xff]
    %v172 = vld [vmem:[#allocation4 + $0x178] sm:$0xff]
    %v173 = vld [vmem:[#allocation4 + $0x198] sm:$0xff]
    %v174 = vld [vmem:[#allocation4 + $0x1b8] sm:$0xff]
    %v175 = vld [vmem:[#allocation4 + $0x1d8] sm:$0xff]
    %v176 = vld [vmem:[#allocation4 + $0x1f8] sm:$0xff]
    %177 = vmatpush.msra.mxu0 %v176
    %178 = vmatpush.msra.mxu0 %v175
    %179 = vmatpush.msra.mxu0 %v174
    %180 = vmatpush.msra.mxu0 %v173
    %181 = vmatpush.msra.mxu0 %v172
    %182 = vmatpush.msra.mxu0 %v171
    %183 = vmatpush.msra.mxu0 %v170
    %184 = vmatpush.msra.mxu0 %v169
    %185 = vmatpush.msra.mxu0 %v168
    %186 = vmatpush.msra.mxu0 %v167
    %187 = vmatpush.msra.mxu0 %v166
    %188 = vmatpush.msra.mxu0 %v165
    %189 = vmatpush.msra.mxu0 %v164
    %190 = vmatpush.msra.mxu0 %v163
    %191 = vmatpush.msra.mxu0 %v162
    %192 = vmatpush.msra.mxu0 %v161
    %193 = vmatmul.f32.gmra.mxu0 %v44
    %v194 = vpop.f32.mrf.mxu0
    %v195 = vadd.f32 0.0, %v194
    %196 = vdwg.mxu0
    %v197 = vadd.f32 %v49, %v195
    %v198 = vxor.u32 %v158, 2147483648
    %v199 = vxor.u32 %v159, 2147483648
    %v200 = vxor.u32 %v160, 2147483648
    %v201 = vmul.f32 %v198, 1.442695
    %v202 = vpow.pop %v201
    %v203 = vmul.f32 %v199, 1.442695
    %v204 = vpow.pop %v203
    %v205 = vmul.f32 %v200, 1.442695
    %v206 = vpow.pop %v205
    %v207 = vadd.f32 %v202, 1.0
    %v208 = vadd.f32 %v204, 1.0
    %v209 = vadd.f32 %v206, 1.0
    %v210 = vrcp.pop %v207
    %v211 = vmul.f32 %v207, %v210
    %v212 = vsub.f32 1.0, %v211
    %v213 = vmul.f32 %v210, %v212
    %v214 = vadd.f32 %v210, %v213
    %vm215 = vweird.f32 %v207
    %vm216 = vweird.f32 %v210
    %vm217 = vmor %vm215, %vm216
    %v218 = vsel %vm217, %v210, %v214
    %v219 = vand.u32 2147483647, %v207
    %vm220 = vcmp.eq.f32.partialorder %v219, 8.507059e+37
    %v221 = vand.u32 %v207, 2147483648
    %v222 = vor.u32 1.1754944e-38, %v221
    %v223 = vsel %vm220, %v222, %v218
    %v224 = vmul.f32 1.0, %v223
    %v225 = vrcp.pop %v208
    %v226 = vmul.f32 %v208, %v225
    %v227 = vsub.f32 1.0, %v226
    %v228 = vmul.f32 %v225, %v227
    %v229 = vadd.f32 %v225, %v228
    %vm230 = vweird.f32 %v208
    %vm231 = vweird.f32 %v225
    %vm232 = vmor %vm230, %vm231
    %v233 = vsel %vm232, %v225, %v229
    %v234 = vand.u32 2147483647, %v208
    %vm235 = vcmp.eq.f32.partialorder %v234, 8.507059e+37
    %v236 = vand.u32 %v208, 2147483648
    %v237 = vor.u32 1.1754944e-38, %v236
    %v238 = vsel %vm235, %v237, %v233
    %v239 = vmul.f32 1.0, %v238
    %v240 = vrcp.pop %v209
    %v241 = vmul.f32 %v209, %v240
    %v242 = vsub.f32 1.0, %v241
    %v243 = vmul.f32 %v240, %v242
    %v244 = vadd.f32 %v240, %v243
    %vm245 = vweird.f32 %v209
    %vm246 = vweird.f32 %v240
    %vm247 = vmor %vm245, %vm246
    %v248 = vsel %vm247, %v240, %v244
    %v249 = vand.u32 2147483647, %v209
    %vm250 = vcmp.eq.f32.partialorder %v249, 8.507059e+37
    %v251 = vand.u32 %v209, 2147483648
    %v252 = vor.u32 1.1754944e-38, %v251
    %v253 = vsel %vm250, %v252, %v248
    %v254 = vmul.f32 1.0, %v253
    %v255 = vtanh.pop %v197
    %v256 = vmul.f32 %v239, %v45
    %v257 = vmul.f32 %v224, %v255
    %v258 = vadd.f32 %v256, %v257
    %v259 = vtanh.pop %v258
    %v260 = vmul.f32 %v254, %v259
    %261 = vst [vmem:[%s4] sm:$0xff] %v260
    %s262 = scalar_lea.vmem %s0, 32
    %v263 = vld [vmem:[%s262] sm:$0xff]
    %v264 = vld [vmem:[%s262 + $0x8] sm:$0xff]
    %v265 = vld [vmem:[%s262 + $0x10] sm:$0xff]
    %v266 = vld [vmem:[%s262 + $0x18] sm:$0xff]
    %v267 = vld [vmem:[#allocation4] sm:$0xff]
    %v268 = vld [vmem:[#allocation4 + $0x8] sm:$0xff]
    %v269 = vld [vmem:[#allocation4 + $0x10] sm:$0xff]
    %v270 = vld [vmem:[#allocation4 + $0x20] sm:$0xff]
    %v271 = vld [vmem:[#allocation4 + $0x28] sm:$0xff]
    %v272 = vld [vmem:[#allocation4 + $0x30] sm:$0xff]
    %v273 = vld [vmem:[#allocation4 + $0x40] sm:$0xff]
    %v274 = vld [vmem:[#allocation4 + $0x48] sm:$0xff]
    %v275 = vld [vmem:[#allocation4 + $0x50] sm:$0xff]
    %v276 = vld [vmem:[#allocation4 + $0x60] sm:$0xff]
    %v277 = vld [vmem:[#allocation4 + $0x68] sm:$0xff]
    %v278 = vld [vmem:[#allocation4 + $0x70] sm:$0xff]
    %v279 = vld [vmem:[#allocation4 + $0x80] sm:$0xff]
    %v280 = vld [vmem:[#allocation4 + $0x88] sm:$0xff]
    %v281 = vld [vmem:[#allocation4 + $0x90] sm:$0xff]
    %v282 = vld [vmem:[#allocation4 + $0xa0] sm:$0xff]
    %v283 = vld [vmem:[#allocation4 + $0xa8] sm:$0xff]
    %v284 = vld [vmem:[#allocation4 + $0xb0] sm:$0xff]
    %v285 = vld [vmem:[#allocation4 + $0xc0] sm:$0xff]
    %v286 = vld [vmem:[#allocation4 + $0xc8] sm:$0xff]
    %v287 = vld [vmem:[#allocation4 + $0xd0] sm:$0xff]
    %v288 = vld [vmem:[#allocation4 + $0xe0] sm:$0xff]
    %v289 = vld [vmem:[#allocation4 + $0xe8] sm:$0xff]
    %v290 = vld [vmem:[#allocation4 + $0xf0] sm:$0xff]
    %v291 = vld [vmem:[#allocation4 + $0x100] sm:$0xff]
    %v292 = vld [vmem:[#allocation4 + $0x108] sm:$0xff]
    %v293 = vld [vmem:[#allocation4 + $0x110] sm:$0xff]
    %v294 = vld [vmem:[#allocation4 + $0x120] sm:$0xff]
    %v295 = vld [vmem:[#allocation4 + $0x128] sm:$0xff]
    %v296 = vld [vmem:[#allocation4 + $0x130] sm:$0xff]
    %v297 = vld [vmem:[#allocation4 + $0x140] sm:$0xff]
    %v298 = vld [vmem:[#allocation4 + $0x148] sm:$0xff]
    %v299 = vld [vmem:[#allocation4 + $0x150] sm:$0xff]
    %v300 = vld [vmem:[#allocation4 + $0x160] sm:$0xff]
    %v301 = vld [vmem:[#allocation4 + $0x168] sm:$0xff]
    %v302 = vld [vmem:[#allocation4 + $0x170] sm:$0xff]
    %v303 = vld [vmem:[#allocation4 + $0x180] sm:$0xff]
    %v304 = vld [vmem:[#allocation4 + $0x188] sm:$0xff]
    %v305 = vld [vmem:[#allocation4 + $0x190] sm:$0xff]
    %v306 = vld [vmem:[#allocation4 + $0x1a0] sm:$0xff]
    %v307 = vld [vmem:[#allocation4 + $0x1a8] sm:$0xff]
    %v308 = vld [vmem:[#allocation4 + $0x1b0] sm:$0xff]
    %v309 = vld [vmem:[#allocation4 + $0x1c0] sm:$0xff]
    %v310 = vld [vmem:[#allocation4 + $0x1c8] sm:$0xff]
    %v311 = vld [vmem:[#allocation4 + $0x1d0] sm:$0xff]
    %v312 = vld [vmem:[#allocation4 + $0x1e0] sm:$0xff]
    %v313 = vld [vmem:[#allocation4 + $0x1e8] sm:$0xff]
    %v314 = vld [vmem:[#allocation4 + $0x1f0] sm:$0xff]
    %315 = vmatpush.msra.mxu0 %v312
    %316 = vmatpush.msra.mxu0 %v309
    %317 = vmatpush.msra.mxu0 %v306
    %318 = vmatpush.msra.mxu0 %v303
    %319 = vmatpush.msra.mxu0 %v300
    %320 = vmatpush.msra.mxu0 %v297
    %321 = vmatpush.msra.mxu0 %v294
    %322 = vmatpush.msra.mxu0 %v291
    %323 = vmatpush.msra.mxu0 %v288
    %324 = vmatpush.msra.mxu0 %v285
    %325 = vmatpush.msra.mxu0 %v282
    %326 = vmatpush.msra.mxu0 %v279
    %327 = vmatpush.msra.mxu0 %v276
    %328 = vmatpush.msra.mxu0 %v273
    %329 = vmatpush.msra.mxu0 %v270
    %330 = vmatpush.msra.mxu0 %v267
    %331 = vmatmul.f32.gmra.mxu0 %v260
    %v332 = vpop.f32.mrf.mxu0
    %v333 = vadd.f32 0.0, %v332
    %334 = vdwg.mxu0
    %335 = vmatpush.msra.mxu0 %v313
    %336 = vmatpush.msra.mxu0 %v310
    %337 = vmatpush.msra.mxu0 %v307
    %338 = vmatpush.msra.mxu0 %v304
    %339 = vmatpush.msra.mxu0 %v301
    %340 = vmatpush.msra.mxu0 %v298
    %341 = vmatpush.msra.mxu0 %v295
    %342 = vmatpush.msra.mxu0 %v292
    %343 = vmatpush.msra.mxu0 %v289
    %344 = vmatpush.msra.mxu0 %v286
    %345 = vmatpush.msra.mxu0 %v283
    %346 = vmatpush.msra.mxu0 %v280
    %347 = vmatpush.msra.mxu0 %v277
    %348 = vmatpush.msra.mxu0 %v274
    %349 = vmatpush.msra.mxu0 %v271
    %350 = vmatpush.msra.mxu0 %v268
    %351 = vmatmul.f32.gmra.mxu0 %v260
    %v352 = vpop.f32.mrf.mxu0
    %v353 = vadd.f32 0.0, %v352
    %354 = vdwg.mxu0
    %355 = vmatpush.msra.mxu0 %v314
    %356 = vmatpush.msra.mxu0 %v311
    %357 = vmatpush.msra.mxu0 %v308
    %358 = vmatpush.msra.mxu0 %v305
    %359 = vmatpush.msra.mxu0 %v302
    %360 = vmatpush.msra.mxu0 %v299
    %361 = vmatpush.msra.mxu0 %v296
    %362 = vmatpush.msra.mxu0 %v293
    %363 = vmatpush.msra.mxu0 %v290
    %364 = vmatpush.msra.mxu0 %v287
    %365 = vmatpush.msra.mxu0 %v284
    %366 = vmatpush.msra.mxu0 %v281
    %367 = vmatpush.msra.mxu0 %v278
    %368 = vmatpush.msra.mxu0 %v275
    %369 = vmatpush.msra.mxu0 %v272
    %370 = vmatpush.msra.mxu0 %v269
    %371 = vmatmul.f32.gmra.mxu0 %v260
    %v372 = vpop.f32.mrf.mxu0
    %v373 = vadd.f32 0.0, %v372
    %374 = vdwg.mxu0
    %v375 = vadd.f32 %v263, %v333
    %v376 = vadd.f32 %v264, %v353
    %v377 = vadd.f32 %v265, %v373
    %v378 = vld [vmem:[#allocation4 + $0x18] sm:$0xff]
    %v379 = vld [vmem:[#allocation4 + $0x38] sm:$0xff]
    %v380 = vld [vmem:[#allocation4 + $0x58] sm:$0xff]
    %v381 = vld [vmem:[#allocation4 + $0x78] sm:$0xff]
    %v382 = vld [vmem:[#allocation4 + $0x98] sm:$0xff]
    %v383 = vld [vmem:[#allocation4 + $0xb8] sm:$0xff]
    %v384 = vld [vmem:[#allocation4 + $0xd8] sm:$0xff]
    %v385 = vld [vmem:[#allocation4 + $0xf8] sm:$0xff]
    %v386 = vld [vmem:[#allocation4 + $0x118] sm:$0xff]
    %v387 = vld [vmem:[#allocation4 + $0x138] sm:$0xff]
    %v388 = vld [vmem:[#allocation4 + $0x158] sm:$0xff]
    %v389 = vld [vmem:[#allocation4 + $0x178] sm:$0xff]
    %v390 = vld [vmem:[#allocation4 + $0x198] sm:$0xff]
    %v391 = vld [vmem:[#allocation4 + $0x1b8] sm:$0xff]
    %v392 = vld [vmem:[#allocation4 + $0x1d8] sm:$0xff]
    %v393 = vld [vmem:[#allocation4 + $0x1f8] sm:$0xff]
    %394 = vmatpush.msra.mxu0 %v393
    %395 = vmatpush.msra.mxu0 %v392
    %396 = vmatpush.msra.mxu0 %v391
    %397 = vmatpush.msra.mxu0 %v390
    %398 = vmatpush.msra.mxu0 %v389
    %399 = vmatpush.msra.mxu0 %v388
    %400 = vmatpush.msra.mxu0 %v387
    %401 = vmatpush.msra.mxu0 %v386
    %402 = vmatpush.msra.mxu0 %v385
    %403 = vmatpush.msra.mxu0 %v384
    %404 = vmatpush.msra.mxu0 %v383
    %405 = vmatpush.msra.mxu0 %v382
    %406 = vmatpush.msra.mxu0 %v381
    %407 = vmatpush.msra.mxu0 %v380
    %408 = vmatpush.msra.mxu0 %v379
    %409 = vmatpush.msra.mxu0 %v378
    %410 = vmatmul.f32.gmra.mxu0 %v260
    %v411 = vpop.f32.mrf.mxu0
    %v412 = vadd.f32 0.0, %v411
    %413 = vdwg.mxu0
    %v414 = vadd.f32 %v266, %v412
    %v415 = vxor.u32 %v375, 2147483648
    %v416 = vxor.u32 %v376, 2147483648
    %v417 = vxor.u32 %v377, 2147483648
    %v418 = vmul.f32 %v415, 1.442695
    %v419 = vpow.pop %v418
    %v420 = vmul.f32 %v416, 1.442695
    %v421 = vpow.pop %v420
    %v422 = vmul.f32 %v417, 1.442695
    %v423 = vpow.pop %v422
    %v424 = vadd.f32 %v419, 1.0
    %v425 = vadd.f32 %v421, 1.0
    %v426 = vadd.f32 %v423, 1.0
    %v427 = vrcp.pop %v424
    %v428 = vmul.f32 %v424, %v427
    %v429 = vsub.f32 1.0, %v428
    %v430 = vmul.f32 %v427, %v429
    %v431 = vadd.f32 %v427, %v430
    %vm432 = vweird.f32 %v424
    %vm433 = vweird.f32 %v427
    %vm434 = vmor %vm432, %vm433
    %v435 = vsel %vm434, %v427, %v431
    %v436 = vand.u32 2147483647, %v424
    %vm437 = vcmp.eq.f32.partialorder %v436, 8.507059e+37
    %v438 = vand.u32 %v424, 2147483648
    %v439 = vor.u32 1.1754944e-38, %v438
    %v440 = vsel %vm437, %v439, %v435
    %v441 = vmul.f32 1.0, %v440
    %v442 = vrcp.pop %v425
    %v443 = vmul.f32 %v425, %v442
    %v444 = vsub.f32 1.0, %v443
    %v445 = vmul.f32 %v442, %v444
    %v446 = vadd.f32 %v442, %v445
    %vm447 = vweird.f32 %v425
    %vm448 = vweird.f32 %v442
    %vm449 = vmor %vm447, %vm448
    %v450 = vsel %vm449, %v442, %v446
    %v451 = vand.u32 2147483647, %v425
    %vm452 = vcmp.eq.f32.partialorder %v451, 8.507059e+37
    %v453 = vand.u32 %v425, 2147483648
    %v454 = vor.u32 1.1754944e-38, %v453
    %v455 = vsel %vm452, %v454, %v450
    %v456 = vmul.f32 1.0, %v455
    %v457 = vrcp.pop %v426
    %v458 = vmul.f32 %v426, %v457
    %v459 = vsub.f32 1.0, %v458
    %v460 = vmul.f32 %v457, %v459
    %v461 = vadd.f32 %v457, %v460
    %vm462 = vweird.f32 %v426
    %vm463 = vweird.f32 %v457
    %vm464 = vmor %vm462, %vm463
    %v465 = vsel %vm464, %v457, %v461
    %v466 = vand.u32 2147483647, %v426
    %vm467 = vcmp.eq.f32.partialorder %v466, 8.507059e+37
    %v468 = vand.u32 %v426, 2147483648
    %v469 = vor.u32 1.1754944e-38, %v468
    %v470 = vsel %vm467, %v469, %v465
    %v471 = vmul.f32 1.0, %v470
    %v472 = vtanh.pop %v414
    %v473 = vmul.f32 %v456, %v258
    %v474 = vmul.f32 %v441, %v472
    %v475 = vadd.f32 %v473, %v474
    %v476 = vtanh.pop %v475
    %v477 = vmul.f32 %v471, %v476
    %s478 = scalar_lea.vmem %s4, 8
    %479 = vst [vmem:[%s478] sm:$0xff] %v477
    %s480 = scalar_lea.vmem %s0, 64
    %v481 = vld [vmem:[%s480] sm:$0xff]
    %v482 = vld [vmem:[%s480 + $0x8] sm:$0xff]
    %v483 = vld [vmem:[%s480 + $0x10] sm:$0xff]
    %v484 = vld [vmem:[%s480 + $0x18] sm:$0xff]
    %v485 = vld [vmem:[#allocation4] sm:$0xff]
    %v486 = vld [vmem:[#allocation4 + $0x8] sm:$0xff]
    %v487 = vld [vmem:[#allocation4 + $0x10] sm:$0xff]
    %v488 = vld [vmem:[#allocation4 + $0x20] sm:$0xff]
    %v489 = vld [vmem:[#allocation4 + $0x28] sm:$0xff]
    %v490 = vld [vmem:[#allocation4 + $0x30] sm:$0xff]
    %v491 = vld [vmem:[#allocation4 + $0x40] sm:$0xff]
    %v492 = vld [vmem:[#allocation4 + $0x48] sm:$0xff]
    %v493 = vld [vmem:[#allocation4 + $0x50] sm:$0xff]
    %v494 = vld [vmem:[#allocation4 + $0x60] sm:$0xff]
    %v495 = vld [vmem:[#allocation4 + $0x68] sm:$0xff]
    %v496 = vld [vmem:[#allocation4 + $0x70] sm:$0xff]
    %v497 = vld [vmem:[#allocation4 + $0x80] sm:$0xff]
    %v498 = vld [vmem:[#allocation4 + $0x88] sm:$0xff]
    %v499 = vld [vmem:[#allocation4 + $0x90] sm:$0xff]
    %v500 = vld [vmem:[#allocation4 + $0xa0] sm:$0xff]
    %v501 = vld [vmem:[#allocation4 + $0xa8] sm:$0xff]
    %v502 = vld [vmem:[#allocation4 + $0xb0] sm:$0xff]
    %v503 = vld [vmem:[#allocation4 + $0xc0] sm:$0xff]
    %v504 = vld [vmem:[#allocation4 + $0xc8] sm:$0xff]
    %v505 = vld [vmem:[#allocation4 + $0xd0] sm:$0xff]
    %v506 = vld [vmem:[#allocation4 + $0xe0] sm:$0xff]
    %v507 = vld [vmem:[#allocation4 + $0xe8] sm:$0xff]
    %v508 = vld [vmem:[#allocation4 + $0xf0] sm:$0xff]
    %v509 = vld [vmem:[#allocation4 + $0x100] sm:$0xff]
    %v510 = vld [vmem:[#allocation4 + $0x108] sm:$0xff]
    %v511 = vld [vmem:[#allocation4 + $0x110] sm:$0xff]
    %v512 = vld [vmem:[#allocation4 + $0x120] sm:$0xff]
    %v513 = vld [vmem:[#allocation4 + $0x128] sm:$0xff]
    %v514 = vld [vmem:[#allocation4 + $0x130] sm:$0xff]
    %v515 = vld [vmem:[#allocation4 + $0x140] sm:$0xff]
    %v516 = vld [vmem:[#allocation4 + $0x148] sm:$0xff]
    %v517 = vld [vmem:[#allocation4 + $0x150] sm:$0xff]
    %v518 = vld [vmem:[#allocation4 + $0x160] sm:$0xff]
    %v519 = vld [vmem:[#allocation4 + $0x168] sm:$0xff]
    %v520 = vld [vmem:[#allocation4 + $0x170] sm:$0xff]
    %v521 = vld [vmem:[#allocation4 + $0x180] sm:$0xff]
    %v522 = vld [vmem:[#allocation4 + $0x188] sm:$0xff]
    %v523 = vld [vmem:[#allocation4 + $0x190] sm:$0xff]
    %v524 = vld [vmem:[#allocation4 + $0x1a0] sm:$0xff]
    %v525 = vld [vmem:[#allocation4 + $0x1a8] sm:$0xff]
    %v526 = vld [vmem:[#allocation4 + $0x1b0] sm:$0xff]
    %v527 = vld [vmem:[#allocation4 + $0x1c0] sm:$0xff]
    %v528 = vld [vmem:[#allocation4 + $0x1c8] sm:$0xff]
    %v529 = vld [vmem:[#allocation4 + $0x1d0] sm:$0xff]
    %v530 = vld [vmem:[#allocation4 + $0x1e0] sm:$0xff]
    %v531 = vld [vmem:[#allocation4 + $0x1e8] sm:$0xff]
    %v532 = vld [vmem:[#allocation4 + $0x1f0] sm:$0xff]
    %533 = vmatpush.msra.mxu0 %v530
    %534 = vmatpush.msra.mxu0 %v527
    %535 = vmatpush.msra.mxu0 %v524
    %536 = vmatpush.msra.mxu0 %v521
    %537 = vmatpush.msra.mxu0 %v518
    %538 = vmatpush.msra.mxu0 %v515
    %539 = vmatpush.msra.mxu0 %v512
    %540 = vmatpush.msra.mxu0 %v509
    %541 = vmatpush.msra.mxu0 %v506
    %542 = vmatpush.msra.mxu0 %v503
    %543 = vmatpush.msra.mxu0 %v500
    %544 = vmatpush.msra.mxu0 %v497
    %545 = vmatpush.msra.mxu0 %v494
    %546 = vmatpush.msra.mxu0 %v491
    %547 = vmatpush.msra.mxu0 %v488
    %548 = vmatpush.msra.mxu0 %v485
    %549 = vmatmul.f32.gmra.mxu0 %v477
    %v550 = vpop.f32.mrf.mxu0
    %v551 = vadd.f32 0.0, %v550
    %552 = vdwg.mxu0
    %553 = vmatpush.msra.mxu0 %v531
    %554 = vmatpush.msra.mxu0 %v528
    %555 = vmatpush.msra.mxu0 %v525
    %556 = vmatpush.msra.mxu0 %v522
    %557 = vmatpush.msra.mxu0 %v519
    %558 = vmatpush.msra.mxu0 %v516
    %559 = vmatpush.msra.mxu0 %v513
    %560 = vmatpush.msra.mxu0 %v510
    %561 = vmatpush.msra.mxu0 %v507
    %562 = vmatpush.msra.mxu0 %v504
    %563 = vmatpush.msra.mxu0 %v501
    %564 = vmatpush.msra.mxu0 %v498
    %565 = vmatpush.msra.mxu0 %v495
    %566 = vmatpush.msra.mxu0 %v492
    %567 = vmatpush.msra.mxu0 %v489
    %568 = vmatpush.msra.mxu0 %v486
    %569 = vmatmul.f32.gmra.mxu0 %v477
    %v570 = vpop.f32.mrf.mxu0
    %v571 = vadd.f32 0.0, %v570
    %572 = vdwg.mxu0
    %573 = vmatpush.msra.mxu0 %v532
    %574 = vmatpush.msra.mxu0 %v529
    %575 = vmatpush.msra.mxu0 %v526
    %576 = vmatpush.msra.mxu0 %v523
    %577 = vmatpush.msra.mxu0 %v520
    %578 = vmatpush.msra.mxu0 %v517
    %579 = vmatpush.msra.mxu0 %v514
    %580 = vmatpush.msra.mxu0 %v511
    %581 = vmatpush.msra.mxu0 %v508
    %582 = vmatpush.msra.mxu0 %v505
    %583 = vmatpush.msra.mxu0 %v502
    %584 = vmatpush.msra.mxu0 %v499
    %585 = vmatpush.msra.mxu0 %v496
    %586 = vmatpush.msra.mxu0 %v493
    %587 = vmatpush.msra.mxu0 %v490
    %588 = vmatpush.msra.mxu0 %v487
    %589 = vmatmul.f32.gmra.mxu0 %v477
    %v590 = vpop.f32.mrf.mxu0
    %v591 = vadd.f32 0.0, %v590
    %592 = vdwg.mxu0
    %v593 = vadd.f32 %v481, %v551
    %v594 = vadd.f32 %v482, %v571
    %v595 = vadd.f32 %v483, %v591
    %v596 = vld [vmem:[#allocation4 + $0x18] sm:$0xff]
    %v597 = vld [vmem:[#allocation4 + $0x38] sm:$0xff]
    %v598 = vld [vmem:[#allocation4 + $0x58] sm:$0xff]
    %v599 = vld [vmem:[#allocation4 + $0x78] sm:$0xff]
    %v600 = vld [vmem:[#allocation4 + $0x98] sm:$0xff]
    %v601 = vld [vmem:[#allocation4 + $0xb8] sm:$0xff]
    %v602 = vld [vmem:[#allocation4 + $0xd8] sm:$0xff]
    %v603 = vld [vmem:[#allocation4 + $0xf8] sm:$0xff]
    %v604 = vld [vmem:[#allocation4 + $0x118] sm:$0xff]
    %v605 = vld [vmem:[#allocation4 + $0x138] sm:$0xff]
    %v606 = vld [vmem:[#allocation4 + $0x158] sm:$0xff]
    %v607 = vld [vmem:[#allocation4 + $0x178] sm:$0xff]
    %v608 = vld [vmem:[#allocation4 + $0x198] sm:$0xff]
    %v609 = vld [vmem:[#allocation4 + $0x1b8] sm:$0xff]
    %v610 = vld [vmem:[#allocation4 + $0x1d8] sm:$0xff]
    %v611 = vld [vmem:[#allocation4 + $0x1f8] sm:$0xff]
    %612 = vmatpush.msra.mxu0 %v611
    %613 = vmatpush.msra.mxu0 %v610
    %614 = vmatpush.msra.mxu0 %v609
    %615 = vmatpush.msra.mxu0 %v608
    %616 = vmatpush.msra.mxu0 %v607
    %617 = vmatpush.msra.mxu0 %v606
    %618 = vmatpush.msra.mxu0 %v605
    %619 = vmatpush.msra.mxu0 %v604
    %620 = vmatpush.msra.mxu0 %v603
    %621 = vmatpush.msra.mxu0 %v602
    %622 = vmatpush.msra.mxu0 %v601
    %623 = vmatpush.msra.mxu0 %v600
    %624 = vmatpush.msra.mxu0 %v599
    %625 = vmatpush.msra.mxu0 %v598
    %626 = vmatpush.msra.mxu0 %v597
    %627 = vmatpush.msra.mxu0 %v596
    %628 = vmatmul.f32.gmra.mxu0 %v477
    %v629 = vpop.f32.mrf.mxu0
    %v630 = vadd.f32 0.0, %v629
    %631 = vdwg.mxu0
    %v632 = vadd.f32 %v484, %v630
    %v633 = vxor.u32 %v593, 2147483648
    %v634 = vxor.u32 %v594, 2147483648
    %v635 = vxor.u32 %v595, 2147483648
    %v636 = vmul.f32 %v633, 1.442695
    %v637 = vpow.pop %v636
    %v638 = vmul.f32 %v634, 1.442695
    %v639 = vpow.pop %v638
    %v640 = vmul.f32 %v635, 1.442695
    %v641 = vpow.pop %v640
    %v642 = vadd.f32 %v637, 1.0
    %v643 = vadd.f32 %v639, 1.0
    %v644 = vadd.f32 %v641, 1.0
    %v645 = vrcp.pop %v642
    %v646 = vmul.f32 %v642, %v645
    %v647 = vsub.f32 1.0, %v646
    %v648 = vmul.f32 %v645, %v647
    %v649 = vadd.f32 %v645, %v648
    %vm650 = vweird.f32 %v642
    %vm651 = vweird.f32 %v645
    %vm652 = vmor %vm650, %vm651
    %v653 = vsel %vm652, %v645, %v649
    %v654 = vand.u32 2147483647, %v642
    %vm655 = vcmp.eq.f32.partialorder %v654, 8.507059e+37
    %v656 = vand.u32 %v642, 2147483648
    %v657 = vor.u32 1.1754944e-38, %v656
    %v658 = vsel %vm655, %v657, %v653
    %v659 = vmul.f32 1.0, %v658
    %v660 = vrcp.pop %v643
    %v661 = vmul.f32 %v643, %v660
    %v662 = vsub.f32 1.0, %v661
    %v663 = vmul.f32 %v660, %v662
    %v664 = vadd.f32 %v660, %v663
    %vm665 = vweird.f32 %v643
    %vm666 = vweird.f32 %v660
    %vm667 = vmor %vm665, %vm666
    %v668 = vsel %vm667, %v660, %v664
    %v669 = vand.u32 2147483647, %v643
    %vm670 = vcmp.eq.f32.partialorder %v669, 8.507059e+37
    %v671 = vand.u32 %v643, 2147483648
    %v672 = vor.u32 1.1754944e-38, %v671
    %v673 = vsel %vm670, %v672, %v668
    %v674 = vmul.f32 1.0, %v673
    %v675 = vrcp.pop %v644
    %v676 = vmul.f32 %v644, %v675
    %v677 = vsub.f32 1.0, %v676
    %v678 = vmul.f32 %v675, %v677
    %v679 = vadd.f32 %v675, %v678
    %vm680 = vweird.f32 %v644
    %vm681 = vweird.f32 %v675
    %vm682 = vmor %vm680, %vm681
    %v683 = vsel %vm682, %v675, %v679
    %v684 = vand.u32 2147483647, %v644
    %vm685 = vcmp.eq.f32.partialorder %v684, 8.507059e+37
    %v686 = vand.u32 %v644, 2147483648
    %v687 = vor.u32 1.1754944e-38, %v686
    %v688 = vsel %vm685, %v687, %v683
    %v689 = vmul.f32 1.0, %v688
    %v690 = vtanh.pop %v632
    %v691 = vmul.f32 %v674, %v475
    %v692 = vmul.f32 %v659, %v690
    %v693 = vadd.f32 %v691, %v692
    %v694 = vtanh.pop %v693
    %v695 = vmul.f32 %v689, %v694
    %s696 = scalar_lea.vmem %s4, 16
    %697 = vst [vmem:[%s696] sm:$0xff] %v695
    %s698 = scalar_lea.vmem %s0, 96
    %v699 = vld [vmem:[%s698] sm:$0xff]
    %v700 = vld [vmem:[%s698 + $0x8] sm:$0xff]
    %v701 = vld [vmem:[%s698 + $0x10] sm:$0xff]
    %v702 = vld [vmem:[%s698 + $0x18] sm:$0xff]
    %v703 = vld [vmem:[#allocation4] sm:$0xff]
    %v704 = vld [vmem:[#allocation4 + $0x8] sm:$0xff]
    %v705 = vld [vmem:[#allocation4 + $0x10] sm:$0xff]
    %v706 = vld [vmem:[#allocation4 + $0x20] sm:$0xff]
    %v707 = vld [vmem:[#allocation4 + $0x28] sm:$0xff]
    %v708 = vld [vmem:[#allocation4 + $0x30] sm:$0xff]
    %v709 = vld [vmem:[#allocation4 + $0x40] sm:$0xff]
    %v710 = vld [vmem:[#allocation4 + $0x48] sm:$0xff]
    %v711 = vld [vmem:[#allocation4 + $0x50] sm:$0xff]
    %v712 = vld [vmem:[#allocation4 + $0x60] sm:$0xff]
    %v713 = vld [vmem:[#allocation4 + $0x68] sm:$0xff]
    %v714 = vld [vmem:[#allocation4 + $0x70] sm:$0xff]
    %v715 = vld [vmem:[#allocation4 + $0x80] sm:$0xff]
    %v716 = vld [vmem:[#allocation4 + $0x88] sm:$0xff]
    %v717 = vld [vmem:[#allocation4 + $0x90] sm:$0xff]
    %v718 = vld [vmem:[#allocation4 + $0xa0] sm:$0xff]
    %v719 = vld [vmem:[#allocation4 + $0xa8] sm:$0xff]
    %v720 = vld [vmem:[#allocation4 + $0xb0] sm:$0xff]
    %v721 = vld [vmem:[#allocation4 + $0xc0] sm:$0xff]
    %v722 = vld [vmem:[#allocation4 + $0xc8] sm:$0xff]
    %v723 = vld [vmem:[#allocation4 + $0xd0] sm:$0xff]
    %v724 = vld [vmem:[#allocation4 + $0xe0] sm:$0xff]
    %v725 = vld [vmem:[#allocation4 + $0xe8] sm:$0xff]
    %v726 = vld [vmem:[#allocation4 + $0xf0] sm:$0xff]
    %v727 = vld [vmem:[#allocation4 + $0x100] sm:$0xff]
    %v728 = vld [vmem:[#allocation4 + $0x108] sm:$0xff]
    %v729 = vld [vmem:[#allocation4 + $0x110] sm:$0xff]
    %v730 = vld [vmem:[#allocation4 + $0x120] sm:$0xff]
    %v731 = vld [vmem:[#allocation4 + $0x128] sm:$0xff]
    %v732 = vld [vmem:[#allocation4 + $0x130] sm:$0xff]
    %v733 = vld [vmem:[#allocation4 + $0x140] sm:$0xff]
    %v734 = vld [vmem:[#allocation4 + $0x148] sm:$0xff]
    %v735 = vld [vmem:[#allocation4 + $0x150] sm:$0xff]
    %v736 = vld [vmem:[#allocation4 + $0x160] sm:$0xff]
    %v737 = vld [vmem:[#allocation4 + $0x168] sm:$0xff]
    %v738 = vld [vmem:[#allocation4 + $0x170] sm:$0xff]
    %v739 = vld [vmem:[#allocation4 + $0x180] sm:$0xff]
    %v740 = vld [vmem:[#allocation4 + $0x188] sm:$0xff]
    %v741 = vld [vmem:[#allocation4 + $0x190] sm:$0xff]
    %v742 = vld [vmem:[#allocation4 + $0x1a0] sm:$0xff]
    %v743 = vld [vmem:[#allocation4 + $0x1a8] sm:$0xff]
    %v744 = vld [vmem:[#allocation4 + $0x1b0] sm:$0xff]
    %v745 = vld [vmem:[#allocation4 + $0x1c0] sm:$0xff]
    %v746 = vld [vmem:[#allocation4 + $0x1c8] sm:$0xff]
    %v747 = vld [vmem:[#allocation4 + $0x1d0] sm:$0xff]
    %v748 = vld [vmem:[#allocation4 + $0x1e0] sm:$0xff]
    %v749 = vld [vmem:[#allocation4 + $0x1e8] sm:$0xff]
    %v750 = vld [vmem:[#allocation4 + $0x1f0] sm:$0xff]
    %751 = vmatpush.msra.mxu0 %v748
    %752 = vmatpush.msra.mxu0 %v745
    %753 = vmatpush.msra.mxu0 %v742
    %754 = vmatpush.msra.mxu0 %v739
    %755 = vmatpush.msra.mxu0 %v736
    %756 = vmatpush.msra.mxu0 %v733
    %757 = vmatpush.msra.mxu0 %v730
    %758 = vmatpush.msra.mxu0 %v727
    %759 = vmatpush.msra.mxu0 %v724
    %760 = vmatpush.msra.mxu0 %v721
    %761 = vmatpush.msra.mxu0 %v718
    %762 = vmatpush.msra.mxu0 %v715
    %763 = vmatpush.msra.mxu0 %v712
    %764 = vmatpush.msra.mxu0 %v709
    %765 = vmatpush.msra.mxu0 %v706
    %766 = vmatpush.msra.mxu0 %v703
    %767 = vmatmul.f32.gmra.mxu0 %v695
    %v768 = vpop.f32.mrf.mxu0
    %v769 = vadd.f32 0.0, %v768
    %770 = vdwg.mxu0
    %771 = vmatpush.msra.mxu0 %v749
    %772 = vmatpush.msra.mxu0 %v746
    %773 = vmatpush.msra.mxu0 %v743
    %774 = vmatpush.msra.mxu0 %v740
    %775 = vmatpush.msra.mxu0 %v737
    %776 = vmatpush.msra.mxu0 %v734
    %777 = vmatpush.msra.mxu0 %v731
    %778 = vmatpush.msra.mxu0 %v728
    %779 = vmatpush.msra.mxu0 %v725
    %780 = vmatpush.msra.mxu0 %v722
    %781 = vmatpush.msra.mxu0 %v719
    %782 = vmatpush.msra.mxu0 %v716
    %783 = vmatpush.msra.mxu0 %v713
    %784 = vmatpush.msra.mxu0 %v710
    %785 = vmatpush.msra.mxu0 %v707
    %786 = vmatpush.msra.mxu0 %v704
    %787 = vmatmul.f32.gmra.mxu0 %v695
    %v788 = vpop.f32.mrf.mxu0
    %v789 = vadd.f32 0.0, %v788
    %790 = vdwg.mxu0
    %791 = vmatpush.msra.mxu0 %v750
    %792 = vmatpush.msra.mxu0 %v747
    %793 = vmatpush.msra.mxu0 %v744
    %794 = vmatpush.msra.mxu0 %v741
    %795 = vmatpush.msra.mxu0 %v738
    %796 = vmatpush.msra.mxu0 %v735
    %797 = vmatpush.msra.mxu0 %v732
    %798 = vmatpush.msra.mxu0 %v729
    %799 = vmatpush.msra.mxu0 %v726
    %800 = vmatpush.msra.mxu0 %v723
    %801 = vmatpush.msra.mxu0 %v720
    %802 = vmatpush.msra.mxu0 %v717
    %803 = vmatpush.msra.mxu0 %v714
    %804 = vmatpush.msra.mxu0 %v711
    %805 = vmatpush.msra.mxu0 %v708
    %806 = vmatpush.msra.mxu0 %v705
    %807 = vmatmul.f32.gmra.mxu0 %v695
    %v808 = vpop.f32.mrf.mxu0
    %v809 = vadd.f32 0.0, %v808
    %810 = vdwg.mxu0
    %v811 = vadd.f32 %v699, %v769
    %v812 = vadd.f32 %v700, %v789
    %v813 = vadd.f32 %v701, %v809
    %v814 = vld [vmem:[#allocation4 + $0x18] sm:$0xff]
    %v815 = vld [vmem:[#allocation4 + $0x38] sm:$0xff]
    %v816 = vld [vmem:[#allocation4 + $0x58] sm:$0xff]
    %v817 = vld [vmem:[#allocation4 + $0x78] sm:$0xff]
    %v818 = vld [vmem:[#allocation4 + $0x98] sm:$0xff]
    %v819 = vld [vmem:[#allocation4 + $0xb8] sm:$0xff]
    %v820 = vld [vmem:[#allocation4 + $0xd8] sm:$0xff]
    %v821 = vld [vmem:[#allocation4 + $0xf8] sm:$0xff]
    %v822 = vld [vmem:[#allocation4 + $0x118] sm:$0xff]
    %v823 = vld [vmem:[#allocation4 + $0x138] sm:$0xff]
    %v824 = vld [vmem:[#allocation4 + $0x158] sm:$0xff]
    %v825 = vld [vmem:[#allocation4 + $0x178] sm:$0xff]
    %v826 = vld [vmem:[#allocation4 + $0x198] sm:$0xff]
    %v827 = vld [vmem:[#allocation4 + $0x1b8] sm:$0xff]
    %v828 = vld [vmem:[#allocation4 + $0x1d8] sm:$0xff]
    %v829 = vld [vmem:[#allocation4 + $0x1f8] sm:$0xff]
    %830 = vmatpush.msra.mxu0 %v829
    %831 = vmatpush.msra.mxu0 %v828
    %832 = vmatpush.msra.mxu0 %v827
    %833 = vmatpush.msra.mxu0 %v826
    %834 = vmatpush.msra.mxu0 %v825
    %835 = vmatpush.msra.mxu0 %v824
    %836 = vmatpush.msra.mxu0 %v823
    %837 = vmatpush.msra.mxu0 %v822
    %838 = vmatpush.msra.mxu0 %v821
    %839 = vmatpush.msra.mxu0 %v820
    %840 = vmatpush.msra.mxu0 %v819
    %841 = vmatpush.msra.mxu0 %v818
    %842 = vmatpush.msra.mxu0 %v817
    %843 = vmatpush.msra.mxu0 %v816
    %844 = vmatpush.msra.mxu0 %v815
    %845 = vmatpush.msra.mxu0 %v814
    %846 = vmatmul.f32.gmra.mxu0 %v695
    %v847 = vpop.f32.mrf.mxu0
    %v848 = vadd.f32 0.0, %v847
    %849 = vdwg.mxu0
    %v850 = vadd.f32 %v702, %v848
    %v851 = vxor.u32 %v811, 2147483648
    %v852 = vxor.u32 %v812, 2147483648
    %v853 = vxor.u32 %v813, 2147483648
    %v854 = vmul.f32 %v851, 1.442695
    %v855 = vpow.pop %v854
    %v856 = vmul.f32 %v852, 1.442695
    %v857 = vpow.pop %v856
    %v858 = vmul.f32 %v853, 1.442695
    %v859 = vpow.pop %v858
    %v860 = vadd.f32 %v855, 1.0
    %v861 = vadd.f32 %v857, 1.0
    %v862 = vadd.f32 %v859, 1.0
    %v863 = vrcp.pop %v860
    %v864 = vmul.f32 %v860, %v863
    %v865 = vsub.f32 1.0, %v864
    %v866 = vmul.f32 %v863, %v865
    %v867 = vadd.f32 %v863, %v866
    %vm868 = vweird.f32 %v860
    %vm869 = vweird.f32 %v863
    %vm870 = vmor %vm868, %vm869
    %v871 = vsel %vm870, %v863, %v867
    %v872 = vand.u32 2147483647, %v860
    %vm873 = vcmp.eq.f32.partialorder %v872, 8.507059e+37
    %v874 = vand.u32 %v860, 2147483648
    %v875 = vor.u32 1.1754944e-38, %v874
    %v876 = vsel %vm873, %v875, %v871
    %v877 = vmul.f32 1.0, %v876
    %v878 = vrcp.pop %v861
    %v879 = vmul.f32 %v861, %v878
    %v880 = vsub.f32 1.0, %v879
    %v881 = vmul.f32 %v878, %v880
    %v882 = vadd.f32 %v878, %v881
    %vm883 = vweird.f32 %v861
    %vm884 = vweird.f32 %v878
    %vm885 = vmor %vm883, %vm884
    %v886 = vsel %vm885, %v878, %v882
    %v887 = vand.u32 2147483647, %v861
    %vm888 = vcmp.eq.f32.partialorder %v887, 8.507059e+37
    %v889 = vand.u32 %v861, 2147483648
    %v890 = vor.u32 1.1754944e-38, %v889
    %v891 = vsel %vm888, %v890, %v886
    %v892 = vmul.f32 1.0, %v891
    %v893 = vrcp.pop %v862
    %v894 = vmul.f32 %v862, %v893
    %v895 = vsub.f32 1.0, %v894
    %v896 = vmul.f32 %v893, %v895
    %v897 = vadd.f32 %v893, %v896
    %vm898 = vweird.f32 %v862
    %vm899 = vweird.f32 %v893
    %vm900 = vmor %vm898, %vm899
    %v901 = vsel %vm900, %v893, %v897
    %v902 = vand.u32 2147483647, %v862
    %vm903 = vcmp.eq.f32.partialorder %v902, 8.507059e+37
    %v904 = vand.u32 %v862, 2147483648
    %v905 = vor.u32 1.1754944e-38, %v904
    %v906 = vsel %vm903, %v905, %v901
    %v907 = vmul.f32 1.0, %v906
    %v908 = vtanh.pop %v850
    %v909 = vmul.f32 %v892, %v693
    %v910 = vmul.f32 %v877, %v908
    %v911 = vadd.f32 %v909, %v910
    %v912 = vtanh.pop %v911
    %v913 = vmul.f32 %v907, %v912
    %s914 = scalar_lea.vmem %s4, 24
    %915 = vst [vmem:[%s914] sm:$0xff] %v913
    %s916 = scalar_lea.vmem %s0, 128
    %v917 = vld [vmem:[%s916] sm:$0xff]
    %v918 = vld [vmem:[%s916 + $0x8] sm:$0xff]
    %v919 = vld [vmem:[%s916 + $0x10] sm:$0xff]
    %v920 = vld [vmem:[%s916 + $0x18] sm:$0xff]
    %v921 = vld [vmem:[#allocation4] sm:$0xff]
    %v922 = vld [vmem:[#allocation4 + $0x8] sm:$0xff]
    %v923 = vld [vmem:[#allocation4 + $0x10] sm:$0xff]
    %v924 = vld [vmem:[#allocation4 + $0x20] sm:$0xff]
    %v925 = vld [vmem:[#allocation4 + $0x28] sm:$0xff]
    %v926 = vld [vmem:[#allocation4 + $0x30] sm:$0xff]
    %v927 = vld [vmem:[#allocation4 + $0x40] sm:$0xff]
    %v928 = vld [vmem:[#allocation4 + $0x48] sm:$0xff]
    %v929 = vld [vmem:[#allocation4 + $0x50] sm:$0xff]
    %v930 = vld [vmem:[#allocation4 + $0x60] sm:$0xff]
    %v931 = vld [vmem:[#allocation4 + $0x68] sm:$0xff]
    %v932 = vld [vmem:[#allocation4 + $0x70] sm:$0xff]
    %v933 = vld [vmem:[#allocation4 + $0x80] sm:$0xff]
    %v934 = vld [vmem:[#allocation4 + $0x88] sm:$0xff]
    %v935 = vld [vmem:[#allocation4 + $0x90] sm:$0xff]
    %v936 = vld [vmem:[#allocation4 + $0xa0] sm:$0xff]
    %v937 = vld [vmem:[#allocation4 + $0xa8] sm:$0xff]
    %v938 = vld [vmem:[#allocation4 + $0xb0] sm:$0xff]
    %v939 = vld [vmem:[#allocation4 + $0xc0] sm:$0xff]
    %v940 = vld [vmem:[#allocation4 + $0xc8] sm:$0xff]
    %v941 = vld [vmem:[#allocation4 + $0xd0] sm:$0xff]
    %v942 = vld [vmem:[#allocation4 + $0xe0] sm:$0xff]
    %v943 = vld [vmem:[#allocation4 + $0xe8] sm:$0xff]
    %v944 = vld [vmem:[#allocation4 + $0xf0] sm:$0xff]
    %v945 = vld [vmem:[#allocation4 + $0x100] sm:$0xff]
    %v946 = vld [vmem:[#allocation4 + $0x108] sm:$0xff]
    %v947 = vld [vmem:[#allocation4 + $0x110] sm:$0xff]
    %v948 = vld [vmem:[#allocation4 + $0x120] sm:$0xff]
    %v949 = vld [vmem:[#allocation4 + $0x128] sm:$0xff]
    %v950 = vld [vmem:[#allocation4 + $0x130] sm:$0xff]
    %v951 = vld [vmem:[#allocation4 + $0x140] sm:$0xff]
    %v952 = vld [vmem:[#allocation4 + $0x148] sm:$0xff]
    %v953 = vld [vmem:[#allocation4 + $0x150] sm:$0xff]
    %v954 = vld [vmem:[#allocation4 + $0x160] sm:$0xff]
    %v955 = vld [vmem:[#allocation4 + $0x168] sm:$0xff]
    %v956 = vld [vmem:[#allocation4 + $0x170] sm:$0xff]
    %v957 = vld [vmem:[#allocation4 + $0x180] sm:$0xff]
    %v958 = vld [vmem:[#allocation4 + $0x188] sm:$0xff]
    %v959 = vld [vmem:[#allocation4 + $0x190] sm:$0xff]
    %v960 = vld [vmem:[#allocation4 + $0x1a0] sm:$0xff]
    %v961 = vld [vmem:[#allocation4 + $0x1a8] sm:$0xff]
    %v962 = vld [vmem:[#allocation4 + $0x1b0] sm:$0xff]
    %v963 = vld [vmem:[#allocation4 + $0x1c0] sm:$0xff]
    %v964 = vld [vmem:[#allocation4 + $0x1c8] sm:$0xff]
    %v965 = vld [vmem:[#allocation4 + $0x1d0] sm:$0xff]
    %v966 = vld [vmem:[#allocation4 + $0x1e0] sm:$0xff]
    %v967 = vld [vmem:[#allocation4 + $0x1e8] sm:$0xff]
    %v968 = vld [vmem:[#allocation4 + $0x1f0] sm:$0xff]
    %969 = vmatpush.msra.mxu0 %v966
    %970 = vmatpush.msra.mxu0 %v963
    %971 = vmatpush.msra.mxu0 %v960
    %972 = vmatpush.msra.mxu0 %v957
    %973 = vmatpush.msra.mxu0 %v954
    %974 = vmatpush.msra.mxu0 %v951
    %975 = vmatpush.msra.mxu0 %v948
    %976 = vmatpush.msra.mxu0 %v945
    %977 = vmatpush.msra.mxu0 %v942
    %978 = vmatpush.msra.mxu0 %v939
    %979 = vmatpush.msra.mxu0 %v936
    %980 = vmatpush.msra.mxu0 %v933
    %981 = vmatpush.msra.mxu0 %v930
    %982 = vmatpush.msra.mxu0 %v927
    %983 = vmatpush.msra.mxu0 %v924
    %984 = vmatpush.msra.mxu0 %v921
    %985 = vmatmul.f32.gmra.mxu0 %v913
    %v986 = vpop.f32.mrf.mxu0
    %v987 = vadd.f32 0.0, %v986
    %988 = vdwg.mxu0
    %989 = vmatpush.msra.mxu0 %v967
    %990 = vmatpush.msra.mxu0 %v964
    %991 = vmatpush.msra.mxu0 %v961
    %992 = vmatpush.msra.mxu0 %v958
    %993 = vmatpush.msra.mxu0 %v955
    %994 = vmatpush.msra.mxu0 %v952
    %995 = vmatpush.msra.mxu0 %v949
    %996 = vmatpush.msra.mxu0 %v946
    %997 = vmatpush.msra.mxu0 %v943
    %998 = vmatpush.msra.mxu0 %v940
    %999 = vmatpush.msra.mxu0 %v937
    %1000 = vmatpush.msra.mxu0 %v934
    %1001 = vmatpush.msra.mxu0 %v931
    %1002 = vmatpush.msra.mxu0 %v928
    %1003 = vmatpush.msra.mxu0 %v925
    %1004 = vmatpush.msra.mxu0 %v922
    %1005 = vmatmul.f32.gmra.mxu0 %v913
    %v1006 = vpop.f32.mrf.mxu0
    %v1007 = vadd.f32 0.0, %v1006
    %1008 = vdwg.mxu0
    %1009 = vmatpush.msra.mxu0 %v968
    %1010 = vmatpush.msra.mxu0 %v965
    %1011 = vmatpush.msra.mxu0 %v962
    %1012 = vmatpush.msra.mxu0 %v959
    %1013 = vmatpush.msra.mxu0 %v956
    %1014 = vmatpush.msra.mxu0 %v953
    %1015 = vmatpush.msra.mxu0 %v950
    %1016 = vmatpush.msra.mxu0 %v947
    %1017 = vmatpush.msra.mxu0 %v944
    %1018 = vmatpush.msra.mxu0 %v941
    %1019 = vmatpush.msra.mxu0 %v938
    %1020 = vmatpush.msra.mxu0 %v935
    %1021 = vmatpush.msra.mxu0 %v932
    %1022 = vmatpush.msra.mxu0 %v929
    %1023 = vmatpush.msra.mxu0 %v926
    %1024 = vmatpush.msra.mxu0 %v923
    %1025 = vmatmul.f32.gmra.mxu0 %v913
    %v1026 = vpop.f32.mrf.mxu0
    %v1027 = vadd.f32 0.0, %v1026
    %1028 = vdwg.mxu0
    %v1029 = vadd.f32 %v917, %v987
    %v1030 = vadd.f32 %v918, %v1007
    %v1031 = vadd.f32 %v919, %v1027
    %v1032 = vld [vmem:[#allocation4 + $0x18] sm:$0xff]
    %v1033 = vld [vmem:[#allocation4 + $0x38] sm:$0xff]
    %v1034 = vld [vmem:[#allocation4 + $0x58] sm:$0xff]
    %v1035 = vld [vmem:[#allocation4 + $0x78] sm:$0xff]
    %v1036 = vld [vmem:[#allocation4 + $0x98] sm:$0xff]
    %v1037 = vld [vmem:[#allocation4 + $0xb8] sm:$0xff]
    %v1038 = vld [vmem:[#allocation4 + $0xd8] sm:$0xff]
    %v1039 = vld [vmem:[#allocation4 + $0xf8] sm:$0xff]
    %v1040 = vld [vmem:[#allocation4 + $0x118] sm:$0xff]
    %v1041 = vld [vmem:[#allocation4 + $0x138] sm:$0xff]
    %v1042 = vld [vmem:[#allocation4 + $0x158] sm:$0xff]
    %v1043 = vld [vmem:[#allocation4 + $0x178] sm:$0xff]
    %v1044 = vld [vmem:[#allocation4 + $0x198] sm:$0xff]
    %v1045 = vld [vmem:[#allocation4 + $0x1b8] sm:$0xff]
    %v1046 = vld [vmem:[#allocation4 + $0x1d8] sm:$0xff]
    %v1047 = vld [vmem:[#allocation4 + $0x1f8] sm:$0xff]
    %1048 = vmatpush.msra.mxu0 %v1047
    %1049 = vmatpush.msra.mxu0 %v1046
    %1050 = vmatpush.msra.mxu0 %v1045
    %1051 = vmatpush.msra.mxu0 %v1044
    %1052 = vmatpush.msra.mxu0 %v1043
    %1053 = vmatpush.msra.mxu0 %v1042
    %1054 = vmatpush.msra.mxu0 %v1041
    %1055 = vmatpush.msra.mxu0 %v1040
    %1056 = vmatpush.msra.mxu0 %v1039
    %1057 = vmatpush.msra.mxu0 %v1038
    %1058 = vmatpush.msra.mxu0 %v1037
    %1059 = vmatpush.msra.mxu0 %v1036
    %1060 = vmatpush.msra.mxu0 %v1035
    %1061 = vmatpush.msra.mxu0 %v1034
    %1062 = vmatpush.msra.mxu0 %v1033
    %1063 = vmatpush.msra.mxu0 %v1032
    %1064 = vmatmul.f32.gmra.mxu0 %v913
    %v1065 = vpop.f32.mrf.mxu0
    %v1066 = vadd.f32 0.0, %v1065
    %1067 = vdwg.mxu0
    %v1068 = vadd.f32 %v920, %v1066
    %v1069 = vxor.u32 %v1029, 2147483648
    %v1070 = vxor.u32 %v1030, 2147483648
    %v1071 = vxor.u32 %v1031, 2147483648
    %v1072 = vmul.f32 %v1069, 1.442695
    %v1073 = vpow.pop %v1072
    %v1074 = vmul.f32 %v1070, 1.442695
    %v1075 = vpow.pop %v1074
    %v1076 = vmul.f32 %v1071, 1.442695
    %v1077 = vpow.pop %v1076
    %v1078 = vadd.f32 %v1073, 1.0
    %v1079 = vadd.f32 %v1075, 1.0
    %v1080 = vadd.f32 %v1077, 1.0
    %v1081 = vrcp.pop %v1078
    %v1082 = vmul.f32 %v1078, %v1081
    %v1083 = vsub.f32 1.0, %v1082
    %v1084 = vmul.f32 %v1081, %v1083
    %v1085 = vadd.f32 %v1081, %v1084
    %vm1086 = vweird.f32 %v1078
    %vm1087 = vweird.f32 %v1081
    %vm1088 = vmor %vm1086, %vm1087
    %v1089 = vsel %vm1088, %v1081, %v1085
    %v1090 = vand.u32 2147483647, %v1078
    %vm1091 = vcmp.eq.f32.partialorder %v1090, 8.507059e+37
    %v1092 = vand.u32 %v1078, 2147483648
    %v1093 = vor.u32 1.1754944e-38, %v1092
    %v1094 = vsel %vm1091, %v1093, %v1089
    %v1095 = vmul.f32 1.0, %v1094
    %v1096 = vrcp.pop %v1079
    %v1097 = vmul.f32 %v1079, %v1096
    %v1098 = vsub.f32 1.0, %v1097
    %v1099 = vmul.f32 %v1096, %v1098
    %v1100 = vadd.f32 %v1096, %v1099
    %vm1101 = vweird.f32 %v1079
    %vm1102 = vweird.f32 %v1096
    %vm1103 = vmor %vm1101, %vm1102
    %v1104 = vsel %vm1103, %v1096, %v1100
    %v1105 = vand.u32 2147483647, %v1079
    %vm1106 = vcmp.eq.f32.partialorder %v1105, 8.507059e+37
    %v1107 = vand.u32 %v1079, 2147483648
    %v1108 = vor.u32 1.1754944e-38, %v1107
    %v1109 = vsel %vm1106, %v1108, %v1104
    %v1110 = vmul.f32 1.0, %v1109
    %v1111 = vrcp.pop %v1080
    %v1112 = vmul.f32 %v1080, %v1111
    %v1113 = vsub.f32 1.0, %v1112
    %v1114 = vmul.f32 %v1111, %v1113
    %v1115 = vadd.f32 %v1111, %v1114
    %vm1116 = vweird.f32 %v1080
    %vm1117 = vweird.f32 %v1111
    %vm1118 = vmor %vm1116, %vm1117
    %v1119 = vsel %vm1118, %v1111, %v1115
    %v1120 = vand.u32 2147483647, %v1080
    %vm1121 = vcmp.eq.f32.partialorder %v1120, 8.507059e+37
    %v1122 = vand.u32 %v1080, 2147483648
    %v1123 = vor.u32 1.1754944e-38, %v1122
    %v1124 = vsel %vm1121, %v1123, %v1119
    %v1125 = vmul.f32 1.0, %v1124
    %v1126 = vtanh.pop %v1068
    %v1127 = vmul.f32 %v1110, %v911
    %v1128 = vmul.f32 %v1095, %v1126
    %v1129 = vadd.f32 %v1127, %v1128
    %v1130 = vtanh.pop %v1129
    %v1131 = vmul.f32 %v1125, %v1130
    %s1132 = scalar_lea.vmem %s4, 32
    %1133 = vst [vmem:[%s1132] sm:$0xff] %v1131
    %s1134 = scalar_lea.vmem %s0, 160
    %v1135 = vld [vmem:[%s1134] sm:$0xff]
    %v1136 = vld [vmem:[%s1134 + $0x8] sm:$0xff]
    %v1137 = vld [vmem:[%s1134 + $0x10] sm:$0xff]
    %v1138 = vld [vmem:[%s1134 + $0x18] sm:$0xff]
    %v1139 = vld [vmem:[#allocation4] sm:$0xff]
    %v1140 = vld [vmem:[#allocation4 + $0x8] sm:$0xff]
    %v1141 = vld [vmem:[#allocation4 + $0x10] sm:$0xff]
    %v1142 = vld [vmem:[#allocation4 + $0x20] sm:$0xff]
    %v1143 = vld [vmem:[#allocation4 + $0x28] sm:$0xff]
    %v1144 = vld [vmem:[#allocation4 + $0x30] sm:$0xff]
    %v1145 = vld [vmem:[#allocation4 + $0x40] sm:$0xff]
    %v1146 = vld [vmem:[#allocation4 + $0x48] sm:$0xff]
    %v1147 = vld [vmem:[#allocation4 + $0x50] sm:$0xff]
    %v1148 = vld [vmem:[#allocation4 + $0x60] sm:$0xff]
    %v1149 = vld [vmem:[#allocation4 + $0x68] sm:$0xff]
    %v1150 = vld [vmem:[#allocation4 + $0x70] sm:$0xff]
    %v1151 = vld [vmem:[#allocation4 + $0x80] sm:$0xff]
    %v1152 = vld [vmem:[#allocation4 + $0x88] sm:$0xff]
    %v1153 = vld [vmem:[#allocation4 + $0x90] sm:$0xff]
    %v1154 = vld [vmem:[#allocation4 + $0xa0] sm:$0xff]
    %v1155 = vld [vmem:[#allocation4 + $0xa8] sm:$0xff]
    %v1156 = vld [vmem:[#allocation4 + $0xb0] sm:$0xff]
    %v1157 = vld [vmem:[#allocation4 + $0xc0] sm:$0xff]
    %v1158 = vld [vmem:[#allocation4 + $0xc8] sm:$0xff]
    %v1159 = vld [vmem:[#allocation4 + $0xd0] sm:$0xff]
    %v1160 = vld [vmem:[#allocation4 + $0xe0] sm:$0xff]
    %v1161 = vld [vmem:[#allocation4 + $0xe8] sm:$0xff]
    %v1162 = vld [vmem:[#allocation4 + $0xf0] sm:$0xff]
    %v1163 = vld [vmem:[#allocation4 + $0x100] sm:$0xff]
    %v1164 = vld [vmem:[#allocation4 + $0x108] sm:$0xff]
    %v1165 = vld [vmem:[#allocation4 + $0x110] sm:$0xff]
    %v1166 = vld [vmem:[#allocation4 + $0x120] sm:$0xff]
    %v1167 = vld [vmem:[#allocation4 + $0x128] sm:$0xff]
    %v1168 = vld [vmem:[#allocation4 + $0x130] sm:$0xff]
    %v1169 = vld [vmem:[#allocation4 + $0x140] sm:$0xff]
    %v1170 = vld [vmem:[#allocation4 + $0x148] sm:$0xff]
    %v1171 = vld [vmem:[#allocation4 + $0x150] sm:$0xff]
    %v1172 = vld [vmem:[#allocation4 + $0x160] sm:$0xff]
    %v1173 = vld [vmem:[#allocation4 + $0x168] sm:$0xff]
    %v1174 = vld [vmem:[#allocation4 + $0x170] sm:$0xff]
    %v1175 = vld [vmem:[#allocation4 + $0x180] sm:$0xff]
    %v1176 = vld [vmem:[#allocation4 + $0x188] sm:$0xff]
    %v1177 = vld [vmem:[#allocation4 + $0x190] sm:$0xff]
    %v1178 = vld [vmem:[#allocation4 + $0x1a0] sm:$0xff]
    %v1179 = vld [vmem:[#allocation4 + $0x1a8] sm:$0xff]
    %v1180 = vld [vmem:[#allocation4 + $0x1b0] sm:$0xff]
    %v1181 = vld [vmem:[#allocation4 + $0x1c0] sm:$0xff]
    %v1182 = vld [vmem:[#allocation4 + $0x1c8] sm:$0xff]
    %v1183 = vld [vmem:[#allocation4 + $0x1d0] sm:$0xff]
    %v1184 = vld [vmem:[#allocation4 + $0x1e0] sm:$0xff]
    %v1185 = vld [vmem:[#allocation4 + $0x1e8] sm:$0xff]
    %v1186 = vld [vmem:[#allocation4 + $0x1f0] sm:$0xff]
    %1187 = vmatpush.msra.mxu0 %v1184
    %1188 = vmatpush.msra.mxu0 %v1181
    %1189 = vmatpush.msra.mxu0 %v1178
    %1190 = vmatpush.msra.mxu0 %v1175
    %1191 = vmatpush.msra.mxu0 %v1172
    %1192 = vmatpush.msra.mxu0 %v1169
    %1193 = vmatpush.msra.mxu0 %v1166
    %1194 = vmatpush.msra.mxu0 %v1163
    %1195 = vmatpush.msra.mxu0 %v1160
    %1196 = vmatpush.msra.mxu0 %v1157
    %1197 = vmatpush.msra.mxu0 %v1154
    %1198 = vmatpush.msra.mxu0 %v1151
    %1199 = vmatpush.msra.mxu0 %v1148
    %1200 = vmatpush.msra.mxu0 %v1145
    %1201 = vmatpush.msra.mxu0 %v1142
    %1202 = vmatpush.msra.mxu0 %v1139
    %1203 = vmatmul.f32.gmra.mxu0 %v1131
    %v1204 = vpop.f32.mrf.mxu0
    %v1205 = vadd.f32 0.0, %v1204
    %1206 = vdwg.mxu0
    %1207 = vmatpush.msra.mxu0 %v1185
    %1208 = vmatpush.msra.mxu0 %v1182
    %1209 = vmatpush.msra.mxu0 %v1179
    %1210 = vmatpush.msra.mxu0 %v1176
    %1211 = vmatpush.msra.mxu0 %v1173
    %1212 = vmatpush.msra.mxu0 %v1170
    %1213 = vmatpush.msra.mxu0 %v1167
    %1214 = vmatpush.msra.mxu0 %v1164
    %1215 = vmatpush.msra.mxu0 %v1161
    %1216 = vmatpush.msra.mxu0 %v1158
    %1217 = vmatpush.msra.mxu0 %v1155
    %1218 = vmatpush.msra.mxu0 %v1152
    %1219 = vmatpush.msra.mxu0 %v1149
    %1220 = vmatpush.msra.mxu0 %v1146
    %1221 = vmatpush.msra.mxu0 %v1143
    %1222 = vmatpush.msra.mxu0 %v1140
    %1223 = vmatmul.f32.gmra.mxu0 %v1131
    %v1224 = vpop.f32.mrf.mxu0
    %v1225 = vadd.f32 0.0, %v1224
    %1226 = vdwg.mxu0
    %1227 = vmatpush.msra.mxu0 %v1186
    %1228 = vmatpush.msra.mxu0 %v1183
    %1229 = vmatpush.msra.mxu0 %v1180
    %1230 = vmatpush.msra.mxu0 %v1177
    %1231 = vmatpush.msra.mxu0 %v1174
    %1232 = vmatpush.msra.mxu0 %v1171
    %1233 = vmatpush.msra.mxu0 %v1168
    %1234 = vmatpush.msra.mxu0 %v1165
    %1235 = vmatpush.msra.mxu0 %v1162
    %1236 = vmatpush.msra.mxu0 %v1159
    %1237 = vmatpush.msra.mxu0 %v1156
    %1238 = vmatpush.msra.mxu0 %v1153
    %1239 = vmatpush.msra.mxu0 %v1150
    %1240 = vmatpush.msra.mxu0 %v1147
    %1241 = vmatpush.msra.mxu0 %v1144
    %1242 = vmatpush.msra.mxu0 %v1141
    %1243 = vmatmul.f32.gmra.mxu0 %v1131
    %v1244 = vpop.f32.mrf.mxu0
    %v1245 = vadd.f32 0.0, %v1244
    %1246 = vdwg.mxu0
    %v1247 = vadd.f32 %v1135, %v1205
    %v1248 = vadd.f32 %v1136, %v1225
    %v1249 = vadd.f32 %v1137, %v1245
    %v1250 = vld [vmem:[#allocation4 + $0x18] sm:$0xff]
    %v1251 = vld [vmem:[#allocation4 + $0x38] sm:$0xff]
    %v1252 = vld [vmem:[#allocation4 + $0x58] sm:$0xff]
    %v1253 = vld [vmem:[#allocation4 + $0x78] sm:$0xff]
    %v1254 = vld [vmem:[#allocation4 + $0x98] sm:$0xff]
    %v1255 = vld [vmem:[#allocation4 + $0xb8] sm:$0xff]
    %v1256 = vld [vmem:[#allocation4 + $0xd8] sm:$0xff]
    %v1257 = vld [vmem:[#allocation4 + $0xf8] sm:$0xff]
    %v1258 = vld [vmem:[#allocation4 + $0x118] sm:$0xff]
    %v1259 = vld [vmem:[#allocation4 + $0x138] sm:$0xff]
    %v1260 = vld [vmem:[#allocation4 + $0x158] sm:$0xff]
    %v1261 = vld [vmem:[#allocation4 + $0x178] sm:$0xff]
    %v1262 = vld [vmem:[#allocation4 + $0x198] sm:$0xff]
    %v1263 = vld [vmem:[#allocation4 + $0x1b8] sm:$0xff]
    %v1264 = vld [vmem:[#allocation4 + $0x1d8] sm:$0xff]
    %v1265 = vld [vmem:[#allocation4 + $0x1f8] sm:$0xff]
    %1266 = vmatpush.msra.mxu0 %v1265
    %1267 = vmatpush.msra.mxu0 %v1264
    %1268 = vmatpush.msra.mxu0 %v1263
    %1269 = vmatpush.msra.mxu0 %v1262
    %1270 = vmatpush.msra.mxu0 %v1261
    %1271 = vmatpush.msra.mxu0 %v1260
    %1272 = vmatpush.msra.mxu0 %v1259
    %1273 = vmatpush.msra.mxu0 %v1258
    %1274 = vmatpush.msra.mxu0 %v1257
    %1275 = vmatpush.msra.mxu0 %v1256
    %1276 = vmatpush.msra.mxu0 %v1255
    %1277 = vmatpush.msra.mxu0 %v1254
    %1278 = vmatpush.msra.mxu0 %v1253
    %1279 = vmatpush.msra.mxu0 %v1252
    %1280 = vmatpush.msra.mxu0 %v1251
    %1281 = vmatpush.msra.mxu0 %v1250
    %1282 = vmatmul.f32.gmra.mxu0 %v1131
    %v1283 = vpop.f32.mrf.mxu0
    %v1284 = vadd.f32 0.0, %v1283
    %1285 = vdwg.mxu0
    %v1286 = vadd.f32 %v1138, %v1284
    %v1287 = vxor.u32 %v1247, 2147483648
    %v1288 = vxor.u32 %v1248, 2147483648
    %v1289 = vxor.u32 %v1249, 2147483648
    %v1290 = vmul.f32 %v1287, 1.442695
    %v1291 = vpow.pop %v1290
    %v1292 = vmul.f32 %v1288, 1.442695
    %v1293 = vpow.pop %v1292
    %v1294 = vmul.f32 %v1289, 1.442695
    %v1295 = vpow.pop %v1294
    %v1296 = vadd.f32 %v1291, 1.0
    %v1297 = vadd.f32 %v1293, 1.0
    %v1298 = vadd.f32 %v1295, 1.0
    %v1299 = vrcp.pop %v1296
    %v1300 = vmul.f32 %v1296, %v1299
    %v1301 = vsub.f32 1.0, %v1300
    %v1302 = vmul.f32 %v1299, %v1301
    %v1303 = vadd.f32 %v1299, %v1302
    %vm1304 = vweird.f32 %v1296
    %vm1305 = vweird.f32 %v1299
    %vm1306 = vmor %vm1304, %vm1305
    %v1307 = vsel %vm1306, %v1299, %v1303
    %v1308 = vand.u32 2147483647, %v1296
    %vm1309 = vcmp.eq.f32.partialorder %v1308, 8.507059e+37
    %v1310 = vand.u32 %v1296, 2147483648
    %v1311 = vor.u32 1.1754944e-38, %v1310
    %v1312 = vsel %vm1309, %v1311, %v1307
    %v1313 = vmul.f32 1.0, %v1312
    %v1314 = vrcp.pop %v1297
    %v1315 = vmul.f32 %v1297, %v1314
    %v1316 = vsub.f32 1.0, %v1315
    %v1317 = vmul.f32 %v1314, %v1316
    %v1318 = vadd.f32 %v1314, %v1317
    %vm1319 = vweird.f32 %v1297
    %vm1320 = vweird.f32 %v1314
    %vm1321 = vmor %vm1319, %vm1320
    %v1322 = vsel %vm1321, %v1314, %v1318
    %v1323 = vand.u32 2147483647, %v1297
    %vm1324 = vcmp.eq.f32.partialorder %v1323, 8.507059e+37
    %v1325 = vand.u32 %v1297, 2147483648
    %v1326 = vor.u32 1.1754944e-38, %v1325
    %v1327 = vsel %vm1324, %v1326, %v1322
    %v1328 = vmul.f32 1.0, %v1327
    %v1329 = vrcp.pop %v1298
    %v1330 = vmul.f32 %v1298, %v1329
    %v1331 = vsub.f32 1.0, %v1330
    %v1332 = vmul.f32 %v1329, %v1331
    %v1333 = vadd.f32 %v1329, %v1332
    %vm1334 = vweird.f32 %v1298
    %vm1335 = vweird.f32 %v1329
    %vm1336 = vmor %vm1334, %vm1335
    %v1337 = vsel %vm1336, %v1329, %v1333
    %v1338 = vand.u32 2147483647, %v1298
    %vm1339 = vcmp.eq.f32.partialorder %v1338, 8.507059e+37
    %v1340 = vand.u32 %v1298, 2147483648
    %v1341 = vor.u32 1.1754944e-38, %v1340
    %v1342 = vsel %vm1339, %v1341, %v1337
    %v1343 = vmul.f32 1.0, %v1342
    %v1344 = vtanh.pop %v1286
    %v1345 = vmul.f32 %v1328, %v1129
    %v1346 = vmul.f32 %v1313, %v1344
    %v1347 = vadd.f32 %v1345, %v1346
    %v1348 = vtanh.pop %v1347
    %v1349 = vmul.f32 %v1343, %v1348
    %s1350 = scalar_lea.vmem %s4, 40
    %1351 = vst [vmem:[%s1350] sm:$0xff] %v1349
    %s1352 = scalar_lea.vmem %s0, 192
    %v1353 = vld [vmem:[%s1352] sm:$0xff]
    %v1354 = vld [vmem:[%s1352 + $0x8] sm:$0xff]
    %v1355 = vld [vmem:[%s1352 + $0x10] sm:$0xff]
    %v1356 = vld [vmem:[%s1352 + $0x18] sm:$0xff]
    %v1357 = vld [vmem:[#allocation4] sm:$0xff]
    %v1358 = vld [vmem:[#allocation4 + $0x8] sm:$0xff]
    %v1359 = vld [vmem:[#allocation4 + $0x10] sm:$0xff]
    %v1360 = vld [vmem:[#allocation4 + $0x20] sm:$0xff]
    %v1361 = vld [vmem:[#allocation4 + $0x28] sm:$0xff]
    %v1362 = vld [vmem:[#allocation4 + $0x30] sm:$0xff]
    %v1363 = vld [vmem:[#allocation4 + $0x40] sm:$0xff]
    %v1364 = vld [vmem:[#allocation4 + $0x48] sm:$0xff]
    %v1365 = vld [vmem:[#allocation4 + $0x50] sm:$0xff]
    %v1366 = vld [vmem:[#allocation4 + $0x60] sm:$0xff]
    %v1367 = vld [vmem:[#allocation4 + $0x68] sm:$0xff]
    %v1368 = vld [vmem:[#allocation4 + $0x70] sm:$0xff]
    %v1369 = vld [vmem:[#allocation4 + $0x80] sm:$0xff]
    %v1370 = vld [vmem:[#allocation4 + $0x88] sm:$0xff]
    %v1371 = vld [vmem:[#allocation4 + $0x90] sm:$0xff]
    %v1372 = vld [vmem:[#allocation4 + $0xa0] sm:$0xff]
    %v1373 = vld [vmem:[#allocation4 + $0xa8] sm:$0xff]
    %v1374 = vld [vmem:[#allocation4 + $0xb0] sm:$0xff]
    %v1375 = vld [vmem:[#allocation4 + $0xc0] sm:$0xff]
    %v1376 = vld [vmem:[#allocation4 + $0xc8] sm:$0xff]
    %v1377 = vld [vmem:[#allocation4 + $0xd0] sm:$0xff]
    %v1378 = vld [vmem:[#allocation4 + $0xe0] sm:$0xff]
    %v1379 = vld [vmem:[#allocation4 + $0xe8] sm:$0xff]
    %v1380 = vld [vmem:[#allocation4 + $0xf0] sm:$0xff]
    %v1381 = vld [vmem:[#allocation4 + $0x100] sm:$0xff]
    %v1382 = vld [vmem:[#allocation4 + $0x108] sm:$0xff]
    %v1383 = vld [vmem:[#allocation4 + $0x110] sm:$0xff]
    %v1384 = vld [vmem:[#allocation4 + $0x120] sm:$0xff]
    %v1385 = vld [vmem:[#allocation4 + $0x128] sm:$0xff]
    %v1386 = vld [vmem:[#allocation4 + $0x130] sm:$0xff]
    %v1387 = vld [vmem:[#allocation4 + $0x140] sm:$0xff]
    %v1388 = vld [vmem:[#allocation4 + $0x148] sm:$0xff]
    %v1389 = vld [vmem:[#allocation4 + $0x150] sm:$0xff]
    %v1390 = vld [vmem:[#allocation4 + $0x160] sm:$0xff]
    %v1391 = vld [vmem:[#allocation4 + $0x168] sm:$0xff]
    %v1392 = vld [vmem:[#allocation4 + $0x170] sm:$0xff]
    %v1393 = vld [vmem:[#allocation4 + $0x180] sm:$0xff]
    %v1394 = vld [vmem:[#allocation4 + $0x188] sm:$0xff]
    %v1395 = vld [vmem:[#allocation4 + $0x190] sm:$0xff]
    %v1396 = vld [vmem:[#allocation4 + $0x1a0] sm:$0xff]
    %v1397 = vld [vmem:[#allocation4 + $0x1a8] sm:$0xff]
    %v1398 = vld [vmem:[#allocation4 + $0x1b0] sm:$0xff]
    %v1399 = vld [vmem:[#allocation4 + $0x1c0] sm:$0xff]
    %v1400 = vld [vmem:[#allocation4 + $0x1c8] sm:$0xff]
    %v1401 = vld [vmem:[#allocation4 + $0x1d0] sm:$0xff]
    %v1402 = vld [vmem:[#allocation4 + $0x1e0] sm:$0xff]
    %v1403 = vld [vmem:[#allocation4 + $0x1e8] sm:$0xff]
    %v1404 = vld [vmem:[#allocation4 + $0x1f0] sm:$0xff]
    %1405 = vmatpush.msra.mxu0 %v1402
    %1406 = vmatpush.msra.mxu0 %v1399
    %1407 = vmatpush.msra.mxu0 %v1396
    %1408 = vmatpush.msra.mxu0 %v1393
    %1409 = vmatpush.msra.mxu0 %v1390
    %1410 = vmatpush.msra.mxu0 %v1387
    %1411 = vmatpush.msra.mxu0 %v1384
    %1412 = vmatpush.msra.mxu0 %v1381
    %1413 = vmatpush.msra.mxu0 %v1378
    %1414 = vmatpush.msra.mxu0 %v1375
    %1415 = vmatpush.msra.mxu0 %v1372
    %1416 = vmatpush.msra.mxu0 %v1369
    %1417 = vmatpush.msra.mxu0 %v1366
    %1418 = vmatpush.msra.mxu0 %v1363
    %1419 = vmatpush.msra.mxu0 %v1360
    %1420 = vmatpush.msra.mxu0 %v1357
    %1421 = vmatmul.f32.gmra.mxu0 %v1349
    %v1422 = vpop.f32.mrf.mxu0
    %v1423 = vadd.f32 0.0, %v1422
    %1424 = vdwg.mxu0
    %1425 = vmatpush.msra.mxu0 %v1403
    %1426 = vmatpush.msra.mxu0 %v1400
    %1427 = vmatpush.msra.mxu0 %v1397
    %1428 = vmatpush.msra.mxu0 %v1394
    %1429 = vmatpush.msra.mxu0 %v1391
    %1430 = vmatpush.msra.mxu0 %v1388
    %1431 = vmatpush.msra.mxu0 %v1385
    %1432 = vmatpush.msra.mxu0 %v1382
    %1433 = vmatpush.msra.mxu0 %v1379
    %1434 = vmatpush.msra.mxu0 %v1376
    %1435 = vmatpush.msra.mxu0 %v1373
    %1436 = vmatpush.msra.mxu0 %v1370
    %1437 = vmatpush.msra.mxu0 %v1367
    %1438 = vmatpush.msra.mxu0 %v1364
    %1439 = vmatpush.msra.mxu0 %v1361
    %1440 = vmatpush.msra.mxu0 %v1358
    %1441 = vmatmul.f32.gmra.mxu0 %v1349
    %v1442 = vpop.f32.mrf.mxu0
    %v1443 = vadd.f32 0.0, %v1442
    %1444 = vdwg.mxu0
    %1445 = vmatpush.msra.mxu0 %v1404
    %1446 = vmatpush.msra.mxu0 %v1401
    %1447 = vmatpush.msra.mxu0 %v1398
    %1448 = vmatpush.msra.mxu0 %v1395
    %1449 = vmatpush.msra.mxu0 %v1392
    %1450 = vmatpush.msra.mxu0 %v1389
    %1451 = vmatpush.msra.mxu0 %v1386
    %1452 = vmatpush.msra.mxu0 %v1383
    %1453 = vmatpush.msra.mxu0 %v1380
    %1454 = vmatpush.msra.mxu0 %v1377
    %1455 = vmatpush.msra.mxu0 %v1374
    %1456 = vmatpush.msra.mxu0 %v1371
    %1457 = vmatpush.msra.mxu0 %v1368
    %1458 = vmatpush.msra.mxu0 %v1365
    %1459 = vmatpush.msra.mxu0 %v1362
    %1460 = vmatpush.msra.mxu0 %v1359
    %1461 = vmatmul.f32.gmra.mxu0 %v1349
    %v1462 = vpop.f32.mrf.mxu0
    %v1463 = vadd.f32 0.0, %v1462
    %1464 = vdwg.mxu0
    %v1465 = vadd.f32 %v1353, %v1423
    %v1466 = vadd.f32 %v1354, %v1443
    %v1467 = vadd.f32 %v1355, %v1463
    %v1468 = vld [vmem:[#allocation4 + $0x18] sm:$0xff]
    %v1469 = vld [vmem:[#allocation4 + $0x38] sm:$0xff]
    %v1470 = vld [vmem:[#allocation4 + $0x58] sm:$0xff]
    %v1471 = vld [vmem:[#allocation4 + $0x78] sm:$0xff]
    %v1472 = vld [vmem:[#allocation4 + $0x98] sm:$0xff]
    %v1473 = vld [vmem:[#allocation4 + $0xb8] sm:$0xff]
    %v1474 = vld [vmem:[#allocation4 + $0xd8] sm:$0xff]
    %v1475 = vld [vmem:[#allocation4 + $0xf8] sm:$0xff]
    %v1476 = vld [vmem:[#allocation4 + $0x118] sm:$0xff]
    %v1477 = vld [vmem:[#allocation4 + $0x138] sm:$0xff]
    %v1478 = vld [vmem:[#allocation4 + $0x158] sm:$0xff]
    %v1479 = vld [vmem:[#allocation4 + $0x178] sm:$0xff]
    %v1480 = vld [vmem:[#allocation4 + $0x198] sm:$0xff]
    %v1481 = vld [vmem:[#allocation4 + $0x1b8] sm:$0xff]
    %v1482 = vld [vmem:[#allocation4 + $0x1d8] sm:$0xff]
    %v1483 = vld [vmem:[#allocation4 + $0x1f8] sm:$0xff]
    %1484 = vmatpush.msra.mxu0 %v1483
    %1485 = vmatpush.msra.mxu0 %v1482
    %1486 = vmatpush.msra.mxu0 %v1481
    %1487 = vmatpush.msra.mxu0 %v1480
    %1488 = vmatpush.msra.mxu0 %v1479
    %1489 = vmatpush.msra.mxu0 %v1478
    %1490 = vmatpush.msra.mxu0 %v1477
    %1491 = vmatpush.msra.mxu0 %v1476
    %1492 = vmatpush.msra.mxu0 %v1475
    %1493 = vmatpush.msra.mxu0 %v1474
    %1494 = vmatpush.msra.mxu0 %v1473
    %1495 = vmatpush.msra.mxu0 %v1472
    %1496 = vmatpush.msra.mxu0 %v1471
    %1497 = vmatpush.msra.mxu0 %v1470
    %1498 = vmatpush.msra.mxu0 %v1469
    %1499 = vmatpush.msra.mxu0 %v1468
    %1500 = vmatmul.f32.gmra.mxu0 %v1349
    %v1501 = vpop.f32.mrf.mxu0
    %v1502 = vadd.f32 0.0, %v1501
    %1503 = vdwg.mxu0
    %v1504 = vadd.f32 %v1356, %v1502
    %v1505 = vxor.u32 %v1465, 2147483648
    %v1506 = vxor.u32 %v1466, 2147483648
    %v1507 = vxor.u32 %v1467, 2147483648
    %v1508 = vmul.f32 %v1505, 1.442695
    %v1509 = vpow.pop %v1508
    %v1510 = vmul.f32 %v1506, 1.442695
    %v1511 = vpow.pop %v1510
    %v1512 = vmul.f32 %v1507, 1.442695
    %v1513 = vpow.pop %v1512
    %v1514 = vadd.f32 %v1509, 1.0
    %v1515 = vadd.f32 %v1511, 1.0
    %v1516 = vadd.f32 %v1513, 1.0
    %v1517 = vrcp.pop %v1514
    %v1518 = vmul.f32 %v1514, %v1517
    %v1519 = vsub.f32 1.0, %v1518
    %v1520 = vmul.f32 %v1517, %v1519
    %v1521 = vadd.f32 %v1517, %v1520
    %vm1522 = vweird.f32 %v1514
    %vm1523 = vweird.f32 %v1517
    %vm1524 = vmor %vm1522, %vm1523
    %v1525 = vsel %vm1524, %v1517, %v1521
    %v1526 = vand.u32 2147483647, %v1514
    %vm1527 = vcmp.eq.f32.partialorder %v1526, 8.507059e+37
    %v1528 = vand.u32 %v1514, 2147483648
    %v1529 = vor.u32 1.1754944e-38, %v1528
    %v1530 = vsel %vm1527, %v1529, %v1525
    %v1531 = vmul.f32 1.0, %v1530
    %v1532 = vrcp.pop %v1515
    %v1533 = vmul.f32 %v1515, %v1532
    %v1534 = vsub.f32 1.0, %v1533
    %v1535 = vmul.f32 %v1532, %v1534
    %v1536 = vadd.f32 %v1532, %v1535
    %vm1537 = vweird.f32 %v1515
    %vm1538 = vweird.f32 %v1532
    %vm1539 = vmor %vm1537, %vm1538
    %v1540 = vsel %vm1539, %v1532, %v1536
    %v1541 = vand.u32 2147483647, %v1515
    %vm1542 = vcmp.eq.f32.partialorder %v1541, 8.507059e+37
    %v1543 = vand.u32 %v1515, 2147483648
    %v1544 = vor.u32 1.1754944e-38, %v1543
    %v1545 = vsel %vm1542, %v1544, %v1540
    %v1546 = vmul.f32 1.0, %v1545
    %v1547 = vrcp.pop %v1516
    %v1548 = vmul.f32 %v1516, %v1547
    %v1549 = vsub.f32 1.0, %v1548
    %v1550 = vmul.f32 %v1547, %v1549
    %v1551 = vadd.f32 %v1547, %v1550
    %vm1552 = vweird.f32 %v1516
    %vm1553 = vweird.f32 %v1547
    %vm1554 = vmor %vm1552, %vm1553
    %v1555 = vsel %vm1554, %v1547, %v1551
    %v1556 = vand.u32 2147483647, %v1516
    %vm1557 = vcmp.eq.f32.partialorder %v1556, 8.507059e+37
    %v1558 = vand.u32 %v1516, 2147483648
    %v1559 = vor.u32 1.1754944e-38, %v1558
    %v1560 = vsel %vm1557, %v1559, %v1555
    %v1561 = vmul.f32 1.0, %v1560
    %v1562 = vtanh.pop %v1504
    %v1563 = vmul.f32 %v1546, %v1347
    %v1564 = vmul.f32 %v1531, %v1562
    %v1565 = vadd.f32 %v1563, %v1564
    %v1566 = vtanh.pop %v1565
    %v1567 = vmul.f32 %v1561, %v1566
    %s1568 = scalar_lea.vmem %s4, 48
    %1569 = vst [vmem:[%s1568] sm:$0xff] %v1567
    %s1570 = scalar_lea.vmem %s0, 224
    %v1571 = vld [vmem:[%s1570] sm:$0xff]
    %v1572 = vld [vmem:[%s1570 + $0x8] sm:$0xff]
    %v1573 = vld [vmem:[%s1570 + $0x10] sm:$0xff]
    %v1574 = vld [vmem:[%s1570 + $0x18] sm:$0xff]
    %v1575 = vld [vmem:[#allocation4] sm:$0xff]
    %v1576 = vld [vmem:[#allocation4 + $0x8] sm:$0xff]
    %v1577 = vld [vmem:[#allocation4 + $0x10] sm:$0xff]
    %v1578 = vld [vmem:[#allocation4 + $0x20] sm:$0xff]
    %v1579 = vld [vmem:[#allocation4 + $0x28] sm:$0xff]
    %v1580 = vld [vmem:[#allocation4 + $0x30] sm:$0xff]
    %v1581 = vld [vmem:[#allocation4 + $0x40] sm:$0xff]
    %v1582 = vld [vmem:[#allocation4 + $0x48] sm:$0xff]
    %v1583 = vld [vmem:[#allocation4 + $0x50] sm:$0xff]
    %v1584 = vld [vmem:[#allocation4 + $0x60] sm:$0xff]
    %v1585 = vld [vmem:[#allocation4 + $0x68] sm:$0xff]
    %v1586 = vld [vmem:[#allocation4 + $0x70] sm:$0xff]
    %v1587 = vld [vmem:[#allocation4 + $0x80] sm:$0xff]
    %v1588 = vld [vmem:[#allocation4 + $0x88] sm:$0xff]
    %v1589 = vld [vmem:[#allocation4 + $0x90] sm:$0xff]
    %v1590 = vld [vmem:[#allocation4 + $0xa0] sm:$0xff]
    %v1591 = vld [vmem:[#allocation4 + $0xa8] sm:$0xff]
    %v1592 = vld [vmem:[#allocation4 + $0xb0] sm:$0xff]
    %v1593 = vld [vmem:[#allocation4 + $0xc0] sm:$0xff]
    %v1594 = vld [vmem:[#allocation4 + $0xc8] sm:$0xff]
    %v1595 = vld [vmem:[#allocation4 + $0xd0] sm:$0xff]
    %v1596 = vld [vmem:[#allocation4 + $0xe0] sm:$0xff]
    %v1597 = vld [vmem:[#allocation4 + $0xe8] sm:$0xff]
    %v1598 = vld [vmem:[#allocation4 + $0xf0] sm:$0xff]
    %v1599 = vld [vmem:[#allocation4 + $0x100] sm:$0xff]
    %v1600 = vld [vmem:[#allocation4 + $0x108] sm:$0xff]
    %v1601 = vld [vmem:[#allocation4 + $0x110] sm:$0xff]
    %v1602 = vld [vmem:[#allocation4 + $0x120] sm:$0xff]
    %v1603 = vld [vmem:[#allocation4 + $0x128] sm:$0xff]
    %v1604 = vld [vmem:[#allocation4 + $0x130] sm:$0xff]
    %v1605 = vld [vmem:[#allocation4 + $0x140] sm:$0xff]
    %v1606 = vld [vmem:[#allocation4 + $0x148] sm:$0xff]
    %v1607 = vld [vmem:[#allocation4 + $0x150] sm:$0xff]
    %v1608 = vld [vmem:[#allocation4 + $0x160] sm:$0xff]
    %v1609 = vld [vmem:[#allocation4 + $0x168] sm:$0xff]
    %v1610 = vld [vmem:[#allocation4 + $0x170] sm:$0xff]
    %v1611 = vld [vmem:[#allocation4 + $0x180] sm:$0xff]
    %v1612 = vld [vmem:[#allocation4 + $0x188] sm:$0xff]
    %v1613 = vld [vmem:[#allocation4 + $0x190] sm:$0xff]
    %v1614 = vld [vmem:[#allocation4 + $0x1a0] sm:$0xff]
    %v1615 = vld [vmem:[#allocation4 + $0x1a8] sm:$0xff]
    %v1616 = vld [vmem:[#allocation4 + $0x1b0] sm:$0xff]
    %v1617 = vld [vmem:[#allocation4 + $0x1c0] sm:$0xff]
    %v1618 = vld [vmem:[#allocation4 + $0x1c8] sm:$0xff]
    %v1619 = vld [vmem:[#allocation4 + $0x1d0] sm:$0xff]
    %v1620 = vld [vmem:[#allocation4 + $0x1e0] sm:$0xff]
    %v1621 = vld [vmem:[#allocation4 + $0x1e8] sm:$0xff]
    %v1622 = vld [vmem:[#allocation4 + $0x1f0] sm:$0xff]
    %1623 = vmatpush.msra.mxu0 %v1620
    %1624 = vmatpush.msra.mxu0 %v1617
    %1625 = vmatpush.msra.mxu0 %v1614
    %1626 = vmatpush.msra.mxu0 %v1611
    %1627 = vmatpush.msra.mxu0 %v1608
    %1628 = vmatpush.msra.mxu0 %v1605
    %1629 = vmatpush.msra.mxu0 %v1602
    %1630 = vmatpush.msra.mxu0 %v1599
    %1631 = vmatpush.msra.mxu0 %v1596
    %1632 = vmatpush.msra.mxu0 %v1593
    %1633 = vmatpush.msra.mxu0 %v1590
    %1634 = vmatpush.msra.mxu0 %v1587
    %1635 = vmatpush.msra.mxu0 %v1584
    %1636 = vmatpush.msra.mxu0 %v1581
    %1637 = vmatpush.msra.mxu0 %v1578
    %1638 = vmatpush.msra.mxu0 %v1575
    %1639 = vmatmul.f32.gmra.mxu0 %v1567
    %v1640 = vpop.f32.mrf.mxu0
    %v1641 = vadd.f32 0.0, %v1640
    %1642 = vdwg.mxu0
    %1643 = vmatpush.msra.mxu0 %v1621
    %1644 = vmatpush.msra.mxu0 %v1618
    %1645 = vmatpush.msra.mxu0 %v1615
    %1646 = vmatpush.msra.mxu0 %v1612
    %1647 = vmatpush.msra.mxu0 %v1609
    %1648 = vmatpush.msra.mxu0 %v1606
    %1649 = vmatpush.msra.mxu0 %v1603
    %1650 = vmatpush.msra.mxu0 %v1600
    %1651 = vmatpush.msra.mxu0 %v1597
    %1652 = vmatpush.msra.mxu0 %v1594
    %1653 = vmatpush.msra.mxu0 %v1591
    %1654 = vmatpush.msra.mxu0 %v1588
    %1655 = vmatpush.msra.mxu0 %v1585
    %1656 = vmatpush.msra.mxu0 %v1582
    %1657 = vmatpush.msra.mxu0 %v1579
    %1658 = vmatpush.msra.mxu0 %v1576
    %1659 = vmatmul.f32.gmra.mxu0 %v1567
    %v1660 = vpop.f32.mrf.mxu0
    %v1661 = vadd.f32 0.0, %v1660
    %1662 = vdwg.mxu0
    %1663 = vmatpush.msra.mxu0 %v1622
    %1664 = vmatpush.msra.mxu0 %v1619
    %1665 = vmatpush.msra.mxu0 %v1616
    %1666 = vmatpush.msra.mxu0 %v1613
    %1667 = vmatpush.msra.mxu0 %v1610
    %1668 = vmatpush.msra.mxu0 %v1607
    %1669 = vmatpush.msra.mxu0 %v1604
    %1670 = vmatpush.msra.mxu0 %v1601
    %1671 = vmatpush.msra.mxu0 %v1598
    %1672 = vmatpush.msra.mxu0 %v1595
    %1673 = vmatpush.msra.mxu0 %v1592
    %1674 = vmatpush.msra.mxu0 %v1589
    %1675 = vmatpush.msra.mxu0 %v1586
    %1676 = vmatpush.msra.mxu0 %v1583
    %1677 = vmatpush.msra.mxu0 %v1580
    %1678 = vmatpush.msra.mxu0 %v1577
    %1679 = vmatmul.f32.gmra.mxu0 %v1567
    %v1680 = vpop.f32.mrf.mxu0
    %v1681 = vadd.f32 0.0, %v1680
    %1682 = vdwg.mxu0
    %v1683 = vadd.f32 %v1571, %v1641
    %v1684 = vadd.f32 %v1572, %v1661
    %v1685 = vadd.f32 %v1573, %v1681
    %v1686 = vld [vmem:[#allocation4 + $0x18] sm:$0xff]
    %v1687 = vld [vmem:[#allocation4 + $0x38] sm:$0xff]
    %v1688 = vld [vmem:[#allocation4 + $0x58] sm:$0xff]
    %v1689 = vld [vmem:[#allocation4 + $0x78] sm:$0xff]
    %v1690 = vld [vmem:[#allocation4 + $0x98] sm:$0xff]
    %v1691 = vld [vmem:[#allocation4 + $0xb8] sm:$0xff]
    %v1692 = vld [vmem:[#allocation4 + $0xd8] sm:$0xff]
    %v1693 = vld [vmem:[#allocation4 + $0xf8] sm:$0xff]
    %v1694 = vld [vmem:[#allocation4 + $0x118] sm:$0xff]
    %v1695 = vld [vmem:[#allocation4 + $0x138] sm:$0xff]
    %v1696 = vld [vmem:[#allocation4 + $0x158] sm:$0xff]
    %v1697 = vld [vmem:[#allocation4 + $0x178] sm:$0xff]
    %v1698 = vld [vmem:[#allocation4 + $0x198] sm:$0xff]
    %v1699 = vld [vmem:[#allocation4 + $0x1b8] sm:$0xff]
    %v1700 = vld [vmem:[#allocation4 + $0x1d8] sm:$0xff]
    %v1701 = vld [vmem:[#allocation4 + $0x1f8] sm:$0xff]
    %1702 = vmatpush.msra.mxu0 %v1701
    %1703 = vmatpush.msra.mxu0 %v1700
    %1704 = vmatpush.msra.mxu0 %v1699
    %1705 = vmatpush.msra.mxu0 %v1698
    %1706 = vmatpush.msra.mxu0 %v1697
    %1707 = vmatpush.msra.mxu0 %v1696
    %1708 = vmatpush.msra.mxu0 %v1695
    %1709 = vmatpush.msra.mxu0 %v1694
    %1710 = vmatpush.msra.mxu0 %v1693
    %1711 = vmatpush.msra.mxu0 %v1692
    %1712 = vmatpush.msra.mxu0 %v1691
    %1713 = vmatpush.msra.mxu0 %v1690
    %1714 = vmatpush.msra.mxu0 %v1689
    %1715 = vmatpush.msra.mxu0 %v1688
    %1716 = vmatpush.msra.mxu0 %v1687
    %1717 = vmatpush.msra.mxu0 %v1686
    %1718 = vmatmul.f32.gmra.mxu0 %v1567
    %v1719 = vpop.f32.mrf.mxu0
    %v1720 = vadd.f32 0.0, %v1719
    %1721 = vdwg.mxu0
    %v1722 = vadd.f32 %v1574, %v1720
    %v1723 = vxor.u32 %v1683, 2147483648
    %v1724 = vxor.u32 %v1684, 2147483648
    %v1725 = vxor.u32 %v1685, 2147483648
    %v1726 = vmul.f32 %v1723, 1.442695
    %v1727 = vpow.pop %v1726
    %v1728 = vmul.f32 %v1724, 1.442695
    %v1729 = vpow.pop %v1728
    %v1730 = vmul.f32 %v1725, 1.442695
    %v1731 = vpow.pop %v1730
    %v1732 = vadd.f32 %v1727, 1.0
    %v1733 = vadd.f32 %v1729, 1.0
    %v1734 = vadd.f32 %v1731, 1.0
    %v1735 = vrcp.pop %v1732
    %v1736 = vmul.f32 %v1732, %v1735
    %v1737 = vsub.f32 1.0, %v1736
    %v1738 = vmul.f32 %v1735, %v1737
    %v1739 = vadd.f32 %v1735, %v1738
    %vm1740 = vweird.f32 %v1732
    %vm1741 = vweird.f32 %v1735
    %vm1742 = vmor %vm1740, %vm1741
    %v1743 = vsel %vm1742, %v1735, %v1739
    %v1744 = vand.u32 2147483647, %v1732
    %vm1745 = vcmp.eq.f32.partialorder %v1744, 8.507059e+37
    %v1746 = vand.u32 %v1732, 2147483648
    %v1747 = vor.u32 1.1754944e-38, %v1746
    %v1748 = vsel %vm1745, %v1747, %v1743
    %v1749 = vmul.f32 1.0, %v1748
    %v1750 = vrcp.pop %v1733
    %v1751 = vmul.f32 %v1733, %v1750
    %v1752 = vsub.f32 1.0, %v1751
    %v1753 = vmul.f32 %v1750, %v1752
    %v1754 = vadd.f32 %v1750, %v1753
    %vm1755 = vweird.f32 %v1733
    %vm1756 = vweird.f32 %v1750
    %vm1757 = vmor %vm1755, %vm1756
    %v1758 = vsel %vm1757, %v1750, %v1754
    %v1759 = vand.u32 2147483647, %v1733
    %vm1760 = vcmp.eq.f32.partialorder %v1759, 8.507059e+37
    %v1761 = vand.u32 %v1733, 2147483648
    %v1762 = vor.u32 1.1754944e-38, %v1761
    %v1763 = vsel %vm1760, %v1762, %v1758
    %v1764 = vmul.f32 1.0, %v1763
    %v1765 = vrcp.pop %v1734
    %v1766 = vmul.f32 %v1734, %v1765
    %v1767 = vsub.f32 1.0, %v1766
    %v1768 = vmul.f32 %v1765, %v1767
    %v1769 = vadd.f32 %v1765, %v1768
    %vm1770 = vweird.f32 %v1734
    %vm1771 = vweird.f32 %v1765
    %vm1772 = vmor %vm1770, %vm1771
    %v1773 = vsel %vm1772, %v1765, %v1769
    %v1774 = vand.u32 2147483647, %v1734
    %vm1775 = vcmp.eq.f32.partialorder %v1774, 8.507059e+37
    %v1776 = vand.u32 %v1734, 2147483648
    %v1777 = vor.u32 1.1754944e-38, %v1776
    %v1778 = vsel %vm1775, %v1777, %v1773
    %v1779 = vmul.f32 1.0, %v1778
    %v1780 = vtanh.pop %v1722
    %v1781 = vmul.f32 %v1764, %v1565
    %v1782 = vmul.f32 %v1749, %v1780
    %v1783 = vadd.f32 %v1781, %v1782
    %v1784 = vtanh.pop %v1783
    %v1785 = vmul.f32 %v1779, %v1784
    %s1786 = scalar_lea.vmem %s4, 56
    %1787 = vst [vmem:[%s1786] sm:$0xff] %v1785
    %1788 = vst [vmem:[#allocation2] sm:$0xff] %v1785
    %1789 = vst [vmem:[#allocation3] sm:$0xff] %v1783
    %1790 = vst [vmem:[%s5] sm:$0xff] %v1785
    %1791 = vst [vmem:[%s6] sm:$0xff] %v1783
    // Predicated region
    $region26: #{rnn_model_forward.6} parent=1 // pred_check
      _
    $region27: #{rnn_model_forward.6} parent=1 // pred_check_branch
      %1793 = sbr.rel (0) target = $region29
    $region28: #{rnn_model_forward.6} parent=1 // pred_region
      _
    $region29: #{rnn_model_forward.6} parent=1 // pred_fallthru
      _
    // Predicated region
    $region30: #{rnn_model_forward.6} parent=1 // pred_check
      _
    $region31: #{rnn_model_forward.6} parent=1 // pred_check_branch
      %1795 = sbr.rel (0) target = $region33
    $region32: #{rnn_model_forward.6} parent=1 // pred_region
      _
    $region33: #{rnn_model_forward.6} parent=1 // pred_fallthru
      _
    // Predicated region
    $region34: #{rnn_model_forward.6} parent=1 // pred_check
      _
    $region35: #{rnn_model_forward.6} parent=1 // pred_check_branch
      %1797 = sbr.rel (0) target = $region37
    $region36: #{rnn_model_forward.6} parent=1 // pred_region
      _
    $region37: #{rnn_model_forward.6} parent=1 // pred_fallthru
      _
    // Predicated region
    $region38: #{rnn_model_forward.6} parent=1 // pred_check
      _
    $region39: #{rnn_model_forward.6} parent=1 // pred_check_branch
      %1799 = sbr.rel (0) target = $region41
    $region40: #{rnn_model_forward.6} parent=1 // pred_region
      _
    $region41: #{rnn_model_forward.6} parent=1 // pred_fallthru
      _
    // Predicated region
    $region42: #{rnn_model_forward.6} parent=1 // pred_check
      _
    $region43: #{rnn_model_forward.6} parent=1 // pred_check_branch
      %1801 = sbr.rel (0) target = $region45
    $region44: #{rnn_model_forward.6} parent=1 // pred_region
      _
    $region45: #{rnn_model_forward.6} parent=1 // pred_fallthru
      _
    // Predicated region
    $region46: #{rnn_model_forward.6} parent=1 // pred_check
      _
    $region47: #{rnn_model_forward.6} parent=1 // pred_check_branch
      %1803 = sbr.rel (0) target = $region49
    $region48: #{rnn_model_forward.6} parent=1 // pred_region
      _
    $region49: #{rnn_model_forward.6} parent=1 // pred_fallthru
      _
    %1804 = vsyncpa [#allocation5], 1

</llo_original>
